<compile_context>
chip_gen: v7x
topology: tpu7x:2x2x1
jax: 0.10.0
libtpu: 0.0.40
codegen_flags: <defaults>
</compile_context>

<pallas_src>
import functools

import jax
import jax.numpy as jnp
from jax import lax
from jax.experimental import pallas as pl
from jax.experimental.pallas import tpu as pltpu

# bf16 MXU inputs, f32 accumulation.  Per review this is a win on v5e/v6e/v7x;
# set to False only if bit-faithful f32 parity with the PyTorch reference is
# required.
USE_BF16_MATMUL = True

# Explicit VMEM budget (safe on every generation; v7x physical VMEM is 64 MiB).
VMEM_LIMIT_BYTES = 32 * 1024 * 1024


# ----------------------------------------------------------------------------
# small helpers used inside the kernel
# ----------------------------------------------------------------------------
def _mm(a, w, use_bf16):
    """a @ w with f32 accumulation (optionally bf16 MXU inputs)."""
    if use_bf16:
        a = a.astype(jnp.bfloat16)
        w = w.astype(jnp.bfloat16)
    return jnp.dot(a, w, preferred_element_type=jnp.float32)


def _mm_nt(a, b, use_bf16):
    """a @ b.T (contract last dims) without an explicit transpose."""
    if use_bf16:
        a = a.astype(jnp.bfloat16)
        b = b.astype(jnp.bfloat16)
    return lax.dot_general(a, b, (((1,), (1,)), ((), ())),
                           preferred_element_type=jnp.float32)


def _layer_norm(t, g, b, eps):
    mu = jnp.mean(t, axis=-1, keepdims=True)
    var = jnp.mean((t - mu) ** 2, axis=-1, keepdims=True)
    return (t - mu) * lax.rsqrt(var + eps) * g + b


# ----------------------------------------------------------------------------
# fully fused forward kernel (one grid step == one batch element)
# ----------------------------------------------------------------------------
def _text_classifier_kernel(
        x_ref,
        sq_w_ref, sq_b_ref,
        wqkv_ref, bqkv_ref, wo_ref, bo_ref,
        ln1_g_ref, ln1_b_ref,
        w1_ref, b1_ref, w2_ref, b2_ref,
        ln2_g_ref, ln2_b_ref,
        lnf_g_ref, lnf_b_ref, cls_w_ref, cls_b_ref,
        o_ref,
        *, num_heads, num_blocks, eps, use_bf16):
    H = num_heads
    Dh = wqkv_ref.shape[-1]
    scale = 1.0 / float(Dh) ** 0.5

    x = x_ref[...].astype(jnp.float32)                          # (S, Din)

    # squeeze: Linear(input_dim -> embed_dim), fused into the same kernel.
    h = _mm(x, sq_w_ref[...], use_bf16) + sq_b_ref[...]         # (S, D)

    for l in range(num_blocks):
        # ---- multi-head self-attention --------------------------------
        # Head-major stacked QKV weights: wqkv_ref[l, hh] is a cheap
        # leading-axis view (no lane slices of activations).
        head_outs = []
        for hh in range(H):
            qh = _mm(h, wqkv_ref[l, hh], use_bf16) + bqkv_ref[l, hh]
            kh = _mm(h, wqkv_ref[l, H + hh], use_bf16) + bqkv_ref[l, H + hh]
            vh = _mm(h, wqkv_ref[l, 2 * H + hh], use_bf16) + bqkv_ref[l, 2 * H + hh]
            s = _mm_nt(qh, kh, use_bf16) * scale                # (S, S)
            m = jnp.max(s, axis=-1, keepdims=True)
            p = jnp.exp(s - m)
            p = p * pl.reciprocal(jnp.sum(p, axis=-1, keepdims=True),
                                  approx=True)
            head_outs.append(_mm(p, vh, use_bf16))              # (S, Dh)
        # head concat -> ONE (S,D)x(D,D) output-projection matmul.
        attn = jnp.concatenate(head_outs, axis=-1)              # (S, D)
        attn = _mm(attn, wo_ref[l], use_bf16) + bo_ref[l]

        # ---- residual + post-LN 1 --------------------------------------
        h1 = _layer_norm(h + attn, ln1_g_ref[l], ln1_b_ref[l], eps)

        # ---- FFN: Linear -> ReLU -> Linear (VMEM/vreg resident) ---------
        ff = jnp.maximum(_mm(h1, w1_ref[l], use_bf16) + b1_ref[l], 0.0)
        ff = _mm(ff, w2_ref[l], use_bf16) + b2_ref[l]

        # ---- residual + post-LN 2 ---------------------------------------
        h = _layer_norm(h1 + ff, ln2_g_ref[l], ln2_b_ref[l], eps)

    # dropout(eval) = identity.  Final LayerNorm is row-wise, so with CLS
    # pooling only the CLS row needs normalizing; classifier head fused.
    cls = h[0:1, :]                                             # (1, D)
    cls = _layer_norm(cls, lnf_g_ref[...], lnf_b_ref[...], eps)
    logit = jnp.sum(cls * cls_w_ref[...], axis=-1, keepdims=True)
    logit = logit + cls_b_ref[...]                              # (1, 1)
    o_ref[...] = logit.astype(o_ref.dtype)


def _const_index_map(ndim):
    return lambda b: (0,) * ndim


def text_classifier_forward(params, x, *, eps=1e-5):
    """Full TextClassifier forward (CLS pooling, eval mode) in ONE pallas_call."""
    B, S, Din = x.shape
    L, three_h, _, _ = params["wqkv"].shape       # (num_blocks, 3*H, D, Dh)
    H = three_h // 3

    kernel = functools.partial(_text_classifier_kernel, num_heads=H,
                               num_blocks=L, eps=eps,
                               use_bf16=USE_BF16_MATMUL)

    weight_names = ["sq_w", "sq_b", "wqkv", "bqkv", "wo", "bo",
                    "ln1_g", "ln1_b", "w1", "b1", "w2", "b2",
                    "ln2_g", "ln2_b", "ln_g", "ln_b", "cls_w", "cls_b"]
    weights = [params[n] for n in weight_names]

    def wspec(a):
        # full-extent block, constant index map -> stays VMEM resident.
        return pl.BlockSpec(a.shape, _const_index_map(a.ndim))

    out = pl.pallas_call(
        kernel,
        grid=(B,),
        in_specs=[pl.BlockSpec((None, S, Din), lambda b: (b, 0, 0))]
                 + [wspec(w) for w in weights],
        out_specs=pl.BlockSpec((None, 1, 1), lambda b: (b, 0, 0)),
        out_shape=jax.ShapeDtypeStruct((B, 1, 1), x.dtype),
        compiler_params=pltpu.CompilerParams(
            dimension_semantics=("parallel",),
            vmem_limit_bytes=VMEM_LIMIT_BYTES),
    )(x, *weights)
    return out.reshape(B, 1)


# ----------------------------------------------------------------------------
# Parameter init (deterministic, PyTorch-Linear-style uniform).
# Block weights are stacked over a leading (num_blocks) axis; QKV weights are
# additionally re-laid-out head-major: (num_blocks, 3*H, D, Dh).
# ----------------------------------------------------------------------------
def _lin_init(key, fan_in, fan_out):
    kw, kb = jax.random.split(key)
    bound = 1.0 / (fan_in ** 0.5)
    w = jax.random.uniform(kw, (fan_in, fan_out), jnp.float32, -bound, bound)
    b = jax.random.uniform(kb, (fan_out,), jnp.float32, -bound, bound)
    return w, b


def init_params(key, input_dim, embed_dim, num_heads, num_blocks, ffn_dim):
    D, H, F = embed_dim, num_heads, ffn_dim
    Dh = D // H
    keys = jax.random.split(key, 2 + num_blocks)

    sq_w, sq_b = _lin_init(keys[0], input_dim, D)
    cls_w, cls_b = _lin_init(keys[1], D, 1)

    wqkv, bqkv, wo, bo = [], [], [], []
    w1, b1, w2, b2 = [], [], [], []
    ln1_g, ln1_b, ln2_g, ln2_b = [], [], [], []
    for bi in range(num_blocks):
        bk = jax.random.split(keys[2 + bi], 6)
        wq, bq = _lin_init(bk[0], D, D)
        wk, bk_ = _lin_init(bk[1], D, D)
        wv, bv = _lin_init(bk[2], D, D)
        # head-major stacking: [q_h0..q_hH-1, k_h0.., v_h0..]
        w_heads = ([wq[:, h * Dh:(h + 1) * Dh] for h in range(H)]
                   + [wk[:, h * Dh:(h + 1) * Dh] for h in range(H)]
                   + [wv[:, h * Dh:(h + 1) * Dh] for h in range(H)])
        b_heads = ([bq[h * Dh:(h + 1) * Dh] for h in range(H)]
                   + [bk_[h * Dh:(h + 1) * Dh] for h in range(H)]
                   + [bv[h * Dh:(h + 1) * Dh] for h in range(H)])
        wqkv.append(jnp.stack(w_heads, 0))                      # (3H, D, Dh)
        bqkv.append(jnp.stack([b.reshape(1, Dh) for b in b_heads], 0))

        wo_, bo_ = _lin_init(bk[3], D, D)
        w1_, b1_ = _lin_init(bk[4], D, F)
        w2_, b2_ = _lin_init(bk[5], F, D)
        wo.append(wo_);  bo.append(bo_.reshape(1, D))
        w1.append(w1_);  b1.append(b1_.reshape(1, F))
        w2.append(w2_);  b2.append(b2_.reshape(1, D))
        ln1_g.append(jnp.ones((1, D), jnp.float32))
        ln1_b.append(jnp.zeros((1, D), jnp.float32))
        ln2_g.append(jnp.ones((1, D), jnp.float32))
        ln2_b.append(jnp.zeros((1, D), jnp.float32))

    return dict(
        sq_w=sq_w, sq_b=sq_b.reshape(1, D),
        wqkv=jnp.stack(wqkv, 0), bqkv=jnp.stack(bqkv, 0),
        wo=jnp.stack(wo, 0), bo=jnp.stack(bo, 0),
        ln1_g=jnp.stack(ln1_g, 0), ln1_b=jnp.stack(ln1_b, 0),
        w1=jnp.stack(w1, 0), b1=jnp.stack(b1, 0),
        w2=jnp.stack(w2, 0), b2=jnp.stack(b2, 0),
        ln2_g=jnp.stack(ln2_g, 0), ln2_b=jnp.stack(ln2_b, 0),
        ln_g=jnp.ones((1, D), jnp.float32),
        ln_b=jnp.zeros((1, D), jnp.float32),
        cls_w=cls_w.reshape(1, D),          # stored pre-transposed (1, D)
        cls_b=cls_b.reshape(1, 1),
    )


# ----------------------------------------------------------------------------
if __name__ == "__main__":
    # Small shapes consistent with the module's forward:
    B, S = 2, 8               # batch, max_seq_len
    INPUT_DIM = 64            # input_dim (BERT-like feature dim, shrunk)
    EMBED_DIM = 32
    NUM_HEADS = 4
    NUM_BLOCKS = 2
    FFN_DIM = 32

    key = jax.random.PRNGKey(0)
    k_params, k_x = jax.random.split(key)

    params = init_params(k_params, INPUT_DIM, EMBED_DIM, NUM_HEADS,
                         NUM_BLOCKS, FFN_DIM)
    x = jax.random.normal(k_x, (B, S, INPUT_DIM), jnp.float32)

    fwd = jax.jit(text_classifier_forward)
    logits = jax.block_until_ready(fwd(params, x))

    assert logits.shape == (B, 1), logits.shape
    assert logits.dtype == jnp.float32
    assert bool(jnp.all(jnp.isfinite(logits)))
    print("KERNEL_OK")
</pallas_src>

<mosaic_0001>
module attributes {stable_mosaic.version = 11 : i64} {
  func.func @_text_classifier_kernel(%arg0: i32, %arg1: memref<1x8x64xf32, #tpu.memory_space<vmem>>, %arg2: memref<64x32xf32, #tpu.memory_space<vmem>>, %arg3: memref<1x32xf32, #tpu.memory_space<vmem>>, %arg4: memref<2x12x32x8xf32, #tpu.memory_space<vmem>>, %arg5: memref<2x12x1x8xf32, #tpu.memory_space<vmem>>, %arg6: memref<2x32x32xf32, #tpu.memory_space<vmem>>, %arg7: memref<2x1x32xf32, #tpu.memory_space<vmem>>, %arg8: memref<2x1x32xf32, #tpu.memory_space<vmem>>, %arg9: memref<2x1x32xf32, #tpu.memory_space<vmem>>, %arg10: memref<2x32x32xf32, #tpu.memory_space<vmem>>, %arg11: memref<2x1x32xf32, #tpu.memory_space<vmem>>, %arg12: memref<2x32x32xf32, #tpu.memory_space<vmem>>, %arg13: memref<2x1x32xf32, #tpu.memory_space<vmem>>, %arg14: memref<2x1x32xf32, #tpu.memory_space<vmem>>, %arg15: memref<2x1x32xf32, #tpu.memory_space<vmem>>, %arg16: memref<1x32xf32, #tpu.memory_space<vmem>>, %arg17: memref<1x32xf32, #tpu.memory_space<vmem>>, %arg18: memref<1x32xf32, #tpu.memory_space<vmem>>, %arg19: memref<1x1xf32, #tpu.memory_space<vmem>>, %arg20: memref<1x1x1xf32, #tpu.memory_space<vmem>>) attributes {dimension_semantics = [#tpu.dimension_semantics<parallel>], iteration_bounds = array<i64: 2>, scalar_prefetch = 0 : i64, scratch_operands = 0 : i64, tpu.core_type = #tpu.core_type<tc>, window_params = [{transform_indices = @transform_0, window_bounds = array<i64: 1, 8, 64>}, {pipeline_mode = #tpu.pipeline_mode<synchronous>, transform_indices = @transform_1, window_bounds = array<i64: 64, 32>}, {pipeline_mode = #tpu.pipeline_mode<synchronous>, transform_indices = @transform_2, window_bounds = array<i64: 1, 32>}, {pipeline_mode = #tpu.pipeline_mode<synchronous>, transform_indices = @transform_3, window_bounds = array<i64: 2, 12, 32, 8>}, {pipeline_mode = #tpu.pipeline_mode<synchronous>, transform_indices = @transform_4, window_bounds = array<i64: 2, 12, 1, 8>}, {pipeline_mode = #tpu.pipeline_mode<synchronous>, transform_indices = @transform_5, window_bounds = array<i64: 2, 32, 32>}, {pipeline_mode = #tpu.pipeline_mode<synchronous>, transform_indices = @transform_6, window_bounds = array<i64: 2, 1, 32>}, {pipeline_mode = #tpu.pipeline_mode<synchronous>, transform_indices = @transform_7, window_bounds = array<i64: 2, 1, 32>}, {pipeline_mode = #tpu.pipeline_mode<synchronous>, transform_indices = @transform_8, window_bounds = array<i64: 2, 1, 32>}, {pipeline_mode = #tpu.pipeline_mode<synchronous>, transform_indices = @transform_9, window_bounds = array<i64: 2, 32, 32>}, {pipeline_mode = #tpu.pipeline_mode<synchronous>, transform_indices = @transform_10, window_bounds = array<i64: 2, 1, 32>}, {pipeline_mode = #tpu.pipeline_mode<synchronous>, transform_indices = @transform_11, window_bounds = array<i64: 2, 32, 32>}, {pipeline_mode = #tpu.pipeline_mode<synchronous>, transform_indices = @transform_12, window_bounds = array<i64: 2, 1, 32>}, {pipeline_mode = #tpu.pipeline_mode<synchronous>, transform_indices = @transform_13, window_bounds = array<i64: 2, 1, 32>}, {pipeline_mode = #tpu.pipeline_mode<synchronous>, transform_indices = @transform_14, window_bounds = array<i64: 2, 1, 32>}, {pipeline_mode = #tpu.pipeline_mode<synchronous>, transform_indices = @transform_15, window_bounds = array<i64: 1, 32>}, {pipeline_mode = #tpu.pipeline_mode<synchronous>, transform_indices = @transform_16, window_bounds = array<i64: 1, 32>}, {pipeline_mode = #tpu.pipeline_mode<synchronous>, transform_indices = @transform_17, window_bounds = array<i64: 1, 32>}, {pipeline_mode = #tpu.pipeline_mode<synchronous>, transform_indices = @transform_18, window_bounds = array<i64: 1, 1>}, {transform_indices = @transform_19, window_bounds = array<i64: 1, 1, 1>}]} {
    %c0 = arith.constant 0 : index
    %c0_0 = arith.constant 0 : index
    %c0_1 = arith.constant 0 : index
    %0 = vector.load %arg1[%c0, %c0_0, %c0_1] : memref<1x8x64xf32, #tpu.memory_space<vmem>>, vector<1x8x64xf32>
    %1 = vector.shape_cast %0 : vector<1x8x64xf32> to vector<8x64xf32>
    %c0_2 = arith.constant 0 : index
    %c0_3 = arith.constant 0 : index
    %2 = vector.load %arg2[%c0_2, %c0_3] : memref<64x32xf32, #tpu.memory_space<vmem>>, vector<64x32xf32>
    %3 = arith.truncf %1 : vector<8x64xf32> to vector<8x64xbf16>
    %4 = arith.truncf %2 : vector<64x32xf32> to vector<64x32xbf16>
    %cst = arith.constant dense<0.000000e+00> : vector<8x32xf32>
    %5 = tpu.matmul %3, %4, %cst {dimension_numbers = #tpu.dot_dimension_numbers<[1], [0], [0], [1], [0, 0, 1, 1], [], []>} : vector<8x64xbf16>, vector<64x32xbf16>, vector<8x32xf32> -> vector<8x32xf32>
    %c0_4 = arith.constant 0 : index
    %c0_5 = arith.constant 0 : index
    %6 = vector.load %arg3[%c0_4, %c0_5] : memref<1x32xf32, #tpu.memory_space<vmem>>, vector<1x32xf32>
    %7 = vector.broadcast %6 : vector<1x32xf32> to vector<8x32xf32>
    %8 = arith.addf %5, %7 : vector<8x32xf32>
    %c0_6 = arith.constant 0 : index
    %c0_7 = arith.constant 0 : index
    %c0_8 = arith.constant 0 : index
    %c0_9 = arith.constant 0 : index
    %9 = vector.load %arg4[%c0_6, %c0_7, %c0_8, %c0_9] : memref<2x12x32x8xf32, #tpu.memory_space<vmem>>, vector<1x1x32x8xf32>
    %10 = vector.shape_cast %9 : vector<1x1x32x8xf32> to vector<32x8xf32>
    %11 = arith.truncf %8 : vector<8x32xf32> to vector<8x32xbf16>
    %12 = arith.truncf %10 : vector<32x8xf32> to vector<32x8xbf16>
    %cst_10 = arith.constant dense<0.000000e+00> : vector<8x8xf32>
    %13 = tpu.matmul %11, %12, %cst_10 {dimension_numbers = #tpu.dot_dimension_numbers<[1], [0], [0], [1], [0, 0, 1, 1], [], []>} : vector<8x32xbf16>, vector<32x8xbf16>, vector<8x8xf32> -> vector<8x8xf32>
    %c0_11 = arith.constant 0 : index
    %c0_12 = arith.constant 0 : index
    %c0_13 = arith.constant 0 : index
    %c0_14 = arith.constant 0 : index
    %14 = vector.load %arg5[%c0_11, %c0_12, %c0_13, %c0_14] : memref<2x12x1x8xf32, #tpu.memory_space<vmem>>, vector<1x1x1x8xf32>
    %15 = vector.shape_cast %14 : vector<1x1x1x8xf32> to vector<1x8xf32>
    %16 = vector.broadcast %15 : vector<1x8xf32> to vector<8x8xf32>
    %17 = arith.addf %13, %16 : vector<8x8xf32>
    %c0_15 = arith.constant 0 : index
    %c4 = arith.constant 4 : index
    %c0_16 = arith.constant 0 : index
    %c0_17 = arith.constant 0 : index
    %18 = vector.load %arg4[%c0_15, %c4, %c0_16, %c0_17] : memref<2x12x32x8xf32, #tpu.memory_space<vmem>>, vector<1x1x32x8xf32>
    %19 = vector.shape_cast %18 : vector<1x1x32x8xf32> to vector<32x8xf32>
    %20 = arith.truncf %8 : vector<8x32xf32> to vector<8x32xbf16>
    %21 = arith.truncf %19 : vector<32x8xf32> to vector<32x8xbf16>
    %cst_18 = arith.constant dense<0.000000e+00> : vector<8x8xf32>
    %22 = tpu.matmul %20, %21, %cst_18 {dimension_numbers = #tpu.dot_dimension_numbers<[1], [0], [0], [1], [0, 0, 1, 1], [], []>} : vector<8x32xbf16>, vector<32x8xbf16>, vector<8x8xf32> -> vector<8x8xf32>
    %c0_19 = arith.constant 0 : index
    %c4_20 = arith.constant 4 : index
    %c0_21 = arith.constant 0 : index
    %c0_22 = arith.constant 0 : index
    %23 = vector.load %arg5[%c0_19, %c4_20, %c0_21, %c0_22] : memref<2x12x1x8xf32, #tpu.memory_space<vmem>>, vector<1x1x1x8xf32>
    %24 = vector.shape_cast %23 : vector<1x1x1x8xf32> to vector<1x8xf32>
    %25 = vector.broadcast %24 : vector<1x8xf32> to vector<8x8xf32>
    %26 = arith.addf %22, %25 : vector<8x8xf32>
    %c0_23 = arith.constant 0 : index
    %c8 = arith.constant 8 : index
    %c0_24 = arith.constant 0 : index
    %c0_25 = arith.constant 0 : index
    %27 = vector.load %arg4[%c0_23, %c8, %c0_24, %c0_25] : memref<2x12x32x8xf32, #tpu.memory_space<vmem>>, vector<1x1x32x8xf32>
    %28 = vector.shape_cast %27 : vector<1x1x32x8xf32> to vector<32x8xf32>
    %29 = arith.truncf %8 : vector<8x32xf32> to vector<8x32xbf16>
    %30 = arith.truncf %28 : vector<32x8xf32> to vector<32x8xbf16>
    %cst_26 = arith.constant dense<0.000000e+00> : vector<8x8xf32>
    %31 = tpu.matmul %29, %30, %cst_26 {dimension_numbers = #tpu.dot_dimension_numbers<[1], [0], [0], [1], [0, 0, 1, 1], [], []>} : vector<8x32xbf16>, vector<32x8xbf16>, vector<8x8xf32> -> vector<8x8xf32>
    %c0_27 = arith.constant 0 : index
    %c8_28 = arith.constant 8 : index
    %c0_29 = arith.constant 0 : index
    %c0_30 = arith.constant 0 : index
    %32 = vector.load %arg5[%c0_27, %c8_28, %c0_29, %c0_30] : memref<2x12x1x8xf32, #tpu.memory_space<vmem>>, vector<1x1x1x8xf32>
    %33 = vector.shape_cast %32 : vector<1x1x1x8xf32> to vector<1x8xf32>
    %34 = vector.broadcast %33 : vector<1x8xf32> to vector<8x8xf32>
    %35 = arith.addf %31, %34 : vector<8x8xf32>
    %36 = arith.truncf %17 : vector<8x8xf32> to vector<8x8xbf16>
    %37 = arith.truncf %26 : vector<8x8xf32> to vector<8x8xbf16>
    %cst_31 = arith.constant dense<0.000000e+00> : vector<8x8xf32>
    %38 = tpu.matmul %36, %37, %cst_31 {dimension_numbers = #tpu.dot_dimension_numbers<[1], [1], [0], [0], [0, 0, 1, 0], [], []>} : vector<8x8xbf16>, vector<8x8xbf16>, vector<8x8xf32> -> vector<8x8xf32>
    %cst_32 = arith.constant 0.353553385 : f32
    %39 = vector.broadcast %cst_32 : f32 to vector<8x8xf32>
    %40 = arith.mulf %38, %39 : vector<8x8xf32>
    %cst_33 = arith.constant dense<0xFF800000> : vector<8xf32>
    %41 = vector.multi_reduction <maximumf>, %40, %cst_33 [1] : vector<8x8xf32> to vector<8xf32>
    %42 = vector.shape_cast %41 : vector<8xf32> to vector<8x1xf32>
    %43 = vector.broadcast %42 : vector<8x1xf32> to vector<8x8xf32>
    %44 = arith.subf %40, %43 : vector<8x8xf32>
    %45 = math.exp %44 : vector<8x8xf32>
    %cst_34 = arith.constant dense<0.000000e+00> : vector<8xf32>
    %46 = vector.multi_reduction <add>, %45, %cst_34 [1] : vector<8x8xf32> to vector<8xf32>
    %47 = vector.shape_cast %46 : vector<8xf32> to vector<8x1xf32>
    %48 = tpu.reciprocal %47 {approx = true} : vector<8x1xf32> -> vector<8x1xf32>
    %49 = vector.broadcast %48 : vector<8x1xf32> to vector<8x8xf32>
    %50 = arith.mulf %45, %49 : vector<8x8xf32>
    %51 = arith.truncf %50 : vector<8x8xf32> to vector<8x8xbf16>
    %52 = arith.truncf %35 : vector<8x8xf32> to vector<8x8xbf16>
    %cst_35 = arith.constant dense<0.000000e+00> : vector<8x8xf32>
    %53 = tpu.matmul %51, %52, %cst_35 {dimension_numbers = #tpu.dot_dimension_numbers<[1], [0], [0], [1], [0, 0, 1, 1], [], []>} : vector<8x8xbf16>, vector<8x8xbf16>, vector<8x8xf32> -> vector<8x8xf32>
    %c0_36 = arith.constant 0 : index
    %c1 = arith.constant 1 : index
    %c0_37 = arith.constant 0 : index
    %c0_38 = arith.constant 0 : index
    %54 = vector.load %arg4[%c0_36, %c1, %c0_37, %c0_38] : memref<2x12x32x8xf32, #tpu.memory_space<vmem>>, vector<1x1x32x8xf32>
    %55 = vector.shape_cast %54 : vector<1x1x32x8xf32> to vector<32x8xf32>
    %56 = arith.truncf %8 : vector<8x32xf32> to vector<8x32xbf16>
    %57 = arith.truncf %55 : vector<32x8xf32> to vector<32x8xbf16>
    %cst_39 = arith.constant dense<0.000000e+00> : vector<8x8xf32>
    %58 = tpu.matmul %56, %57, %cst_39 {dimension_numbers = #tpu.dot_dimension_numbers<[1], [0], [0], [1], [0, 0, 1, 1], [], []>} : vector<8x32xbf16>, vector<32x8xbf16>, vector<8x8xf32> -> vector<8x8xf32>
    %c0_40 = arith.constant 0 : index
    %c1_41 = arith.constant 1 : index
    %c0_42 = arith.constant 0 : index
    %c0_43 = arith.constant 0 : index
    %59 = vector.load %arg5[%c0_40, %c1_41, %c0_42, %c0_43] : memref<2x12x1x8xf32, #tpu.memory_space<vmem>>, vector<1x1x1x8xf32>
    %60 = vector.shape_cast %59 : vector<1x1x1x8xf32> to vector<1x8xf32>
    %61 = vector.broadcast %60 : vector<1x8xf32> to vector<8x8xf32>
    %62 = arith.addf %58, %61 : vector<8x8xf32>
    %c0_44 = arith.constant 0 : index
    %c5 = arith.constant 5 : index
    %c0_45 = arith.constant 0 : index
    %c0_46 = arith.constant 0 : index
    %63 = vector.load %arg4[%c0_44, %c5, %c0_45, %c0_46] : memref<2x12x32x8xf32, #tpu.memory_space<vmem>>, vector<1x1x32x8xf32>
    %64 = vector.shape_cast %63 : vector<1x1x32x8xf32> to vector<32x8xf32>
    %65 = arith.truncf %8 : vector<8x32xf32> to vector<8x32xbf16>
    %66 = arith.truncf %64 : vector<32x8xf32> to vector<32x8xbf16>
    %cst_47 = arith.constant dense<0.000000e+00> : vector<8x8xf32>
    %67 = tpu.matmul %65, %66, %cst_47 {dimension_numbers = #tpu.dot_dimension_numbers<[1], [0], [0], [1], [0, 0, 1, 1], [], []>} : vector<8x32xbf16>, vector<32x8xbf16>, vector<8x8xf32> -> vector<8x8xf32>
    %c0_48 = arith.constant 0 : index
    %c5_49 = arith.constant 5 : index
    %c0_50 = arith.constant 0 : index
    %c0_51 = arith.constant 0 : index
    %68 = vector.load %arg5[%c0_48, %c5_49, %c0_50, %c0_51] : memref<2x12x1x8xf32, #tpu.memory_space<vmem>>, vector<1x1x1x8xf32>
    %69 = vector.shape_cast %68 : vector<1x1x1x8xf32> to vector<1x8xf32>
    %70 = vector.broadcast %69 : vector<1x8xf32> to vector<8x8xf32>
    %71 = arith.addf %67, %70 : vector<8x8xf32>
    %c0_52 = arith.constant 0 : index
    %c9 = arith.constant 9 : index
    %c0_53 = arith.constant 0 : index
    %c0_54 = arith.constant 0 : index
    %72 = vector.load %arg4[%c0_52, %c9, %c0_53, %c0_54] : memref<2x12x32x8xf32, #tpu.memory_space<vmem>>, vector<1x1x32x8xf32>
    %73 = vector.shape_cast %72 : vector<1x1x32x8xf32> to vector<32x8xf32>
    %74 = arith.truncf %8 : vector<8x32xf32> to vector<8x32xbf16>
    %75 = arith.truncf %73 : vector<32x8xf32> to vector<32x8xbf16>
    %cst_55 = arith.constant dense<0.000000e+00> : vector<8x8xf32>
    %76 = tpu.matmul %74, %75, %cst_55 {dimension_numbers = #tpu.dot_dimension_numbers<[1], [0], [0], [1], [0, 0, 1, 1], [], []>} : vector<8x32xbf16>, vector<32x8xbf16>, vector<8x8xf32> -> vector<8x8xf32>
    %c0_56 = arith.constant 0 : index
    %c9_57 = arith.constant 9 : index
    %c0_58 = arith.constant 0 : index
    %c0_59 = arith.constant 0 : index
    %77 = vector.load %arg5[%c0_56, %c9_57, %c0_58, %c0_59] : memref<2x12x1x8xf32, #tpu.memory_space<vmem>>, vector<1x1x1x8xf32>
    %78 = vector.shape_cast %77 : vector<1x1x1x8xf32> to vector<1x8xf32>
    %79 = vector.broadcast %78 : vector<1x8xf32> to vector<8x8xf32>
    %80 = arith.addf %76, %79 : vector<8x8xf32>
    %81 = arith.truncf %62 : vector<8x8xf32> to vector<8x8xbf16>
    %82 = arith.truncf %71 : vector<8x8xf32> to vector<8x8xbf16>
    %cst_60 = arith.constant dense<0.000000e+00> : vector<8x8xf32>
    %83 = tpu.matmul %81, %82, %cst_60 {dimension_numbers = #tpu.dot_dimension_numbers<[1], [1], [0], [0], [0, 0, 1, 0], [], []>} : vector<8x8xbf16>, vector<8x8xbf16>, vector<8x8xf32> -> vector<8x8xf32>
    %cst_61 = arith.constant 0.353553385 : f32
    %84 = vector.broadcast %cst_61 : f32 to vector<8x8xf32>
    %85 = arith.mulf %83, %84 : vector<8x8xf32>
    %cst_62 = arith.constant dense<0xFF800000> : vector<8xf32>
    %86 = vector.multi_reduction <maximumf>, %85, %cst_62 [1] : vector<8x8xf32> to vector<8xf32>
    %87 = vector.shape_cast %86 : vector<8xf32> to vector<8x1xf32>
    %88 = vector.broadcast %87 : vector<8x1xf32> to vector<8x8xf32>
    %89 = arith.subf %85, %88 : vector<8x8xf32>
    %90 = math.exp %89 : vector<8x8xf32>
    %cst_63 = arith.constant dense<0.000000e+00> : vector<8xf32>
    %91 = vector.multi_reduction <add>, %90, %cst_63 [1] : vector<8x8xf32> to vector<8xf32>
    %92 = vector.shape_cast %91 : vector<8xf32> to vector<8x1xf32>
    %93 = tpu.reciprocal %92 {approx = true} : vector<8x1xf32> -> vector<8x1xf32>
    %94 = vector.broadcast %93 : vector<8x1xf32> to vector<8x8xf32>
    %95 = arith.mulf %90, %94 : vector<8x8xf32>
    %96 = arith.truncf %95 : vector<8x8xf32> to vector<8x8xbf16>
    %97 = arith.truncf %80 : vector<8x8xf32> to vector<8x8xbf16>
    %cst_64 = arith.constant dense<0.000000e+00> : vector<8x8xf32>
    %98 = tpu.matmul %96, %97, %cst_64 {dimension_numbers = #tpu.dot_dimension_numbers<[1], [0], [0], [1], [0, 0, 1, 1], [], []>} : vector<8x8xbf16>, vector<8x8xbf16>, vector<8x8xf32> -> vector<8x8xf32>
    %c0_65 = arith.constant 0 : index
    %c2 = arith.constant 2 : index
    %c0_66 = arith.constant 0 : index
    %c0_67 = arith.constant 0 : index
    %99 = vector.load %arg4[%c0_65, %c2, %c0_66, %c0_67] : memref<2x12x32x8xf32, #tpu.memory_space<vmem>>, vector<1x1x32x8xf32>
    %100 = vector.shape_cast %99 : vector<1x1x32x8xf32> to vector<32x8xf32>
    %101 = arith.truncf %8 : vector<8x32xf32> to vector<8x32xbf16>
    %102 = arith.truncf %100 : vector<32x8xf32> to vector<32x8xbf16>
    %cst_68 = arith.constant dense<0.000000e+00> : vector<8x8xf32>
    %103 = tpu.matmul %101, %102, %cst_68 {dimension_numbers = #tpu.dot_dimension_numbers<[1], [0], [0], [1], [0, 0, 1, 1], [], []>} : vector<8x32xbf16>, vector<32x8xbf16>, vector<8x8xf32> -> vector<8x8xf32>
    %c0_69 = arith.constant 0 : index
    %c2_70 = arith.constant 2 : index
    %c0_71 = arith.constant 0 : index
    %c0_72 = arith.constant 0 : index
    %104 = vector.load %arg5[%c0_69, %c2_70, %c0_71, %c0_72] : memref<2x12x1x8xf32, #tpu.memory_space<vmem>>, vector<1x1x1x8xf32>
    %105 = vector.shape_cast %104 : vector<1x1x1x8xf32> to vector<1x8xf32>
    %106 = vector.broadcast %105 : vector<1x8xf32> to vector<8x8xf32>
    %107 = arith.addf %103, %106 : vector<8x8xf32>
    %c0_73 = arith.constant 0 : index
    %c6 = arith.constant 6 : index
    %c0_74 = arith.constant 0 : index
    %c0_75 = arith.constant 0 : index
    %108 = vector.load %arg4[%c0_73, %c6, %c0_74, %c0_75] : memref<2x12x32x8xf32, #tpu.memory_space<vmem>>, vector<1x1x32x8xf32>
    %109 = vector.shape_cast %108 : vector<1x1x32x8xf32> to vector<32x8xf32>
    %110 = arith.truncf %8 : vector<8x32xf32> to vector<8x32xbf16>
    %111 = arith.truncf %109 : vector<32x8xf32> to vector<32x8xbf16>
    %cst_76 = arith.constant dense<0.000000e+00> : vector<8x8xf32>
    %112 = tpu.matmul %110, %111, %cst_76 {dimension_numbers = #tpu.dot_dimension_numbers<[1], [0], [0], [1], [0, 0, 1, 1], [], []>} : vector<8x32xbf16>, vector<32x8xbf16>, vector<8x8xf32> -> vector<8x8xf32>
    %c0_77 = arith.constant 0 : index
    %c6_78 = arith.constant 6 : index
    %c0_79 = arith.constant 0 : index
    %c0_80 = arith.constant 0 : index
    %113 = vector.load %arg5[%c0_77, %c6_78, %c0_79, %c0_80] : memref<2x12x1x8xf32, #tpu.memory_space<vmem>>, vector<1x1x1x8xf32>
    %114 = vector.shape_cast %113 : vector<1x1x1x8xf32> to vector<1x8xf32>
    %115 = vector.broadcast %114 : vector<1x8xf32> to vector<8x8xf32>
    %116 = arith.addf %112, %115 : vector<8x8xf32>
    %c0_81 = arith.constant 0 : index
    %c10 = arith.constant 10 : index
    %c0_82 = arith.constant 0 : index
    %c0_83 = arith.constant 0 : index
    %117 = vector.load %arg4[%c0_81, %c10, %c0_82, %c0_83] : memref<2x12x32x8xf32, #tpu.memory_space<vmem>>, vector<1x1x32x8xf32>
    %118 = vector.shape_cast %117 : vector<1x1x32x8xf32> to vector<32x8xf32>
    %119 = arith.truncf %8 : vector<8x32xf32> to vector<8x32xbf16>
    %120 = arith.truncf %118 : vector<32x8xf32> to vector<32x8xbf16>
    %cst_84 = arith.constant dense<0.000000e+00> : vector<8x8xf32>
    %121 = tpu.matmul %119, %120, %cst_84 {dimension_numbers = #tpu.dot_dimension_numbers<[1], [0], [0], [1], [0, 0, 1, 1], [], []>} : vector<8x32xbf16>, vector<32x8xbf16>, vector<8x8xf32> -> vector<8x8xf32>
    %c0_85 = arith.constant 0 : index
    %c10_86 = arith.constant 10 : index
    %c0_87 = arith.constant 0 : index
    %c0_88 = arith.constant 0 : index
    %122 = vector.load %arg5[%c0_85, %c10_86, %c0_87, %c0_88] : memref<2x12x1x8xf32, #tpu.memory_space<vmem>>, vector<1x1x1x8xf32>
    %123 = vector.shape_cast %122 : vector<1x1x1x8xf32> to vector<1x8xf32>
    %124 = vector.broadcast %123 : vector<1x8xf32> to vector<8x8xf32>
    %125 = arith.addf %121, %124 : vector<8x8xf32>
    %126 = arith.truncf %107 : vector<8x8xf32> to vector<8x8xbf16>
    %127 = arith.truncf %116 : vector<8x8xf32> to vector<8x8xbf16>
    %cst_89 = arith.constant dense<0.000000e+00> : vector<8x8xf32>
    %128 = tpu.matmul %126, %127, %cst_89 {dimension_numbers = #tpu.dot_dimension_numbers<[1], [1], [0], [0], [0, 0, 1, 0], [], []>} : vector<8x8xbf16>, vector<8x8xbf16>, vector<8x8xf32> -> vector<8x8xf32>
    %cst_90 = arith.constant 0.353553385 : f32
    %129 = vector.broadcast %cst_90 : f32 to vector<8x8xf32>
    %130 = arith.mulf %128, %129 : vector<8x8xf32>
    %cst_91 = arith.constant dense<0xFF800000> : vector<8xf32>
    %131 = vector.multi_reduction <maximumf>, %130, %cst_91 [1] : vector<8x8xf32> to vector<8xf32>
    %132 = vector.shape_cast %131 : vector<8xf32> to vector<8x1xf32>
    %133 = vector.broadcast %132 : vector<8x1xf32> to vector<8x8xf32>
    %134 = arith.subf %130, %133 : vector<8x8xf32>
    %135 = math.exp %134 : vector<8x8xf32>
    %cst_92 = arith.constant dense<0.000000e+00> : vector<8xf32>
    %136 = vector.multi_reduction <add>, %135, %cst_92 [1] : vector<8x8xf32> to vector<8xf32>
    %137 = vector.shape_cast %136 : vector<8xf32> to vector<8x1xf32>
    %138 = tpu.reciprocal %137 {approx = true} : vector<8x1xf32> -> vector<8x1xf32>
    %139 = vector.broadcast %138 : vector<8x1xf32> to vector<8x8xf32>
    %140 = arith.mulf %135, %139 : vector<8x8xf32>
    %141 = arith.truncf %140 : vector<8x8xf32> to vector<8x8xbf16>
    %142 = arith.truncf %125 : vector<8x8xf32> to vector<8x8xbf16>
    %cst_93 = arith.constant dense<0.000000e+00> : vector<8x8xf32>
    %143 = tpu.matmul %141, %142, %cst_93 {dimension_numbers = #tpu.dot_dimension_numbers<[1], [0], [0], [1], [0, 0, 1, 1], [], []>} : vector<8x8xbf16>, vector<8x8xbf16>, vector<8x8xf32> -> vector<8x8xf32>
    %c0_94 = arith.constant 0 : index
    %c3 = arith.constant 3 : index
    %c0_95 = arith.constant 0 : index
    %c0_96 = arith.constant 0 : index
    %144 = vector.load %arg4[%c0_94, %c3, %c0_95, %c0_96] : memref<2x12x32x8xf32, #tpu.memory_space<vmem>>, vector<1x1x32x8xf32>
    %145 = vector.shape_cast %144 : vector<1x1x32x8xf32> to vector<32x8xf32>
    %146 = arith.truncf %8 : vector<8x32xf32> to vector<8x32xbf16>
    %147 = arith.truncf %145 : vector<32x8xf32> to vector<32x8xbf16>
    %cst_97 = arith.constant dense<0.000000e+00> : vector<8x8xf32>
    %148 = tpu.matmul %146, %147, %cst_97 {dimension_numbers = #tpu.dot_dimension_numbers<[1], [0], [0], [1], [0, 0, 1, 1], [], []>} : vector<8x32xbf16>, vector<32x8xbf16>, vector<8x8xf32> -> vector<8x8xf32>
    %c0_98 = arith.constant 0 : index
    %c3_99 = arith.constant 3 : index
    %c0_100 = arith.constant 0 : index
    %c0_101 = arith.constant 0 : index
    %149 = vector.load %arg5[%c0_98, %c3_99, %c0_100, %c0_101] : memref<2x12x1x8xf32, #tpu.memory_space<vmem>>, vector<1x1x1x8xf32>
    %150 = vector.shape_cast %149 : vector<1x1x1x8xf32> to vector<1x8xf32>
    %151 = vector.broadcast %150 : vector<1x8xf32> to vector<8x8xf32>
    %152 = arith.addf %148, %151 : vector<8x8xf32>
    %c0_102 = arith.constant 0 : index
    %c7 = arith.constant 7 : index
    %c0_103 = arith.constant 0 : index
    %c0_104 = arith.constant 0 : index
    %153 = vector.load %arg4[%c0_102, %c7, %c0_103, %c0_104] : memref<2x12x32x8xf32, #tpu.memory_space<vmem>>, vector<1x1x32x8xf32>
    %154 = vector.shape_cast %153 : vector<1x1x32x8xf32> to vector<32x8xf32>
    %155 = arith.truncf %8 : vector<8x32xf32> to vector<8x32xbf16>
    %156 = arith.truncf %154 : vector<32x8xf32> to vector<32x8xbf16>
    %cst_105 = arith.constant dense<0.000000e+00> : vector<8x8xf32>
    %157 = tpu.matmul %155, %156, %cst_105 {dimension_numbers = #tpu.dot_dimension_numbers<[1], [0], [0], [1], [0, 0, 1, 1], [], []>} : vector<8x32xbf16>, vector<32x8xbf16>, vector<8x8xf32> -> vector<8x8xf32>
    %c0_106 = arith.constant 0 : index
    %c7_107 = arith.constant 7 : index
    %c0_108 = arith.constant 0 : index
    %c0_109 = arith.constant 0 : index
    %158 = vector.load %arg5[%c0_106, %c7_107, %c0_108, %c0_109] : memref<2x12x1x8xf32, #tpu.memory_space<vmem>>, vector<1x1x1x8xf32>
    %159 = vector.shape_cast %158 : vector<1x1x1x8xf32> to vector<1x8xf32>
    %160 = vector.broadcast %159 : vector<1x8xf32> to vector<8x8xf32>
    %161 = arith.addf %157, %160 : vector<8x8xf32>
    %c0_110 = arith.constant 0 : index
    %c11 = arith.constant 11 : index
    %c0_111 = arith.constant 0 : index
    %c0_112 = arith.constant 0 : index
    %162 = vector.load %arg4[%c0_110, %c11, %c0_111, %c0_112] : memref<2x12x32x8xf32, #tpu.memory_space<vmem>>, vector<1x1x32x8xf32>
    %163 = vector.shape_cast %162 : vector<1x1x32x8xf32> to vector<32x8xf32>
    %164 = arith.truncf %8 : vector<8x32xf32> to vector<8x32xbf16>
    %165 = arith.truncf %163 : vector<32x8xf32> to vector<32x8xbf16>
    %cst_113 = arith.constant dense<0.000000e+00> : vector<8x8xf32>
    %166 = tpu.matmul %164, %165, %cst_113 {dimension_numbers = #tpu.dot_dimension_numbers<[1], [0], [0], [1], [0, 0, 1, 1], [], []>} : vector<8x32xbf16>, vector<32x8xbf16>, vector<8x8xf32> -> vector<8x8xf32>
    %c0_114 = arith.constant 0 : index
    %c11_115 = arith.constant 11 : index
    %c0_116 = arith.constant 0 : index
    %c0_117 = arith.constant 0 : index
    %167 = vector.load %arg5[%c0_114, %c11_115, %c0_116, %c0_117] : memref<2x12x1x8xf32, #tpu.memory_space<vmem>>, vector<1x1x1x8xf32>
    %168 = vector.shape_cast %167 : vector<1x1x1x8xf32> to vector<1x8xf32>
    %169 = vector.broadcast %168 : vector<1x8xf32> to vector<8x8xf32>
    %170 = arith.addf %166, %169 : vector<8x8xf32>
    %171 = arith.truncf %152 : vector<8x8xf32> to vector<8x8xbf16>
    %172 = arith.truncf %161 : vector<8x8xf32> to vector<8x8xbf16>
    %cst_118 = arith.constant dense<0.000000e+00> : vector<8x8xf32>
    %173 = tpu.matmul %171, %172, %cst_118 {dimension_numbers = #tpu.dot_dimension_numbers<[1], [1], [0], [0], [0, 0, 1, 0], [], []>} : vector<8x8xbf16>, vector<8x8xbf16>, vector<8x8xf32> -> vector<8x8xf32>
    %cst_119 = arith.constant 0.353553385 : f32
    %174 = vector.broadcast %cst_119 : f32 to vector<8x8xf32>
    %175 = arith.mulf %173, %174 : vector<8x8xf32>
    %cst_120 = arith.constant dense<0xFF800000> : vector<8xf32>
    %176 = vector.multi_reduction <maximumf>, %175, %cst_120 [1] : vector<8x8xf32> to vector<8xf32>
    %177 = vector.shape_cast %176 : vector<8xf32> to vector<8x1xf32>
    %178 = vector.broadcast %177 : vector<8x1xf32> to vector<8x8xf32>
    %179 = arith.subf %175, %178 : vector<8x8xf32>
    %180 = math.exp %179 : vector<8x8xf32>
    %cst_121 = arith.constant dense<0.000000e+00> : vector<8xf32>
    %181 = vector.multi_reduction <add>, %180, %cst_121 [1] : vector<8x8xf32> to vector<8xf32>
    %182 = vector.shape_cast %181 : vector<8xf32> to vector<8x1xf32>
    %183 = tpu.reciprocal %182 {approx = true} : vector<8x1xf32> -> vector<8x1xf32>
    %184 = vector.broadcast %183 : vector<8x1xf32> to vector<8x8xf32>
    %185 = arith.mulf %180, %184 : vector<8x8xf32>
    %186 = arith.truncf %185 : vector<8x8xf32> to vector<8x8xbf16>
    %187 = arith.truncf %170 : vector<8x8xf32> to vector<8x8xbf16>
    %cst_122 = arith.constant dense<0.000000e+00> : vector<8x8xf32>
    %188 = tpu.matmul %186, %187, %cst_122 {dimension_numbers = #tpu.dot_dimension_numbers<[1], [0], [0], [1], [0, 0, 1, 1], [], []>} : vector<8x8xbf16>, vector<8x8xbf16>, vector<8x8xf32> -> vector<8x8xf32>
    %189 = tpu.concatenate %53, %98, %143, %188 in 1 : vector<8x8xf32>, vector<8x8xf32>, vector<8x8xf32>, vector<8x8xf32> -> vector<8x32xf32>
    %c0_123 = arith.constant 0 : index
    %c0_124 = arith.constant 0 : index
    %c0_125 = arith.constant 0 : index
    %190 = vector.load %arg6[%c0_123, %c0_124, %c0_125] : memref<2x32x32xf32, #tpu.memory_space<vmem>>, vector<1x32x32xf32>
    %191 = vector.shape_cast %190 : vector<1x32x32xf32> to vector<32x32xf32>
    %192 = arith.truncf %189 : vector<8x32xf32> to vector<8x32xbf16>
    %193 = arith.truncf %191 : vector<32x32xf32> to vector<32x32xbf16>
    %cst_126 = arith.constant dense<0.000000e+00> : vector<8x32xf32>
    %194 = tpu.matmul %192, %193, %cst_126 {dimension_numbers = #tpu.dot_dimension_numbers<[1], [0], [0], [1], [0, 0, 1, 1], [], []>} : vector<8x32xbf16>, vector<32x32xbf16>, vector<8x32xf32> -> vector<8x32xf32>
    %c0_127 = arith.constant 0 : index
    %c0_128 = arith.constant 0 : index
    %c0_129 = arith.constant 0 : index
    %195 = vector.load %arg7[%c0_127, %c0_128, %c0_129] : memref<2x1x32xf32, #tpu.memory_space<vmem>>, vector<1x1x32xf32>
    %196 = vector.shape_cast %195 : vector<1x1x32xf32> to vector<1x32xf32>
    %197 = vector.broadcast %196 : vector<1x32xf32> to vector<8x32xf32>
    %198 = arith.addf %194, %197 : vector<8x32xf32>
    %199 = arith.addf %8, %198 : vector<8x32xf32>
    %c0_130 = arith.constant 0 : index
    %c0_131 = arith.constant 0 : index
    %c0_132 = arith.constant 0 : index
    %200 = vector.load %arg8[%c0_130, %c0_131, %c0_132] : memref<2x1x32xf32, #tpu.memory_space<vmem>>, vector<1x1x32xf32>
    %201 = vector.shape_cast %200 : vector<1x1x32xf32> to vector<1x32xf32>
    %c0_133 = arith.constant 0 : index
    %c0_134 = arith.constant 0 : index
    %c0_135 = arith.constant 0 : index
    %202 = vector.load %arg9[%c0_133, %c0_134, %c0_135] : memref<2x1x32xf32, #tpu.memory_space<vmem>>, vector<1x1x32xf32>
    %203 = vector.shape_cast %202 : vector<1x1x32xf32> to vector<1x32xf32>
    %cst_136 = arith.constant dense<0.000000e+00> : vector<8xf32>
    %204 = vector.multi_reduction <add>, %199, %cst_136 [1] : vector<8x32xf32> to vector<8xf32>
    %205 = vector.shape_cast %204 : vector<8xf32> to vector<8x1xf32>
    %cst_137 = arith.constant 3.200000e+01 : f32
    %206 = vector.broadcast %cst_137 : f32 to vector<8x1xf32>
    %207 = arith.divf %205, %206 : vector<8x1xf32>
    %208 = vector.broadcast %207 : vector<8x1xf32> to vector<8x32xf32>
    %209 = arith.subf %199, %208 : vector<8x32xf32>
    %210 = arith.mulf %209, %209 : vector<8x32xf32>
    %cst_138 = arith.constant dense<0.000000e+00> : vector<8xf32>
    %211 = vector.multi_reduction <add>, %210, %cst_138 [1] : vector<8x32xf32> to vector<8xf32>
    %212 = vector.shape_cast %211 : vector<8xf32> to vector<8x1xf32>
    %cst_139 = arith.constant 3.200000e+01 : f32
    %213 = vector.broadcast %cst_139 : f32 to vector<8x1xf32>
    %214 = arith.divf %212, %213 : vector<8x1xf32>
    %215 = vector.broadcast %207 : vector<8x1xf32> to vector<8x32xf32>
    %216 = arith.subf %199, %215 : vector<8x32xf32>
    %cst_140 = arith.constant 9.99999974E-6 : f32
    %217 = vector.broadcast %cst_140 : f32 to vector<8x1xf32>
    %218 = arith.addf %214, %217 : vector<8x1xf32>
    %219 = math.rsqrt %218 : vector<8x1xf32>
    %220 = vector.broadcast %219 : vector<8x1xf32> to vector<8x32xf32>
    %221 = arith.mulf %216, %220 : vector<8x32xf32>
    %222 = vector.broadcast %201 : vector<1x32xf32> to vector<8x32xf32>
    %223 = arith.mulf %221, %222 : vector<8x32xf32>
    %224 = vector.broadcast %203 : vector<1x32xf32> to vector<8x32xf32>
    %225 = arith.addf %223, %224 : vector<8x32xf32>
    %c0_141 = arith.constant 0 : index
    %c0_142 = arith.constant 0 : index
    %c0_143 = arith.constant 0 : index
    %226 = vector.load %arg10[%c0_141, %c0_142, %c0_143] : memref<2x32x32xf32, #tpu.memory_space<vmem>>, vector<1x32x32xf32>
    %227 = vector.shape_cast %226 : vector<1x32x32xf32> to vector<32x32xf32>
    %228 = arith.truncf %225 : vector<8x32xf32> to vector<8x32xbf16>
    %229 = arith.truncf %227 : vector<32x32xf32> to vector<32x32xbf16>
    %cst_144 = arith.constant dense<0.000000e+00> : vector<8x32xf32>
    %230 = tpu.matmul %228, %229, %cst_144 {dimension_numbers = #tpu.dot_dimension_numbers<[1], [0], [0], [1], [0, 0, 1, 1], [], []>} : vector<8x32xbf16>, vector<32x32xbf16>, vector<8x32xf32> -> vector<8x32xf32>
    %c0_145 = arith.constant 0 : index
    %c0_146 = arith.constant 0 : index
    %c0_147 = arith.constant 0 : index
    %231 = vector.load %arg11[%c0_145, %c0_146, %c0_147] : memref<2x1x32xf32, #tpu.memory_space<vmem>>, vector<1x1x32xf32>
    %232 = vector.shape_cast %231 : vector<1x1x32xf32> to vector<1x32xf32>
    %233 = vector.broadcast %232 : vector<1x32xf32> to vector<8x32xf32>
    %234 = arith.addf %230, %233 : vector<8x32xf32>
    %cst_148 = arith.constant 0.000000e+00 : f32
    %235 = vector.broadcast %cst_148 : f32 to vector<8x32xf32>
    %236 = arith.maximumf %234, %235 : vector<8x32xf32>
    %c0_149 = arith.constant 0 : index
    %c0_150 = arith.constant 0 : index
    %c0_151 = arith.constant 0 : index
    %237 = vector.load %arg12[%c0_149, %c0_150, %c0_151] : memref<2x32x32xf32, #tpu.memory_space<vmem>>, vector<1x32x32xf32>
    %238 = vector.shape_cast %237 : vector<1x32x32xf32> to vector<32x32xf32>
    %239 = arith.truncf %236 : vector<8x32xf32> to vector<8x32xbf16>
    %240 = arith.truncf %238 : vector<32x32xf32> to vector<32x32xbf16>
    %cst_152 = arith.constant dense<0.000000e+00> : vector<8x32xf32>
    %241 = tpu.matmul %239, %240, %cst_152 {dimension_numbers = #tpu.dot_dimension_numbers<[1], [0], [0], [1], [0, 0, 1, 1], [], []>} : vector<8x32xbf16>, vector<32x32xbf16>, vector<8x32xf32> -> vector<8x32xf32>
    %c0_153 = arith.constant 0 : index
    %c0_154 = arith.constant 0 : index
    %c0_155 = arith.constant 0 : index
    %242 = vector.load %arg13[%c0_153, %c0_154, %c0_155] : memref<2x1x32xf32, #tpu.memory_space<vmem>>, vector<1x1x32xf32>
    %243 = vector.shape_cast %242 : vector<1x1x32xf32> to vector<1x32xf32>
    %244 = vector.broadcast %243 : vector<1x32xf32> to vector<8x32xf32>
    %245 = arith.addf %241, %244 : vector<8x32xf32>
    %246 = arith.addf %225, %245 : vector<8x32xf32>
    %c0_156 = arith.constant 0 : index
    %c0_157 = arith.constant 0 : index
    %c0_158 = arith.constant 0 : index
    %247 = vector.load %arg14[%c0_156, %c0_157, %c0_158] : memref<2x1x32xf32, #tpu.memory_space<vmem>>, vector<1x1x32xf32>
    %248 = vector.shape_cast %247 : vector<1x1x32xf32> to vector<1x32xf32>
    %c0_159 = arith.constant 0 : index
    %c0_160 = arith.constant 0 : index
    %c0_161 = arith.constant 0 : index
    %249 = vector.load %arg15[%c0_159, %c0_160, %c0_161] : memref<2x1x32xf32, #tpu.memory_space<vmem>>, vector<1x1x32xf32>
    %250 = vector.shape_cast %249 : vector<1x1x32xf32> to vector<1x32xf32>
    %cst_162 = arith.constant dense<0.000000e+00> : vector<8xf32>
    %251 = vector.multi_reduction <add>, %246, %cst_162 [1] : vector<8x32xf32> to vector<8xf32>
    %252 = vector.shape_cast %251 : vector<8xf32> to vector<8x1xf32>
    %cst_163 = arith.constant 3.200000e+01 : f32
    %253 = vector.broadcast %cst_163 : f32 to vector<8x1xf32>
    %254 = arith.divf %252, %253 : vector<8x1xf32>
    %255 = vector.broadcast %254 : vector<8x1xf32> to vector<8x32xf32>
    %256 = arith.subf %246, %255 : vector<8x32xf32>
    %257 = arith.mulf %256, %256 : vector<8x32xf32>
    %cst_164 = arith.constant dense<0.000000e+00> : vector<8xf32>
    %258 = vector.multi_reduction <add>, %257, %cst_164 [1] : vector<8x32xf32> to vector<8xf32>
    %259 = vector.shape_cast %258 : vector<8xf32> to vector<8x1xf32>
    %cst_165 = arith.constant 3.200000e+01 : f32
    %260 = vector.broadcast %cst_165 : f32 to vector<8x1xf32>
    %261 = arith.divf %259, %260 : vector<8x1xf32>
    %262 = vector.broadcast %254 : vector<8x1xf32> to vector<8x32xf32>
    %263 = arith.subf %246, %262 : vector<8x32xf32>
    %cst_166 = arith.constant 9.99999974E-6 : f32
    %264 = vector.broadcast %cst_166 : f32 to vector<8x1xf32>
    %265 = arith.addf %261, %264 : vector<8x1xf32>
    %266 = math.rsqrt %265 : vector<8x1xf32>
    %267 = vector.broadcast %266 : vector<8x1xf32> to vector<8x32xf32>
    %268 = arith.mulf %263, %267 : vector<8x32xf32>
    %269 = vector.broadcast %248 : vector<1x32xf32> to vector<8x32xf32>
    %270 = arith.mulf %268, %269 : vector<8x32xf32>
    %271 = vector.broadcast %250 : vector<1x32xf32> to vector<8x32xf32>
    %272 = arith.addf %270, %271 : vector<8x32xf32>
    %c1_167 = arith.constant 1 : index
    %c0_168 = arith.constant 0 : index
    %c0_169 = arith.constant 0 : index
    %c0_170 = arith.constant 0 : index
    %273 = vector.load %arg4[%c1_167, %c0_168, %c0_169, %c0_170] : memref<2x12x32x8xf32, #tpu.memory_space<vmem>>, vector<1x1x32x8xf32>
    %274 = vector.shape_cast %273 : vector<1x1x32x8xf32> to vector<32x8xf32>
    %275 = arith.truncf %272 : vector<8x32xf32> to vector<8x32xbf16>
    %276 = arith.truncf %274 : vector<32x8xf32> to vector<32x8xbf16>
    %cst_171 = arith.constant dense<0.000000e+00> : vector<8x8xf32>
    %277 = tpu.matmul %275, %276, %cst_171 {dimension_numbers = #tpu.dot_dimension_numbers<[1], [0], [0], [1], [0, 0, 1, 1], [], []>} : vector<8x32xbf16>, vector<32x8xbf16>, vector<8x8xf32> -> vector<8x8xf32>
    %c1_172 = arith.constant 1 : index
    %c0_173 = arith.constant 0 : index
    %c0_174 = arith.constant 0 : index
    %c0_175 = arith.constant 0 : index
    %278 = vector.load %arg5[%c1_172, %c0_173, %c0_174, %c0_175] : memref<2x12x1x8xf32, #tpu.memory_space<vmem>>, vector<1x1x1x8xf32>
    %279 = vector.shape_cast %278 : vector<1x1x1x8xf32> to vector<1x8xf32>
    %280 = vector.broadcast %279 : vector<1x8xf32> to vector<8x8xf32>
    %281 = arith.addf %277, %280 : vector<8x8xf32>
    %c1_176 = arith.constant 1 : index
    %c4_177 = arith.constant 4 : index
    %c0_178 = arith.constant 0 : index
    %c0_179 = arith.constant 0 : index
    %282 = vector.load %arg4[%c1_176, %c4_177, %c0_178, %c0_179] : memref<2x12x32x8xf32, #tpu.memory_space<vmem>>, vector<1x1x32x8xf32>
    %283 = vector.shape_cast %282 : vector<1x1x32x8xf32> to vector<32x8xf32>
    %284 = arith.truncf %272 : vector<8x32xf32> to vector<8x32xbf16>
    %285 = arith.truncf %283 : vector<32x8xf32> to vector<32x8xbf16>
    %cst_180 = arith.constant dense<0.000000e+00> : vector<8x8xf32>
    %286 = tpu.matmul %284, %285, %cst_180 {dimension_numbers = #tpu.dot_dimension_numbers<[1], [0], [0], [1], [0, 0, 1, 1], [], []>} : vector<8x32xbf16>, vector<32x8xbf16>, vector<8x8xf32> -> vector<8x8xf32>
    %c1_181 = arith.constant 1 : index
    %c4_182 = arith.constant 4 : index
    %c0_183 = arith.constant 0 : index
    %c0_184 = arith.constant 0 : index
    %287 = vector.load %arg5[%c1_181, %c4_182, %c0_183, %c0_184] : memref<2x12x1x8xf32, #tpu.memory_space<vmem>>, vector<1x1x1x8xf32>
    %288 = vector.shape_cast %287 : vector<1x1x1x8xf32> to vector<1x8xf32>
    %289 = vector.broadcast %288 : vector<1x8xf32> to vector<8x8xf32>
    %290 = arith.addf %286, %289 : vector<8x8xf32>
    %c1_185 = arith.constant 1 : index
    %c8_186 = arith.constant 8 : index
    %c0_187 = arith.constant 0 : index
    %c0_188 = arith.constant 0 : index
    %291 = vector.load %arg4[%c1_185, %c8_186, %c0_187, %c0_188] : memref<2x12x32x8xf32, #tpu.memory_space<vmem>>, vector<1x1x32x8xf32>
    %292 = vector.shape_cast %291 : vector<1x1x32x8xf32> to vector<32x8xf32>
    %293 = arith.truncf %272 : vector<8x32xf32> to vector<8x32xbf16>
    %294 = arith.truncf %292 : vector<32x8xf32> to vector<32x8xbf16>
    %cst_189 = arith.constant dense<0.000000e+00> : vector<8x8xf32>
    %295 = tpu.matmul %293, %294, %cst_189 {dimension_numbers = #tpu.dot_dimension_numbers<[1], [0], [0], [1], [0, 0, 1, 1], [], []>} : vector<8x32xbf16>, vector<32x8xbf16>, vector<8x8xf32> -> vector<8x8xf32>
    %c1_190 = arith.constant 1 : index
    %c8_191 = arith.constant 8 : index
    %c0_192 = arith.constant 0 : index
    %c0_193 = arith.constant 0 : index
    %296 = vector.load %arg5[%c1_190, %c8_191, %c0_192, %c0_193] : memref<2x12x1x8xf32, #tpu.memory_space<vmem>>, vector<1x1x1x8xf32>
    %297 = vector.shape_cast %296 : vector<1x1x1x8xf32> to vector<1x8xf32>
    %298 = vector.broadcast %297 : vector<1x8xf32> to vector<8x8xf32>
    %299 = arith.addf %295, %298 : vector<8x8xf32>
    %300 = arith.truncf %281 : vector<8x8xf32> to vector<8x8xbf16>
    %301 = arith.truncf %290 : vector<8x8xf32> to vector<8x8xbf16>
    %cst_194 = arith.constant dense<0.000000e+00> : vector<8x8xf32>
    %302 = tpu.matmul %300, %301, %cst_194 {dimension_numbers = #tpu.dot_dimension_numbers<[1], [1], [0], [0], [0, 0, 1, 0], [], []>} : vector<8x8xbf16>, vector<8x8xbf16>, vector<8x8xf32> -> vector<8x8xf32>
    %cst_195 = arith.constant 0.353553385 : f32
    %303 = vector.broadcast %cst_195 : f32 to vector<8x8xf32>
    %304 = arith.mulf %302, %303 : vector<8x8xf32>
    %cst_196 = arith.constant dense<0xFF800000> : vector<8xf32>
    %305 = vector.multi_reduction <maximumf>, %304, %cst_196 [1] : vector<8x8xf32> to vector<8xf32>
    %306 = vector.shape_cast %305 : vector<8xf32> to vector<8x1xf32>
    %307 = vector.broadcast %306 : vector<8x1xf32> to vector<8x8xf32>
    %308 = arith.subf %304, %307 : vector<8x8xf32>
    %309 = math.exp %308 : vector<8x8xf32>
    %cst_197 = arith.constant dense<0.000000e+00> : vector<8xf32>
    %310 = vector.multi_reduction <add>, %309, %cst_197 [1] : vector<8x8xf32> to vector<8xf32>
    %311 = vector.shape_cast %310 : vector<8xf32> to vector<8x1xf32>
    %312 = tpu.reciprocal %311 {approx = true} : vector<8x1xf32> -> vector<8x1xf32>
    %313 = vector.broadcast %312 : vector<8x1xf32> to vector<8x8xf32>
    %314 = arith.mulf %309, %313 : vector<8x8xf32>
    %315 = arith.truncf %314 : vector<8x8xf32> to vector<8x8xbf16>
    %316 = arith.truncf %299 : vector<8x8xf32> to vector<8x8xbf16>
    %cst_198 = arith.constant dense<0.000000e+00> : vector<8x8xf32>
    %317 = tpu.matmul %315, %316, %cst_198 {dimension_numbers = #tpu.dot_dimension_numbers<[1], [0], [0], [1], [0, 0, 1, 1], [], []>} : vector<8x8xbf16>, vector<8x8xbf16>, vector<8x8xf32> -> vector<8x8xf32>
    %c1_199 = arith.constant 1 : index
    %c1_200 = arith.constant 1 : index
    %c0_201 = arith.constant 0 : index
    %c0_202 = arith.constant 0 : index
    %318 = vector.load %arg4[%c1_199, %c1_200, %c0_201, %c0_202] : memref<2x12x32x8xf32, #tpu.memory_space<vmem>>, vector<1x1x32x8xf32>
    %319 = vector.shape_cast %318 : vector<1x1x32x8xf32> to vector<32x8xf32>
    %320 = arith.truncf %272 : vector<8x32xf32> to vector<8x32xbf16>
    %321 = arith.truncf %319 : vector<32x8xf32> to vector<32x8xbf16>
    %cst_203 = arith.constant dense<0.000000e+00> : vector<8x8xf32>
    %322 = tpu.matmul %320, %321, %cst_203 {dimension_numbers = #tpu.dot_dimension_numbers<[1], [0], [0], [1], [0, 0, 1, 1], [], []>} : vector<8x32xbf16>, vector<32x8xbf16>, vector<8x8xf32> -> vector<8x8xf32>
    %c1_204 = arith.constant 1 : index
    %c1_205 = arith.constant 1 : index
    %c0_206 = arith.constant 0 : index
    %c0_207 = arith.constant 0 : index
    %323 = vector.load %arg5[%c1_204, %c1_205, %c0_206, %c0_207] : memref<2x12x1x8xf32, #tpu.memory_space<vmem>>, vector<1x1x1x8xf32>
    %324 = vector.shape_cast %323 : vector<1x1x1x8xf32> to vector<1x8xf32>
    %325 = vector.broadcast %324 : vector<1x8xf32> to vector<8x8xf32>
    %326 = arith.addf %322, %325 : vector<8x8xf32>
    %c1_208 = arith.constant 1 : index
    %c5_209 = arith.constant 5 : index
    %c0_210 = arith.constant 0 : index
    %c0_211 = arith.constant 0 : index
    %327 = vector.load %arg4[%c1_208, %c5_209, %c0_210, %c0_211] : memref<2x12x32x8xf32, #tpu.memory_space<vmem>>, vector<1x1x32x8xf32>
    %328 = vector.shape_cast %327 : vector<1x1x32x8xf32> to vector<32x8xf32>
    %329 = arith.truncf %272 : vector<8x32xf32> to vector<8x32xbf16>
    %330 = arith.truncf %328 : vector<32x8xf32> to vector<32x8xbf16>
    %cst_212 = arith.constant dense<0.000000e+00> : vector<8x8xf32>
    %331 = tpu.matmul %329, %330, %cst_212 {dimension_numbers = #tpu.dot_dimension_numbers<[1], [0], [0], [1], [0, 0, 1, 1], [], []>} : vector<8x32xbf16>, vector<32x8xbf16>, vector<8x8xf32> -> vector<8x8xf32>
    %c1_213 = arith.constant 1 : index
    %c5_214 = arith.constant 5 : index
    %c0_215 = arith.constant 0 : index
    %c0_216 = arith.constant 0 : index
    %332 = vector.load %arg5[%c1_213, %c5_214, %c0_215, %c0_216] : memref<2x12x1x8xf32, #tpu.memory_space<vmem>>, vector<1x1x1x8xf32>
    %333 = vector.shape_cast %332 : vector<1x1x1x8xf32> to vector<1x8xf32>
    %334 = vector.broadcast %333 : vector<1x8xf32> to vector<8x8xf32>
    %335 = arith.addf %331, %334 : vector<8x8xf32>
    %c1_217 = arith.constant 1 : index
    %c9_218 = arith.constant 9 : index
    %c0_219 = arith.constant 0 : index
    %c0_220 = arith.constant 0 : index
    %336 = vector.load %arg4[%c1_217, %c9_218, %c0_219, %c0_220] : memref<2x12x32x8xf32, #tpu.memory_space<vmem>>, vector<1x1x32x8xf32>
    %337 = vector.shape_cast %336 : vector<1x1x32x8xf32> to vector<32x8xf32>
    %338 = arith.truncf %272 : vector<8x32xf32> to vector<8x32xbf16>
    %339 = arith.truncf %337 : vector<32x8xf32> to vector<32x8xbf16>
    %cst_221 = arith.constant dense<0.000000e+00> : vector<8x8xf32>
    %340 = tpu.matmul %338, %339, %cst_221 {dimension_numbers = #tpu.dot_dimension_numbers<[1], [0], [0], [1], [0, 0, 1, 1], [], []>} : vector<8x32xbf16>, vector<32x8xbf16>, vector<8x8xf32> -> vector<8x8xf32>
    %c1_222 = arith.constant 1 : index
    %c9_223 = arith.constant 9 : index
    %c0_224 = arith.constant 0 : index
    %c0_225 = arith.constant 0 : index
    %341 = vector.load %arg5[%c1_222, %c9_223, %c0_224, %c0_225] : memref<2x12x1x8xf32, #tpu.memory_space<vmem>>, vector<1x1x1x8xf32>
    %342 = vector.shape_cast %341 : vector<1x1x1x8xf32> to vector<1x8xf32>
    %343 = vector.broadcast %342 : vector<1x8xf32> to vector<8x8xf32>
    %344 = arith.addf %340, %343 : vector<8x8xf32>
    %345 = arith.truncf %326 : vector<8x8xf32> to vector<8x8xbf16>
    %346 = arith.truncf %335 : vector<8x8xf32> to vector<8x8xbf16>
    %cst_226 = arith.constant dense<0.000000e+00> : vector<8x8xf32>
    %347 = tpu.matmul %345, %346, %cst_226 {dimension_numbers = #tpu.dot_dimension_numbers<[1], [1], [0], [0], [0, 0, 1, 0], [], []>} : vector<8x8xbf16>, vector<8x8xbf16>, vector<8x8xf32> -> vector<8x8xf32>
    %cst_227 = arith.constant 0.353553385 : f32
    %348 = vector.broadcast %cst_227 : f32 to vector<8x8xf32>
    %349 = arith.mulf %347, %348 : vector<8x8xf32>
    %cst_228 = arith.constant dense<0xFF800000> : vector<8xf32>
    %350 = vector.multi_reduction <maximumf>, %349, %cst_228 [1] : vector<8x8xf32> to vector<8xf32>
    %351 = vector.shape_cast %350 : vector<8xf32> to vector<8x1xf32>
    %352 = vector.broadcast %351 : vector<8x1xf32> to vector<8x8xf32>
    %353 = arith.subf %349, %352 : vector<8x8xf32>
    %354 = math.exp %353 : vector<8x8xf32>
    %cst_229 = arith.constant dense<0.000000e+00> : vector<8xf32>
    %355 = vector.multi_reduction <add>, %354, %cst_229 [1] : vector<8x8xf32> to vector<8xf32>
    %356 = vector.shape_cast %355 : vector<8xf32> to vector<8x1xf32>
    %357 = tpu.reciprocal %356 {approx = true} : vector<8x1xf32> -> vector<8x1xf32>
    %358 = vector.broadcast %357 : vector<8x1xf32> to vector<8x8xf32>
    %359 = arith.mulf %354, %358 : vector<8x8xf32>
    %360 = arith.truncf %359 : vector<8x8xf32> to vector<8x8xbf16>
    %361 = arith.truncf %344 : vector<8x8xf32> to vector<8x8xbf16>
    %cst_230 = arith.constant dense<0.000000e+00> : vector<8x8xf32>
    %362 = tpu.matmul %360, %361, %cst_230 {dimension_numbers = #tpu.dot_dimension_numbers<[1], [0], [0], [1], [0, 0, 1, 1], [], []>} : vector<8x8xbf16>, vector<8x8xbf16>, vector<8x8xf32> -> vector<8x8xf32>
    %c1_231 = arith.constant 1 : index
    %c2_232 = arith.constant 2 : index
    %c0_233 = arith.constant 0 : index
    %c0_234 = arith.constant 0 : index
    %363 = vector.load %arg4[%c1_231, %c2_232, %c0_233, %c0_234] : memref<2x12x32x8xf32, #tpu.memory_space<vmem>>, vector<1x1x32x8xf32>
    %364 = vector.shape_cast %363 : vector<1x1x32x8xf32> to vector<32x8xf32>
    %365 = arith.truncf %272 : vector<8x32xf32> to vector<8x32xbf16>
    %366 = arith.truncf %364 : vector<32x8xf32> to vector<32x8xbf16>
    %cst_235 = arith.constant dense<0.000000e+00> : vector<8x8xf32>
    %367 = tpu.matmul %365, %366, %cst_235 {dimension_numbers = #tpu.dot_dimension_numbers<[1], [0], [0], [1], [0, 0, 1, 1], [], []>} : vector<8x32xbf16>, vector<32x8xbf16>, vector<8x8xf32> -> vector<8x8xf32>
    %c1_236 = arith.constant 1 : index
    %c2_237 = arith.constant 2 : index
    %c0_238 = arith.constant 0 : index
    %c0_239 = arith.constant 0 : index
    %368 = vector.load %arg5[%c1_236, %c2_237, %c0_238, %c0_239] : memref<2x12x1x8xf32, #tpu.memory_space<vmem>>, vector<1x1x1x8xf32>
    %369 = vector.shape_cast %368 : vector<1x1x1x8xf32> to vector<1x8xf32>
    %370 = vector.broadcast %369 : vector<1x8xf32> to vector<8x8xf32>
    %371 = arith.addf %367, %370 : vector<8x8xf32>
    %c1_240 = arith.constant 1 : index
    %c6_241 = arith.constant 6 : index
    %c0_242 = arith.constant 0 : index
    %c0_243 = arith.constant 0 : index
    %372 = vector.load %arg4[%c1_240, %c6_241, %c0_242, %c0_243] : memref<2x12x32x8xf32, #tpu.memory_space<vmem>>, vector<1x1x32x8xf32>
    %373 = vector.shape_cast %372 : vector<1x1x32x8xf32> to vector<32x8xf32>
    %374 = arith.truncf %272 : vector<8x32xf32> to vector<8x32xbf16>
    %375 = arith.truncf %373 : vector<32x8xf32> to vector<32x8xbf16>
    %cst_244 = arith.constant dense<0.000000e+00> : vector<8x8xf32>
    %376 = tpu.matmul %374, %375, %cst_244 {dimension_numbers = #tpu.dot_dimension_numbers<[1], [0], [0], [1], [0, 0, 1, 1], [], []>} : vector<8x32xbf16>, vector<32x8xbf16>, vector<8x8xf32> -> vector<8x8xf32>
    %c1_245 = arith.constant 1 : index
    %c6_246 = arith.constant 6 : index
    %c0_247 = arith.constant 0 : index
    %c0_248 = arith.constant 0 : index
    %377 = vector.load %arg5[%c1_245, %c6_246, %c0_247, %c0_248] : memref<2x12x1x8xf32, #tpu.memory_space<vmem>>, vector<1x1x1x8xf32>
    %378 = vector.shape_cast %377 : vector<1x1x1x8xf32> to vector<1x8xf32>
    %379 = vector.broadcast %378 : vector<1x8xf32> to vector<8x8xf32>
    %380 = arith.addf %376, %379 : vector<8x8xf32>
    %c1_249 = arith.constant 1 : index
    %c10_250 = arith.constant 10 : index
    %c0_251 = arith.constant 0 : index
    %c0_252 = arith.constant 0 : index
    %381 = vector.load %arg4[%c1_249, %c10_250, %c0_251, %c0_252] : memref<2x12x32x8xf32, #tpu.memory_space<vmem>>, vector<1x1x32x8xf32>
    %382 = vector.shape_cast %381 : vector<1x1x32x8xf32> to vector<32x8xf32>
    %383 = arith.truncf %272 : vector<8x32xf32> to vector<8x32xbf16>
    %384 = arith.truncf %382 : vector<32x8xf32> to vector<32x8xbf16>
    %cst_253 = arith.constant dense<0.000000e+00> : vector<8x8xf32>
    %385 = tpu.matmul %383, %384, %cst_253 {dimension_numbers = #tpu.dot_dimension_numbers<[1], [0], [0], [1], [0, 0, 1, 1], [], []>} : vector<8x32xbf16>, vector<32x8xbf16>, vector<8x8xf32> -> vector<8x8xf32>
    %c1_254 = arith.constant 1 : index
    %c10_255 = arith.constant 10 : index
    %c0_256 = arith.constant 0 : index
    %c0_257 = arith.constant 0 : index
    %386 = vector.load %arg5[%c1_254, %c10_255, %c0_256, %c0_257] : memref<2x12x1x8xf32, #tpu.memory_space<vmem>>, vector<1x1x1x8xf32>
    %387 = vector.shape_cast %386 : vector<1x1x1x8xf32> to vector<1x8xf32>
    %388 = vector.broadcast %387 : vector<1x8xf32> to vector<8x8xf32>
    %389 = arith.addf %385, %388 : vector<8x8xf32>
    %390 = arith.truncf %371 : vector<8x8xf32> to vector<8x8xbf16>
    %391 = arith.truncf %380 : vector<8x8xf32> to vector<8x8xbf16>
    %cst_258 = arith.constant dense<0.000000e+00> : vector<8x8xf32>
    %392 = tpu.matmul %390, %391, %cst_258 {dimension_numbers = #tpu.dot_dimension_numbers<[1], [1], [0], [0], [0, 0, 1, 0], [], []>} : vector<8x8xbf16>, vector<8x8xbf16>, vector<8x8xf32> -> vector<8x8xf32>
    %cst_259 = arith.constant 0.353553385 : f32
    %393 = vector.broadcast %cst_259 : f32 to vector<8x8xf32>
    %394 = arith.mulf %392, %393 : vector<8x8xf32>
    %cst_260 = arith.constant dense<0xFF800000> : vector<8xf32>
    %395 = vector.multi_reduction <maximumf>, %394, %cst_260 [1] : vector<8x8xf32> to vector<8xf32>
    %396 = vector.shape_cast %395 : vector<8xf32> to vector<8x1xf32>
    %397 = vector.broadcast %396 : vector<8x1xf32> to vector<8x8xf32>
    %398 = arith.subf %394, %397 : vector<8x8xf32>
    %399 = math.exp %398 : vector<8x8xf32>
    %cst_261 = arith.constant dense<0.000000e+00> : vector<8xf32>
    %400 = vector.multi_reduction <add>, %399, %cst_261 [1] : vector<8x8xf32> to vector<8xf32>
    %401 = vector.shape_cast %400 : vector<8xf32> to vector<8x1xf32>
    %402 = tpu.reciprocal %401 {approx = true} : vector<8x1xf32> -> vector<8x1xf32>
    %403 = vector.broadcast %402 : vector<8x1xf32> to vector<8x8xf32>
    %404 = arith.mulf %399, %403 : vector<8x8xf32>
    %405 = arith.truncf %404 : vector<8x8xf32> to vector<8x8xbf16>
    %406 = arith.truncf %389 : vector<8x8xf32> to vector<8x8xbf16>
    %cst_262 = arith.constant dense<0.000000e+00> : vector<8x8xf32>
    %407 = tpu.matmul %405, %406, %cst_262 {dimension_numbers = #tpu.dot_dimension_numbers<[1], [0], [0], [1], [0, 0, 1, 1], [], []>} : vector<8x8xbf16>, vector<8x8xbf16>, vector<8x8xf32> -> vector<8x8xf32>
    %c1_263 = arith.constant 1 : index
    %c3_264 = arith.constant 3 : index
    %c0_265 = arith.constant 0 : index
    %c0_266 = arith.constant 0 : index
    %408 = vector.load %arg4[%c1_263, %c3_264, %c0_265, %c0_266] : memref<2x12x32x8xf32, #tpu.memory_space<vmem>>, vector<1x1x32x8xf32>
    %409 = vector.shape_cast %408 : vector<1x1x32x8xf32> to vector<32x8xf32>
    %410 = arith.truncf %272 : vector<8x32xf32> to vector<8x32xbf16>
    %411 = arith.truncf %409 : vector<32x8xf32> to vector<32x8xbf16>
    %cst_267 = arith.constant dense<0.000000e+00> : vector<8x8xf32>
    %412 = tpu.matmul %410, %411, %cst_267 {dimension_numbers = #tpu.dot_dimension_numbers<[1], [0], [0], [1], [0, 0, 1, 1], [], []>} : vector<8x32xbf16>, vector<32x8xbf16>, vector<8x8xf32> -> vector<8x8xf32>
    %c1_268 = arith.constant 1 : index
    %c3_269 = arith.constant 3 : index
    %c0_270 = arith.constant 0 : index
    %c0_271 = arith.constant 0 : index
    %413 = vector.load %arg5[%c1_268, %c3_269, %c0_270, %c0_271] : memref<2x12x1x8xf32, #tpu.memory_space<vmem>>, vector<1x1x1x8xf32>
    %414 = vector.shape_cast %413 : vector<1x1x1x8xf32> to vector<1x8xf32>
    %415 = vector.broadcast %414 : vector<1x8xf32> to vector<8x8xf32>
    %416 = arith.addf %412, %415 : vector<8x8xf32>
    %c1_272 = arith.constant 1 : index
    %c7_273 = arith.constant 7 : index
    %c0_274 = arith.constant 0 : index
    %c0_275 = arith.constant 0 : index
    %417 = vector.load %arg4[%c1_272, %c7_273, %c0_274, %c0_275] : memref<2x12x32x8xf32, #tpu.memory_space<vmem>>, vector<1x1x32x8xf32>
    %418 = vector.shape_cast %417 : vector<1x1x32x8xf32> to vector<32x8xf32>
    %419 = arith.truncf %272 : vector<8x32xf32> to vector<8x32xbf16>
    %420 = arith.truncf %418 : vector<32x8xf32> to vector<32x8xbf16>
    %cst_276 = arith.constant dense<0.000000e+00> : vector<8x8xf32>
    %421 = tpu.matmul %419, %420, %cst_276 {dimension_numbers = #tpu.dot_dimension_numbers<[1], [0], [0], [1], [0, 0, 1, 1], [], []>} : vector<8x32xbf16>, vector<32x8xbf16>, vector<8x8xf32> -> vector<8x8xf32>
    %c1_277 = arith.constant 1 : index
    %c7_278 = arith.constant 7 : index
    %c0_279 = arith.constant 0 : index
    %c0_280 = arith.constant 0 : index
    %422 = vector.load %arg5[%c1_277, %c7_278, %c0_279, %c0_280] : memref<2x12x1x8xf32, #tpu.memory_space<vmem>>, vector<1x1x1x8xf32>
    %423 = vector.shape_cast %422 : vector<1x1x1x8xf32> to vector<1x8xf32>
    %424 = vector.broadcast %423 : vector<1x8xf32> to vector<8x8xf32>
    %425 = arith.addf %421, %424 : vector<8x8xf32>
    %c1_281 = arith.constant 1 : index
    %c11_282 = arith.constant 11 : index
    %c0_283 = arith.constant 0 : index
    %c0_284 = arith.constant 0 : index
    %426 = vector.load %arg4[%c1_281, %c11_282, %c0_283, %c0_284] : memref<2x12x32x8xf32, #tpu.memory_space<vmem>>, vector<1x1x32x8xf32>
    %427 = vector.shape_cast %426 : vector<1x1x32x8xf32> to vector<32x8xf32>
    %428 = arith.truncf %272 : vector<8x32xf32> to vector<8x32xbf16>
    %429 = arith.truncf %427 : vector<32x8xf32> to vector<32x8xbf16>
    %cst_285 = arith.constant dense<0.000000e+00> : vector<8x8xf32>
    %430 = tpu.matmul %428, %429, %cst_285 {dimension_numbers = #tpu.dot_dimension_numbers<[1], [0], [0], [1], [0, 0, 1, 1], [], []>} : vector<8x32xbf16>, vector<32x8xbf16>, vector<8x8xf32> -> vector<8x8xf32>
    %c1_286 = arith.constant 1 : index
    %c11_287 = arith.constant 11 : index
    %c0_288 = arith.constant 0 : index
    %c0_289 = arith.constant 0 : index
    %431 = vector.load %arg5[%c1_286, %c11_287, %c0_288, %c0_289] : memref<2x12x1x8xf32, #tpu.memory_space<vmem>>, vector<1x1x1x8xf32>
    %432 = vector.shape_cast %431 : vector<1x1x1x8xf32> to vector<1x8xf32>
    %433 = vector.broadcast %432 : vector<1x8xf32> to vector<8x8xf32>
    %434 = arith.addf %430, %433 : vector<8x8xf32>
    %435 = arith.truncf %416 : vector<8x8xf32> to vector<8x8xbf16>
    %436 = arith.truncf %425 : vector<8x8xf32> to vector<8x8xbf16>
    %cst_290 = arith.constant dense<0.000000e+00> : vector<8x8xf32>
    %437 = tpu.matmul %435, %436, %cst_290 {dimension_numbers = #tpu.dot_dimension_numbers<[1], [1], [0], [0], [0, 0, 1, 0], [], []>} : vector<8x8xbf16>, vector<8x8xbf16>, vector<8x8xf32> -> vector<8x8xf32>
    %cst_291 = arith.constant 0.353553385 : f32
    %438 = vector.broadcast %cst_291 : f32 to vector<8x8xf32>
    %439 = arith.mulf %437, %438 : vector<8x8xf32>
    %cst_292 = arith.constant dense<0xFF800000> : vector<8xf32>
    %440 = vector.multi_reduction <maximumf>, %439, %cst_292 [1] : vector<8x8xf32> to vector<8xf32>
    %441 = vector.shape_cast %440 : vector<8xf32> to vector<8x1xf32>
    %442 = vector.broadcast %441 : vector<8x1xf32> to vector<8x8xf32>
    %443 = arith.subf %439, %442 : vector<8x8xf32>
    %444 = math.exp %443 : vector<8x8xf32>
    %cst_293 = arith.constant dense<0.000000e+00> : vector<8xf32>
    %445 = vector.multi_reduction <add>, %444, %cst_293 [1] : vector<8x8xf32> to vector<8xf32>
    %446 = vector.shape_cast %445 : vector<8xf32> to vector<8x1xf32>
    %447 = tpu.reciprocal %446 {approx = true} : vector<8x1xf32> -> vector<8x1xf32>
    %448 = vector.broadcast %447 : vector<8x1xf32> to vector<8x8xf32>
    %449 = arith.mulf %444, %448 : vector<8x8xf32>
    %450 = arith.truncf %449 : vector<8x8xf32> to vector<8x8xbf16>
    %451 = arith.truncf %434 : vector<8x8xf32> to vector<8x8xbf16>
    %cst_294 = arith.constant dense<0.000000e+00> : vector<8x8xf32>
    %452 = tpu.matmul %450, %451, %cst_294 {dimension_numbers = #tpu.dot_dimension_numbers<[1], [0], [0], [1], [0, 0, 1, 1], [], []>} : vector<8x8xbf16>, vector<8x8xbf16>, vector<8x8xf32> -> vector<8x8xf32>
    %453 = tpu.concatenate %317, %362, %407, %452 in 1 : vector<8x8xf32>, vector<8x8xf32>, vector<8x8xf32>, vector<8x8xf32> -> vector<8x32xf32>
    %c1_295 = arith.constant 1 : index
    %c0_296 = arith.constant 0 : index
    %c0_297 = arith.constant 0 : index
    %454 = vector.load %arg6[%c1_295, %c0_296, %c0_297] : memref<2x32x32xf32, #tpu.memory_space<vmem>>, vector<1x32x32xf32>
    %455 = vector.shape_cast %454 : vector<1x32x32xf32> to vector<32x32xf32>
    %456 = arith.truncf %453 : vector<8x32xf32> to vector<8x32xbf16>
    %457 = arith.truncf %455 : vector<32x32xf32> to vector<32x32xbf16>
    %cst_298 = arith.constant dense<0.000000e+00> : vector<8x32xf32>
    %458 = tpu.matmul %456, %457, %cst_298 {dimension_numbers = #tpu.dot_dimension_numbers<[1], [0], [0], [1], [0, 0, 1, 1], [], []>} : vector<8x32xbf16>, vector<32x32xbf16>, vector<8x32xf32> -> vector<8x32xf32>
    %c1_299 = arith.constant 1 : index
    %c0_300 = arith.constant 0 : index
    %c0_301 = arith.constant 0 : index
    %459 = vector.load %arg7[%c1_299, %c0_300, %c0_301] : memref<2x1x32xf32, #tpu.memory_space<vmem>>, vector<1x1x32xf32>
    %460 = vector.shape_cast %459 : vector<1x1x32xf32> to vector<1x32xf32>
    %461 = vector.broadcast %460 : vector<1x32xf32> to vector<8x32xf32>
    %462 = arith.addf %458, %461 : vector<8x32xf32>
    %463 = arith.addf %272, %462 : vector<8x32xf32>
    %c1_302 = arith.constant 1 : index
    %c0_303 = arith.constant 0 : index
    %c0_304 = arith.constant 0 : index
    %464 = vector.load %arg8[%c1_302, %c0_303, %c0_304] : memref<2x1x32xf32, #tpu.memory_space<vmem>>, vector<1x1x32xf32>
    %465 = vector.shape_cast %464 : vector<1x1x32xf32> to vector<1x32xf32>
    %c1_305 = arith.constant 1 : index
    %c0_306 = arith.constant 0 : index
    %c0_307 = arith.constant 0 : index
    %466 = vector.load %arg9[%c1_305, %c0_306, %c0_307] : memref<2x1x32xf32, #tpu.memory_space<vmem>>, vector<1x1x32xf32>
    %467 = vector.shape_cast %466 : vector<1x1x32xf32> to vector<1x32xf32>
    %cst_308 = arith.constant dense<0.000000e+00> : vector<8xf32>
    %468 = vector.multi_reduction <add>, %463, %cst_308 [1] : vector<8x32xf32> to vector<8xf32>
    %469 = vector.shape_cast %468 : vector<8xf32> to vector<8x1xf32>
    %cst_309 = arith.constant 3.200000e+01 : f32
    %470 = vector.broadcast %cst_309 : f32 to vector<8x1xf32>
    %471 = arith.divf %469, %470 : vector<8x1xf32>
    %472 = vector.broadcast %471 : vector<8x1xf32> to vector<8x32xf32>
    %473 = arith.subf %463, %472 : vector<8x32xf32>
    %474 = arith.mulf %473, %473 : vector<8x32xf32>
    %cst_310 = arith.constant dense<0.000000e+00> : vector<8xf32>
    %475 = vector.multi_reduction <add>, %474, %cst_310 [1] : vector<8x32xf32> to vector<8xf32>
    %476 = vector.shape_cast %475 : vector<8xf32> to vector<8x1xf32>
    %cst_311 = arith.constant 3.200000e+01 : f32
    %477 = vector.broadcast %cst_311 : f32 to vector<8x1xf32>
    %478 = arith.divf %476, %477 : vector<8x1xf32>
    %479 = vector.broadcast %471 : vector<8x1xf32> to vector<8x32xf32>
    %480 = arith.subf %463, %479 : vector<8x32xf32>
    %cst_312 = arith.constant 9.99999974E-6 : f32
    %481 = vector.broadcast %cst_312 : f32 to vector<8x1xf32>
    %482 = arith.addf %478, %481 : vector<8x1xf32>
    %483 = math.rsqrt %482 : vector<8x1xf32>
    %484 = vector.broadcast %483 : vector<8x1xf32> to vector<8x32xf32>
    %485 = arith.mulf %480, %484 : vector<8x32xf32>
    %486 = vector.broadcast %465 : vector<1x32xf32> to vector<8x32xf32>
    %487 = arith.mulf %485, %486 : vector<8x32xf32>
    %488 = vector.broadcast %467 : vector<1x32xf32> to vector<8x32xf32>
    %489 = arith.addf %487, %488 : vector<8x32xf32>
    %c1_313 = arith.constant 1 : index
    %c0_314 = arith.constant 0 : index
    %c0_315 = arith.constant 0 : index
    %490 = vector.load %arg10[%c1_313, %c0_314, %c0_315] : memref<2x32x32xf32, #tpu.memory_space<vmem>>, vector<1x32x32xf32>
    %491 = vector.shape_cast %490 : vector<1x32x32xf32> to vector<32x32xf32>
    %492 = arith.truncf %489 : vector<8x32xf32> to vector<8x32xbf16>
    %493 = arith.truncf %491 : vector<32x32xf32> to vector<32x32xbf16>
    %cst_316 = arith.constant dense<0.000000e+00> : vector<8x32xf32>
    %494 = tpu.matmul %492, %493, %cst_316 {dimension_numbers = #tpu.dot_dimension_numbers<[1], [0], [0], [1], [0, 0, 1, 1], [], []>} : vector<8x32xbf16>, vector<32x32xbf16>, vector<8x32xf32> -> vector<8x32xf32>
    %c1_317 = arith.constant 1 : index
    %c0_318 = arith.constant 0 : index
    %c0_319 = arith.constant 0 : index
    %495 = vector.load %arg11[%c1_317, %c0_318, %c0_319] : memref<2x1x32xf32, #tpu.memory_space<vmem>>, vector<1x1x32xf32>
    %496 = vector.shape_cast %495 : vector<1x1x32xf32> to vector<1x32xf32>
    %497 = vector.broadcast %496 : vector<1x32xf32> to vector<8x32xf32>
    %498 = arith.addf %494, %497 : vector<8x32xf32>
    %cst_320 = arith.constant 0.000000e+00 : f32
    %499 = vector.broadcast %cst_320 : f32 to vector<8x32xf32>
    %500 = arith.maximumf %498, %499 : vector<8x32xf32>
    %c1_321 = arith.constant 1 : index
    %c0_322 = arith.constant 0 : index
    %c0_323 = arith.constant 0 : index
    %501 = vector.load %arg12[%c1_321, %c0_322, %c0_323] : memref<2x32x32xf32, #tpu.memory_space<vmem>>, vector<1x32x32xf32>
    %502 = vector.shape_cast %501 : vector<1x32x32xf32> to vector<32x32xf32>
    %503 = arith.truncf %500 : vector<8x32xf32> to vector<8x32xbf16>
    %504 = arith.truncf %502 : vector<32x32xf32> to vector<32x32xbf16>
    %cst_324 = arith.constant dense<0.000000e+00> : vector<8x32xf32>
    %505 = tpu.matmul %503, %504, %cst_324 {dimension_numbers = #tpu.dot_dimension_numbers<[1], [0], [0], [1], [0, 0, 1, 1], [], []>} : vector<8x32xbf16>, vector<32x32xbf16>, vector<8x32xf32> -> vector<8x32xf32>
    %c1_325 = arith.constant 1 : index
    %c0_326 = arith.constant 0 : index
    %c0_327 = arith.constant 0 : index
    %506 = vector.load %arg13[%c1_325, %c0_326, %c0_327] : memref<2x1x32xf32, #tpu.memory_space<vmem>>, vector<1x1x32xf32>
    %507 = vector.shape_cast %506 : vector<1x1x32xf32> to vector<1x32xf32>
    %508 = vector.broadcast %507 : vector<1x32xf32> to vector<8x32xf32>
    %509 = arith.addf %505, %508 : vector<8x32xf32>
    %510 = arith.addf %489, %509 : vector<8x32xf32>
    %c1_328 = arith.constant 1 : index
    %c0_329 = arith.constant 0 : index
    %c0_330 = arith.constant 0 : index
    %511 = vector.load %arg14[%c1_328, %c0_329, %c0_330] : memref<2x1x32xf32, #tpu.memory_space<vmem>>, vector<1x1x32xf32>
    %512 = vector.shape_cast %511 : vector<1x1x32xf32> to vector<1x32xf32>
    %c1_331 = arith.constant 1 : index
    %c0_332 = arith.constant 0 : index
    %c0_333 = arith.constant 0 : index
    %513 = vector.load %arg15[%c1_331, %c0_332, %c0_333] : memref<2x1x32xf32, #tpu.memory_space<vmem>>, vector<1x1x32xf32>
    %514 = vector.shape_cast %513 : vector<1x1x32xf32> to vector<1x32xf32>
    %cst_334 = arith.constant dense<0.000000e+00> : vector<8xf32>
    %515 = vector.multi_reduction <add>, %510, %cst_334 [1] : vector<8x32xf32> to vector<8xf32>
    %516 = vector.shape_cast %515 : vector<8xf32> to vector<8x1xf32>
    %cst_335 = arith.constant 3.200000e+01 : f32
    %517 = vector.broadcast %cst_335 : f32 to vector<8x1xf32>
    %518 = arith.divf %516, %517 : vector<8x1xf32>
    %519 = vector.broadcast %518 : vector<8x1xf32> to vector<8x32xf32>
    %520 = arith.subf %510, %519 : vector<8x32xf32>
    %521 = arith.mulf %520, %520 : vector<8x32xf32>
    %cst_336 = arith.constant dense<0.000000e+00> : vector<8xf32>
    %522 = vector.multi_reduction <add>, %521, %cst_336 [1] : vector<8x32xf32> to vector<8xf32>
    %523 = vector.shape_cast %522 : vector<8xf32> to vector<8x1xf32>
    %cst_337 = arith.constant 3.200000e+01 : f32
    %524 = vector.broadcast %cst_337 : f32 to vector<8x1xf32>
    %525 = arith.divf %523, %524 : vector<8x1xf32>
    %526 = vector.broadcast %518 : vector<8x1xf32> to vector<8x32xf32>
    %527 = arith.subf %510, %526 : vector<8x32xf32>
    %cst_338 = arith.constant 9.99999974E-6 : f32
    %528 = vector.broadcast %cst_338 : f32 to vector<8x1xf32>
    %529 = arith.addf %525, %528 : vector<8x1xf32>
    %530 = math.rsqrt %529 : vector<8x1xf32>
    %531 = vector.broadcast %530 : vector<8x1xf32> to vector<8x32xf32>
    %532 = arith.mulf %527, %531 : vector<8x32xf32>
    %533 = vector.broadcast %512 : vector<1x32xf32> to vector<8x32xf32>
    %534 = arith.mulf %532, %533 : vector<8x32xf32>
    %535 = vector.broadcast %514 : vector<1x32xf32> to vector<8x32xf32>
    %536 = arith.addf %534, %535 : vector<8x32xf32>
    %537 = vector.extract_strided_slice %536 {offsets = [0, 0], sizes = [1, 32], strides = [1, 1]} : vector<8x32xf32> to vector<1x32xf32>
    %c0_339 = arith.constant 0 : index
    %c0_340 = arith.constant 0 : index
    %538 = vector.load %arg16[%c0_339, %c0_340] : memref<1x32xf32, #tpu.memory_space<vmem>>, vector<1x32xf32>
    %c0_341 = arith.constant 0 : index
    %c0_342 = arith.constant 0 : index
    %539 = vector.load %arg17[%c0_341, %c0_342] : memref<1x32xf32, #tpu.memory_space<vmem>>, vector<1x32xf32>
    %cst_343 = arith.constant dense<0.000000e+00> : vector<1xf32>
    %540 = vector.multi_reduction <add>, %537, %cst_343 [1] : vector<1x32xf32> to vector<1xf32>
    %541 = vector.shape_cast %540 : vector<1xf32> to vector<1x1xf32>
    %cst_344 = arith.constant 3.200000e+01 : f32
    %542 = vector.broadcast %cst_344 : f32 to vector<1x1xf32>
    %543 = arith.divf %541, %542 : vector<1x1xf32>
    %544 = vector.broadcast %543 : vector<1x1xf32> to vector<1x32xf32>
    %545 = arith.subf %537, %544 : vector<1x32xf32>
    %546 = arith.mulf %545, %545 : vector<1x32xf32>
    %cst_345 = arith.constant dense<0.000000e+00> : vector<1xf32>
    %547 = vector.multi_reduction <add>, %546, %cst_345 [1] : vector<1x32xf32> to vector<1xf32>
    %548 = vector.shape_cast %547 : vector<1xf32> to vector<1x1xf32>
    %cst_346 = arith.constant 3.200000e+01 : f32
    %549 = vector.broadcast %cst_346 : f32 to vector<1x1xf32>
    %550 = arith.divf %548, %549 : vector<1x1xf32>
    %551 = vector.broadcast %543 : vector<1x1xf32> to vector<1x32xf32>
    %552 = arith.subf %537, %551 : vector<1x32xf32>
    %cst_347 = arith.constant 9.99999974E-6 : f32
    %553 = vector.broadcast %cst_347 : f32 to vector<1x1xf32>
    %554 = arith.addf %550, %553 : vector<1x1xf32>
    %555 = math.rsqrt %554 : vector<1x1xf32>
    %556 = vector.broadcast %555 : vector<1x1xf32> to vector<1x32xf32>
    %557 = arith.mulf %552, %556 : vector<1x32xf32>
    %558 = arith.mulf %557, %538 : vector<1x32xf32>
    %559 = arith.addf %558, %539 : vector<1x32xf32>
    %c0_348 = arith.constant 0 : index
    %c0_349 = arith.constant 0 : index
    %560 = vector.load %arg18[%c0_348, %c0_349] : memref<1x32xf32, #tpu.memory_space<vmem>>, vector<1x32xf32>
    %561 = arith.mulf %559, %560 : vector<1x32xf32>
    %cst_350 = arith.constant dense<0.000000e+00> : vector<1xf32>
    %562 = vector.multi_reduction <add>, %561, %cst_350 [1] : vector<1x32xf32> to vector<1xf32>
    %563 = vector.shape_cast %562 : vector<1xf32> to vector<1x1xf32>
    %c0_351 = arith.constant 0 : index
    %c0_352 = arith.constant 0 : index
    %564 = vector.load %arg19[%c0_351, %c0_352] : memref<1x1xf32, #tpu.memory_space<vmem>>, vector<1x1xf32>
    %565 = arith.addf %563, %564 : vector<1x1xf32>
    %c0_353 = arith.constant 0 : index
    %c0_354 = arith.constant 0 : index
    %c0_355 = arith.constant 0 : index
    %566 = vector.load %arg20[%c0_353, %c0_354, %c0_355] : memref<1x1x1xf32, #tpu.memory_space<vmem>>, vector<1x1x1xf32>
    %567 = vector.shape_cast %566 : vector<1x1x1xf32> to vector<1x1xf32>
    %568 = vector.shape_cast %565 : vector<1x1xf32> to vector<1x1x1xf32>
    tpu.vector_store %arg20[%c0_353, %c0_354, %c0_355], %568 {strides = array<i32>} : memref<1x1x1xf32, #tpu.memory_space<vmem>>, vector<1x1x1xf32>,
    return
  }
  func.func @transform_0(%arg0: i32) -> (i32, i32, i32) {
    %c0_i32 = arith.constant 0 : i32
    %c0_i32_0 = arith.constant 0 : i32
    %c0_i32_1 = arith.constant 0 : i32
    return %arg0, %c0_i32, %c0_i32_0 : i32, i32, i32
  }
  func.func @transform_1(%arg0: i32) -> (i32, i32) {
    %c0_i32 = arith.constant 0 : i32
    %c0_i32_0 = arith.constant 0 : i32
    %c0_i32_1 = arith.constant 0 : i32
    return %c0_i32, %c0_i32_0 : i32, i32
  }
  func.func @transform_2(%arg0: i32) -> (i32, i32) {
    %c0_i32 = arith.constant 0 : i32
    %c0_i32_0 = arith.constant 0 : i32
    %c0_i32_1 = arith.constant 0 : i32
    return %c0_i32, %c0_i32_0 : i32, i32
  }
  func.func @transform_3(%arg0: i32) -> (i32, i32, i32, i32) {
    %c0_i32 = arith.constant 0 : i32
    %c0_i32_0 = arith.constant 0 : i32
    %c0_i32_1 = arith.constant 0 : i32
    %c0_i32_2 = arith.constant 0 : i32
    %c0_i32_3 = arith.constant 0 : i32
    return %c0_i32, %c0_i32_0, %c0_i32_1, %c0_i32_2 : i32, i32, i32, i32
  }
  func.func @transform_4(%arg0: i32) -> (i32, i32, i32, i32) {
    %c0_i32 = arith.constant 0 : i32
    %c0_i32_0 = arith.constant 0 : i32
    %c0_i32_1 = arith.constant 0 : i32
    %c0_i32_2 = arith.constant 0 : i32
    %c0_i32_3 = arith.constant 0 : i32
    return %c0_i32, %c0_i32_0, %c0_i32_1, %c0_i32_2 : i32, i32, i32, i32
  }
  func.func @transform_5(%arg0: i32) -> (i32, i32, i32) {
    %c0_i32 = arith.constant 0 : i32
    %c0_i32_0 = arith.constant 0 : i32
    %c0_i32_1 = arith.constant 0 : i32
    %c0_i32_2 = arith.constant 0 : i32
    return %c0_i32, %c0_i32_0, %c0_i32_1 : i32, i32, i32
  }
  func.func @transform_6(%arg0: i32) -> (i32, i32, i32) {
    %c0_i32 = arith.constant 0 : i32
    %c0_i32_0 = arith.constant 0 : i32
    %c0_i32_1 = arith.constant 0 : i32
    %c0_i32_2 = arith.constant 0 : i32
    return %c0_i32, %c0_i32_0, %c0_i32_1 : i32, i32, i32
  }
  func.func @transform_7(%arg0: i32) -> (i32, i32, i32) {
    %c0_i32 = arith.constant 0 : i32
    %c0_i32_0 = arith.constant 0 : i32
    %c0_i32_1 = arith.constant 0 : i32
    %c0_i32_2 = arith.constant 0 : i32
    return %c0_i32, %c0_i32_0, %c0_i32_1 : i32, i32, i32
  }
  func.func @transform_8(%arg0: i32) -> (i32, i32, i32) {
    %c0_i32 = arith.constant 0 : i32
    %c0_i32_0 = arith.constant 0 : i32
    %c0_i32_1 = arith.constant 0 : i32
    %c0_i32_2 = arith.constant 0 : i32
    return %c0_i32, %c0_i32_0, %c0_i32_1 : i32, i32, i32
  }
  func.func @transform_9(%arg0: i32) -> (i32, i32, i32) {
    %c0_i32 = arith.constant 0 : i32
    %c0_i32_0 = arith.constant 0 : i32
    %c0_i32_1 = arith.constant 0 : i32
    %c0_i32_2 = arith.constant 0 : i32
    return %c0_i32, %c0_i32_0, %c0_i32_1 : i32, i32, i32
  }
  func.func @transform_10(%arg0: i32) -> (i32, i32, i32) {
    %c0_i32 = arith.constant 0 : i32
    %c0_i32_0 = arith.constant 0 : i32
    %c0_i32_1 = arith.constant 0 : i32
    %c0_i32_2 = arith.constant 0 : i32
    return %c0_i32, %c0_i32_0, %c0_i32_1 : i32, i32, i32
  }
  func.func @transform_11(%arg0: i32) -> (i32, i32, i32) {
    %c0_i32 = arith.constant 0 : i32
    %c0_i32_0 = arith.constant 0 : i32
    %c0_i32_1 = arith.constant 0 : i32
    %c0_i32_2 = arith.constant 0 : i32
    return %c0_i32, %c0_i32_0, %c0_i32_1 : i32, i32, i32
  }
  func.func @transform_12(%arg0: i32) -> (i32, i32, i32) {
    %c0_i32 = arith.constant 0 : i32
    %c0_i32_0 = arith.constant 0 : i32
    %c0_i32_1 = arith.constant 0 : i32
    %c0_i32_2 = arith.constant 0 : i32
    return %c0_i32, %c0_i32_0, %c0_i32_1 : i32, i32, i32
  }
  func.func @transform_13(%arg0: i32) -> (i32, i32, i32) {
    %c0_i32 = arith.constant 0 : i32
    %c0_i32_0 = arith.constant 0 : i32
    %c0_i32_1 = arith.constant 0 : i32
    %c0_i32_2 = arith.constant 0 : i32
    return %c0_i32, %c0_i32_0, %c0_i32_1 : i32, i32, i32
  }
  func.func @transform_14(%arg0: i32) -> (i32, i32, i32) {
    %c0_i32 = arith.constant 0 : i32
    %c0_i32_0 = arith.constant 0 : i32
    %c0_i32_1 = arith.constant 0 : i32
    %c0_i32_2 = arith.constant 0 : i32
    return %c0_i32, %c0_i32_0, %c0_i32_1 : i32, i32, i32
  }
  func.func @transform_15(%arg0: i32) -> (i32, i32) {
    %c0_i32 = arith.constant 0 : i32
    %c0_i32_0 = arith.constant 0 : i32
    %c0_i32_1 = arith.constant 0 : i32
    return %c0_i32, %c0_i32_0 : i32, i32
  }
  func.func @transform_16(%arg0: i32) -> (i32, i32) {
    %c0_i32 = arith.constant 0 : i32
    %c0_i32_0 = arith.constant 0 : i32
    %c0_i32_1 = arith.constant 0 : i32
    return %c0_i32, %c0_i32_0 : i32, i32
  }
  func.func @transform_17(%arg0: i32) -> (i32, i32) {
    %c0_i32 = arith.constant 0 : i32
    %c0_i32_0 = arith.constant 0 : i32
    %c0_i32_1 = arith.constant 0 : i32
    return %c0_i32, %c0_i32_0 : i32, i32
  }
  func.func @transform_18(%arg0: i32) -> (i32, i32) {
    %c0_i32 = arith.constant 0 : i32
    %c0_i32_0 = arith.constant 0 : i32
    %c0_i32_1 = arith.constant 0 : i32
    return %c0_i32, %c0_i32_0 : i32, i32
  }
  func.func @transform_19(%arg0: i32) -> (i32, i32, i32) {
    %c0_i32 = arith.constant 0 : i32
    %c0_i32_0 = arith.constant 0 : i32
    %c0_i32_1 = arith.constant 0 : i32
    return %arg0, %c0_i32, %c0_i32_0 : i32, i32, i32
  }
}

</mosaic_0001>

<llo_original>
// kernel: text_classifier_forward.1
$region0: #{text_classifier_forward.1}
  #allocation0 [shape = 'u32[]', space=smem, size = 0x4, offset = 0x4, fixed_abs, tag = 'smem constant byte address 0x4 - core index']
  #allocation1 [shape = 'u32[144,128]{1,0:T(1,128)}', space=vmem, size = 0x12000, scoped, tag = 'internal scratch']
  #allocation2 [shape = 'f32[1,1]{1,0:T(1,128)S(1)}', space=vmem, size = 0x200, scoped, tag = 'scoped memory for text_classifier_forward.1']
  %s0 = inlined_call_operand.vmem [shape: f32[2,8,64], index: 0, kind: input, shape index: {}]
  %s1 = inlined_call_operand.vmem [shape: f32[64,32], index: 1, kind: input, shape index: {}]
  %s2 = inlined_call_operand.vmem [shape: f32[1,32], index: 2, kind: input, shape index: {}]
  %s3 = inlined_call_operand.vmem [shape: f32[2,12,32,8], index: 3, kind: input, shape index: {}]
  %s4 = inlined_call_operand.vmem [shape: f32[2,12,1,8], index: 4, kind: input, shape index: {}]
  %s5 = inlined_call_operand.vmem [shape: f32[2,32,32], index: 5, kind: input, shape index: {}]
  %s6 = inlined_call_operand.vmem [shape: f32[2,1,32], index: 6, kind: input, shape index: {}]
  %s7 = inlined_call_operand.vmem [shape: f32[2,1,32], index: 7, kind: input, shape index: {}]
  %s8 = inlined_call_operand.vmem [shape: f32[2,1,32], index: 8, kind: input, shape index: {}]
  %s9 = inlined_call_operand.vmem [shape: f32[2,32,32], index: 9, kind: input, shape index: {}]
  %s10 = inlined_call_operand.vmem [shape: f32[2,1,32], index: 10, kind: input, shape index: {}]
  %s11 = inlined_call_operand.vmem [shape: f32[2,32,32], index: 11, kind: input, shape index: {}]
  %s12 = inlined_call_operand.vmem [shape: f32[2,1,32], index: 12, kind: input, shape index: {}]
  %s13 = inlined_call_operand.vmem [shape: f32[2,1,32], index: 13, kind: input, shape index: {}]
  %s14 = inlined_call_operand.vmem [shape: f32[2,1,32], index: 14, kind: input, shape index: {}]
  %s15 = inlined_call_operand.vmem [shape: f32[1,32], index: 15, kind: input, shape index: {}]
  %s16 = inlined_call_operand.vmem [shape: f32[1,32], index: 16, kind: input, shape index: {}]
  %s17 = inlined_call_operand.vmem [shape: f32[1,32], index: 17, kind: input, shape index: {}]
  %s18 = inlined_call_operand.<no memory space> [shape: f32[1,1], index: 18, kind: input, shape index: {}]
  %s19 = inlined_call_operand.vmem [shape: f32[2,1,1], index: 19, kind: output, shape index: {}]
  %s20 = sld [smem:[#allocation0]]
  $region109: #{text_classifier_forward.1} parent=0
    _
  %s22 = ssub.s32 1, %s20
  %s23 = scalar_select 0, %s22, %s20
  %v24 = vstv %s18
  %25 = vst [vmem:[#allocation2] sm:$0x1] %v24
  loop: start=0, step=1, limit=4
  $region2: #{text_classifier_forward.1} parent=0 // loop_pre_header
    _
  $region3: #{text_classifier_forward.1} parent=0 // loop_header
    %s27 = sphi 0, %s31
    %p28 = scmp.ge.s32.totalorder %s27, 4
    %s37 = sphi 0, %s39
    %s40 = sphi 0, %s37
    %s41 = sphi 0, %s40
    %s57 = sphi 0, %s41
    %s61 = sphi 0, %s61
    %s63 = sphi 0, %s61
    %s64 = sphi 0, %s63
    %s78 = sphi 0, %s64
    %s82 = sphi 0, %s82
    %s84 = sphi 0, %s82
    %s85 = sphi 0, %s84
    %s99 = sphi 0, %s85
    %s103 = sphi 0, %s103
    %s105 = sphi 0, %s103
    %s106 = sphi 0, %s105
    %s120 = sphi 0, %s106
    %s124 = sphi 0, %s124
    %s126 = sphi 0, %s124
    %s127 = sphi 0, %s126
    %s141 = sphi 0, %s127
    %s145 = sphi 0, %s145
    %s147 = sphi 0, %s145
    %s148 = sphi 0, %s147
    %s162 = sphi 0, %s148
    %s166 = sphi 0, %s166
    %s168 = sphi 0, %s166
    %s169 = sphi 0, %s168
    %s183 = sphi 0, %s169
    %s187 = sphi 0, %s187
    %s189 = sphi 0, %s187
    %s190 = sphi 0, %s189
    %s204 = sphi 0, %s190
    %s208 = sphi 0, %s208
    %s210 = sphi 0, %s208
    %s211 = sphi 0, %s210
    %s225 = sphi 0, %s211
    %s229 = sphi 0, %s229
    %s231 = sphi 0, %s229
    %s232 = sphi 0, %s231
    %s246 = sphi 0, %s232
    %s250 = sphi 0, %s250
    %s252 = sphi 0, %s250
    %s253 = sphi 0, %s252
    %s267 = sphi 0, %s253
    %s271 = sphi 0, %s271
    %s273 = sphi 0, %s271
    %s274 = sphi 0, %s273
    %s288 = sphi 0, %s274
    %s292 = sphi 0, %s292
    %s294 = sphi 0, %s292
    %s295 = sphi 0, %s294
    %s309 = sphi 0, %s295
    %s313 = sphi 0, %s313
    %s315 = sphi 0, %s313
    %s316 = sphi 0, %s315
    %s330 = sphi 0, %s316
    %s334 = sphi 0, %s334
    %s336 = sphi 0, %s334
    %s337 = sphi 0, %s336
    %s351 = sphi 0, %s337
    %s355 = sphi 0, %s355
    %s357 = sphi 0, %s355
    %s358 = sphi 0, %s357
    %s372 = sphi 0, %s358
    %s376 = sphi 0, %s376
    %s378 = sphi 0, %s376
    %s379 = sphi 0, %s378
    %s393 = sphi 0, %s379
    %s397 = sphi 0, %s397
    %s399 = sphi 0, %s397
    %s400 = sphi 0, %s399
    %s414 = sphi 0, %s400
    %s418 = sphi 0, %s418
    %s420 = sphi 0, %s418
    %s421 = sphi 0, %s420
    %s435 = sphi 0, %s421
    %s441 = sphi 0, %s443
    %s444 = sphi 0, %s441
    %s445 = sphi 0, %s444
    %s461 = sphi 0, %s445
  $region4: #{text_classifier_forward.1} parent=0 // loop_header_branch
    %30 = sbr.rel (%p28) target = $region8
  $region5: #{text_classifier_forward.1} parent=0 // loop_body
    %s32 = ssub.s32 %s27, 1
    %s33 = ssub.s32 %s27, 2
    %s34 = sadd.s32 %s27, 1
    %s35 = ssub.s32 %s27, %s34
    %p36 = scmp.eq.s32.totalorder %s35, 0
    %s38 = sadd.s32 %s37, 1
    %s39 = scalar_select %p36, %s37, %s38
    %p42 = pneg %p36
    %p43 = scmp.eq.s32.totalorder %s27, 1
    %p44 = por %p42, %p43
    %p45 = scmp.ne.s32.totalorder %s37, %s40
    %p46 = scmp.eq.s32.totalorder %s27, 0
    %p47 = por %p45, %p46
    %p48 = scmp.ne.s32.totalorder %s37, %s40
    %p49 = scmp.eq.s32.totalorder %s32, 1
    %p50 = por %p48, %p49
    %p51 = scmp.ne.s32.totalorder %s40, %s41
    %p52 = scmp.eq.s32.totalorder %s32, 0
    %p53 = por %p51, %p52
    %p54 = scmp.ne.s32.totalorder %s40, %s41
    %p55 = scmp.eq.s32.totalorder %s33, 1
    %p56 = por %p54, %p55
    %p58 = scmp.ne.s32.totalorder %s41, %s57
    %p59 = scmp.eq.s32.totalorder %s33, 0
    %p60 = por %p58, %p59
    %s62 = sadd.s32 %s61, 1
    %p65 = scmp.eq.s32.totalorder %s27, 1
    %p66 = scmp.ne.s32.totalorder %s61, %s63
    %p67 = scmp.eq.s32.totalorder %s27, 0
    %p68 = por %p66, %p67
    %p69 = scmp.ne.s32.totalorder %s61, %s63
    %p70 = scmp.eq.s32.totalorder %s32, 1
    %p71 = por %p69, %p70
    %p72 = scmp.ne.s32.totalorder %s63, %s64
    %p73 = scmp.eq.s32.totalorder %s32, 0
    %p74 = por %p72, %p73
    %p75 = scmp.ne.s32.totalorder %s63, %s64
    %p76 = scmp.eq.s32.totalorder %s33, 1
    %p77 = por %p75, %p76
    %p79 = scmp.ne.s32.totalorder %s64, %s78
    %p80 = scmp.eq.s32.totalorder %s33, 0
    %p81 = por %p79, %p80
    %s83 = sadd.s32 %s82, 1
    %p86 = scmp.eq.s32.totalorder %s27, 1
    %p87 = scmp.ne.s32.totalorder %s82, %s84
    %p88 = scmp.eq.s32.totalorder %s27, 0
    %p89 = por %p87, %p88
    %p90 = scmp.ne.s32.totalorder %s82, %s84
    %p91 = scmp.eq.s32.totalorder %s32, 1
    %p92 = por %p90, %p91
    %p93 = scmp.ne.s32.totalorder %s84, %s85
    %p94 = scmp.eq.s32.totalorder %s32, 0
    %p95 = por %p93, %p94
    %p96 = scmp.ne.s32.totalorder %s84, %s85
    %p97 = scmp.eq.s32.totalorder %s33, 1
    %p98 = por %p96, %p97
    %p100 = scmp.ne.s32.totalorder %s85, %s99
    %p101 = scmp.eq.s32.totalorder %s33, 0
    %p102 = por %p100, %p101
    %s104 = sadd.s32 %s103, 1
    %p107 = scmp.eq.s32.totalorder %s27, 1
    %p108 = scmp.ne.s32.totalorder %s103, %s105
    %p109 = scmp.eq.s32.totalorder %s27, 0
    %p110 = por %p108, %p109
    %p111 = scmp.ne.s32.totalorder %s103, %s105
    %p112 = scmp.eq.s32.totalorder %s32, 1
    %p113 = por %p111, %p112
    %p114 = scmp.ne.s32.totalorder %s105, %s106
    %p115 = scmp.eq.s32.totalorder %s32, 0
    %p116 = por %p114, %p115
    %p117 = scmp.ne.s32.totalorder %s105, %s106
    %p118 = scmp.eq.s32.totalorder %s33, 1
    %p119 = por %p117, %p118
    %p121 = scmp.ne.s32.totalorder %s106, %s120
    %p122 = scmp.eq.s32.totalorder %s33, 0
    %p123 = por %p121, %p122
    %s125 = sadd.s32 %s124, 1
    %p128 = scmp.eq.s32.totalorder %s27, 1
    %p129 = scmp.ne.s32.totalorder %s124, %s126
    %p130 = scmp.eq.s32.totalorder %s27, 0
    %p131 = por %p129, %p130
    %p132 = scmp.ne.s32.totalorder %s124, %s126
    %p133 = scmp.eq.s32.totalorder %s32, 1
    %p134 = por %p132, %p133
    %p135 = scmp.ne.s32.totalorder %s126, %s127
    %p136 = scmp.eq.s32.totalorder %s32, 0
    %p137 = por %p135, %p136
    %p138 = scmp.ne.s32.totalorder %s126, %s127
    %p139 = scmp.eq.s32.totalorder %s33, 1
    %p140 = por %p138, %p139
    %p142 = scmp.ne.s32.totalorder %s127, %s141
    %p143 = scmp.eq.s32.totalorder %s33, 0
    %p144 = por %p142, %p143
    %s146 = sadd.s32 %s145, 1
    %p149 = scmp.eq.s32.totalorder %s27, 1
    %p150 = scmp.ne.s32.totalorder %s145, %s147
    %p151 = scmp.eq.s32.totalorder %s27, 0
    %p152 = por %p150, %p151
    %p153 = scmp.ne.s32.totalorder %s145, %s147
    %p154 = scmp.eq.s32.totalorder %s32, 1
    %p155 = por %p153, %p154
    %p156 = scmp.ne.s32.totalorder %s147, %s148
    %p157 = scmp.eq.s32.totalorder %s32, 0
    %p158 = por %p156, %p157
    %p159 = scmp.ne.s32.totalorder %s147, %s148
    %p160 = scmp.eq.s32.totalorder %s33, 1
    %p161 = por %p159, %p160
    %p163 = scmp.ne.s32.totalorder %s148, %s162
    %p164 = scmp.eq.s32.totalorder %s33, 0
    %p165 = por %p163, %p164
    %s167 = sadd.s32 %s166, 1
    %p170 = scmp.eq.s32.totalorder %s27, 1
    %p171 = scmp.ne.s32.totalorder %s166, %s168
    %p172 = scmp.eq.s32.totalorder %s27, 0
    %p173 = por %p171, %p172
    %p174 = scmp.ne.s32.totalorder %s166, %s168
    %p175 = scmp.eq.s32.totalorder %s32, 1
    %p176 = por %p174, %p175
    %p177 = scmp.ne.s32.totalorder %s168, %s169
    %p178 = scmp.eq.s32.totalorder %s32, 0
    %p179 = por %p177, %p178
    %p180 = scmp.ne.s32.totalorder %s168, %s169
    %p181 = scmp.eq.s32.totalorder %s33, 1
    %p182 = por %p180, %p181
    %p184 = scmp.ne.s32.totalorder %s169, %s183
    %p185 = scmp.eq.s32.totalorder %s33, 0
    %p186 = por %p184, %p185
    %s188 = sadd.s32 %s187, 1
    %p191 = scmp.eq.s32.totalorder %s27, 1
    %p192 = scmp.ne.s32.totalorder %s187, %s189
    %p193 = scmp.eq.s32.totalorder %s27, 0
    %p194 = por %p192, %p193
    %p195 = scmp.ne.s32.totalorder %s187, %s189
    %p196 = scmp.eq.s32.totalorder %s32, 1
    %p197 = por %p195, %p196
    %p198 = scmp.ne.s32.totalorder %s189, %s190
    %p199 = scmp.eq.s32.totalorder %s32, 0
    %p200 = por %p198, %p199
    %p201 = scmp.ne.s32.totalorder %s189, %s190
    %p202 = scmp.eq.s32.totalorder %s33, 1
    %p203 = por %p201, %p202
    %p205 = scmp.ne.s32.totalorder %s190, %s204
    %p206 = scmp.eq.s32.totalorder %s33, 0
    %p207 = por %p205, %p206
    %s209 = sadd.s32 %s208, 1
    %p212 = scmp.eq.s32.totalorder %s27, 1
    %p213 = scmp.ne.s32.totalorder %s208, %s210
    %p214 = scmp.eq.s32.totalorder %s27, 0
    %p215 = por %p213, %p214
    %p216 = scmp.ne.s32.totalorder %s208, %s210
    %p217 = scmp.eq.s32.totalorder %s32, 1
    %p218 = por %p216, %p217
    %p219 = scmp.ne.s32.totalorder %s210, %s211
    %p220 = scmp.eq.s32.totalorder %s32, 0
    %p221 = por %p219, %p220
    %p222 = scmp.ne.s32.totalorder %s210, %s211
    %p223 = scmp.eq.s32.totalorder %s33, 1
    %p224 = por %p222, %p223
    %p226 = scmp.ne.s32.totalorder %s211, %s225
    %p227 = scmp.eq.s32.totalorder %s33, 0
    %p228 = por %p226, %p227
    %s230 = sadd.s32 %s229, 1
    %p233 = scmp.eq.s32.totalorder %s27, 1
    %p234 = scmp.ne.s32.totalorder %s229, %s231
    %p235 = scmp.eq.s32.totalorder %s27, 0
    %p236 = por %p234, %p235
    %p237 = scmp.ne.s32.totalorder %s229, %s231
    %p238 = scmp.eq.s32.totalorder %s32, 1
    %p239 = por %p237, %p238
    %p240 = scmp.ne.s32.totalorder %s231, %s232
    %p241 = scmp.eq.s32.totalorder %s32, 0
    %p242 = por %p240, %p241
    %p243 = scmp.ne.s32.totalorder %s231, %s232
    %p244 = scmp.eq.s32.totalorder %s33, 1
    %p245 = por %p243, %p244
    %p247 = scmp.ne.s32.totalorder %s232, %s246
    %p248 = scmp.eq.s32.totalorder %s33, 0
    %p249 = por %p247, %p248
    %s251 = sadd.s32 %s250, 1
    %p254 = scmp.eq.s32.totalorder %s27, 1
    %p255 = scmp.ne.s32.totalorder %s250, %s252
    %p256 = scmp.eq.s32.totalorder %s27, 0
    %p257 = por %p255, %p256
    %p258 = scmp.ne.s32.totalorder %s250, %s252
    %p259 = scmp.eq.s32.totalorder %s32, 1
    %p260 = por %p258, %p259
    %p261 = scmp.ne.s32.totalorder %s252, %s253
    %p262 = scmp.eq.s32.totalorder %s32, 0
    %p263 = por %p261, %p262
    %p264 = scmp.ne.s32.totalorder %s252, %s253
    %p265 = scmp.eq.s32.totalorder %s33, 1
    %p266 = por %p264, %p265
    %p268 = scmp.ne.s32.totalorder %s253, %s267
    %p269 = scmp.eq.s32.totalorder %s33, 0
    %p270 = por %p268, %p269
    %s272 = sadd.s32 %s271, 1
    %p275 = scmp.eq.s32.totalorder %s27, 1
    %p276 = scmp.ne.s32.totalorder %s271, %s273
    %p277 = scmp.eq.s32.totalorder %s27, 0
    %p278 = por %p276, %p277
    %p279 = scmp.ne.s32.totalorder %s271, %s273
    %p280 = scmp.eq.s32.totalorder %s32, 1
    %p281 = por %p279, %p280
    %p282 = scmp.ne.s32.totalorder %s273, %s274
    %p283 = scmp.eq.s32.totalorder %s32, 0
    %p284 = por %p282, %p283
    %p285 = scmp.ne.s32.totalorder %s273, %s274
    %p286 = scmp.eq.s32.totalorder %s33, 1
    %p287 = por %p285, %p286
    %p289 = scmp.ne.s32.totalorder %s274, %s288
    %p290 = scmp.eq.s32.totalorder %s33, 0
    %p291 = por %p289, %p290
    %s293 = sadd.s32 %s292, 1
    %p296 = scmp.eq.s32.totalorder %s27, 1
    %p297 = scmp.ne.s32.totalorder %s292, %s294
    %p298 = scmp.eq.s32.totalorder %s27, 0
    %p299 = por %p297, %p298
    %p300 = scmp.ne.s32.totalorder %s292, %s294
    %p301 = scmp.eq.s32.totalorder %s32, 1
    %p302 = por %p300, %p301
    %p303 = scmp.ne.s32.totalorder %s294, %s295
    %p304 = scmp.eq.s32.totalorder %s32, 0
    %p305 = por %p303, %p304
    %p306 = scmp.ne.s32.totalorder %s294, %s295
    %p307 = scmp.eq.s32.totalorder %s33, 1
    %p308 = por %p306, %p307
    %p310 = scmp.ne.s32.totalorder %s295, %s309
    %p311 = scmp.eq.s32.totalorder %s33, 0
    %p312 = por %p310, %p311
    %s314 = sadd.s32 %s313, 1
    %p317 = scmp.eq.s32.totalorder %s27, 1
    %p318 = scmp.ne.s32.totalorder %s313, %s315
    %p319 = scmp.eq.s32.totalorder %s27, 0
    %p320 = por %p318, %p319
    %p321 = scmp.ne.s32.totalorder %s313, %s315
    %p322 = scmp.eq.s32.totalorder %s32, 1
    %p323 = por %p321, %p322
    %p324 = scmp.ne.s32.totalorder %s315, %s316
    %p325 = scmp.eq.s32.totalorder %s32, 0
    %p326 = por %p324, %p325
    %p327 = scmp.ne.s32.totalorder %s315, %s316
    %p328 = scmp.eq.s32.totalorder %s33, 1
    %p329 = por %p327, %p328
    %p331 = scmp.ne.s32.totalorder %s316, %s330
    %p332 = scmp.eq.s32.totalorder %s33, 0
    %p333 = por %p331, %p332
    %s335 = sadd.s32 %s334, 1
    %p338 = scmp.eq.s32.totalorder %s27, 1
    %p339 = scmp.ne.s32.totalorder %s334, %s336
    %p340 = scmp.eq.s32.totalorder %s27, 0
    %p341 = por %p339, %p340
    %p342 = scmp.ne.s32.totalorder %s334, %s336
    %p343 = scmp.eq.s32.totalorder %s32, 1
    %p344 = por %p342, %p343
    %p345 = scmp.ne.s32.totalorder %s336, %s337
    %p346 = scmp.eq.s32.totalorder %s32, 0
    %p347 = por %p345, %p346
    %p348 = scmp.ne.s32.totalorder %s336, %s337
    %p349 = scmp.eq.s32.totalorder %s33, 1
    %p350 = por %p348, %p349
    %p352 = scmp.ne.s32.totalorder %s337, %s351
    %p353 = scmp.eq.s32.totalorder %s33, 0
    %p354 = por %p352, %p353
    %s356 = sadd.s32 %s355, 1
    %p359 = scmp.eq.s32.totalorder %s27, 1
    %p360 = scmp.ne.s32.totalorder %s355, %s357
    %p361 = scmp.eq.s32.totalorder %s27, 0
    %p362 = por %p360, %p361
    %p363 = scmp.ne.s32.totalorder %s355, %s357
    %p364 = scmp.eq.s32.totalorder %s32, 1
    %p365 = por %p363, %p364
    %p366 = scmp.ne.s32.totalorder %s357, %s358
    %p367 = scmp.eq.s32.totalorder %s32, 0
    %p368 = por %p366, %p367
    %p369 = scmp.ne.s32.totalorder %s357, %s358
    %p370 = scmp.eq.s32.totalorder %s33, 1
    %p371 = por %p369, %p370
    %p373 = scmp.ne.s32.totalorder %s358, %s372
    %p374 = scmp.eq.s32.totalorder %s33, 0
    %p375 = por %p373, %p374
    %s377 = sadd.s32 %s376, 1
    %p380 = scmp.eq.s32.totalorder %s27, 1
    %p381 = scmp.ne.s32.totalorder %s376, %s378
    %p382 = scmp.eq.s32.totalorder %s27, 0
    %p383 = por %p381, %p382
    %p384 = scmp.ne.s32.totalorder %s376, %s378
    %p385 = scmp.eq.s32.totalorder %s32, 1
    %p386 = por %p384, %p385
    %p387 = scmp.ne.s32.totalorder %s378, %s379
    %p388 = scmp.eq.s32.totalorder %s32, 0
    %p389 = por %p387, %p388
    %p390 = scmp.ne.s32.totalorder %s378, %s379
    %p391 = scmp.eq.s32.totalorder %s33, 1
    %p392 = por %p390, %p391
    %p394 = scmp.ne.s32.totalorder %s379, %s393
    %p395 = scmp.eq.s32.totalorder %s33, 0
    %p396 = por %p394, %p395
    %s398 = sadd.s32 %s397, 1
    %p401 = scmp.eq.s32.totalorder %s27, 1
    %p402 = scmp.ne.s32.totalorder %s397, %s399
    %p403 = scmp.eq.s32.totalorder %s27, 0
    %p404 = por %p402, %p403
    %p405 = scmp.ne.s32.totalorder %s397, %s399
    %p406 = scmp.eq.s32.totalorder %s32, 1
    %p407 = por %p405, %p406
    %p408 = scmp.ne.s32.totalorder %s399, %s400
    %p409 = scmp.eq.s32.totalorder %s32, 0
    %p410 = por %p408, %p409
    %p411 = scmp.ne.s32.totalorder %s399, %s400
    %p412 = scmp.eq.s32.totalorder %s33, 1
    %p413 = por %p411, %p412
    %p415 = scmp.ne.s32.totalorder %s400, %s414
    %p416 = scmp.eq.s32.totalorder %s33, 0
    %p417 = por %p415, %p416
    %s419 = sadd.s32 %s418, 1
    %p422 = scmp.eq.s32.totalorder %s27, 1
    %p423 = scmp.ne.s32.totalorder %s418, %s420
    %p424 = scmp.eq.s32.totalorder %s27, 0
    %p425 = por %p423, %p424
    %p426 = scmp.ne.s32.totalorder %s418, %s420
    %p427 = scmp.eq.s32.totalorder %s32, 1
    %p428 = por %p426, %p427
    %p429 = scmp.ne.s32.totalorder %s420, %s421
    %p430 = scmp.eq.s32.totalorder %s32, 0
    %p431 = por %p429, %p430
    %p432 = scmp.ne.s32.totalorder %s420, %s421
    %p433 = scmp.eq.s32.totalorder %s33, 1
    %p434 = por %p432, %p433
    %p436 = scmp.ne.s32.totalorder %s421, %s435
    %p437 = scmp.eq.s32.totalorder %s33, 0
    %p438 = por %p436, %p437
    %s439 = ssub.s32 %s27, %s34
    %p440 = scmp.eq.s32.totalorder %s439, 0
    %s442 = sadd.s32 %s441, 1
    %s443 = scalar_select %p440, %s441, %s442
    %p446 = pneg %p440
    %p447 = scmp.eq.s32.totalorder %s27, 1
    %p448 = por %p446, %p447
    %p449 = scmp.ne.s32.totalorder %s441, %s444
    %p450 = scmp.eq.s32.totalorder %s27, 0
    %p451 = por %p449, %p450
    %p452 = scmp.ne.s32.totalorder %s441, %s444
    %p453 = scmp.eq.s32.totalorder %s32, 1
    %p454 = por %p452, %p453
    %p455 = scmp.ne.s32.totalorder %s444, %s445
    %p456 = scmp.eq.s32.totalorder %s32, 0
    %p457 = por %p455, %p456
    %p458 = scmp.ne.s32.totalorder %s444, %s445
    %p459 = scmp.eq.s32.totalorder %s33, 1
    %p460 = por %p458, %p459
    %p462 = scmp.ne.s32.totalorder %s445, %s461
    %p463 = scmp.eq.s32.totalorder %s33, 0
    %p464 = por %p462, %p463
    %p465 = scmp.le.s32.totalorder 1, %s27
    %p466 = scmp.lt.s32.totalorder %s27, 3
    %p467 = pnand %p465, %p466
    %p468 = pneg %p467
    // Predicated region
    $region9: #{text_classifier_forward.1} parent=5 // pred_check
      _
    $region10: #{text_classifier_forward.1} parent=5 // pred_check_branch
      %470 = sbr.rel (%p467) target = $region12
    $region11: #{text_classifier_forward.1} parent=5 // pred_region
      %s471 = ssub.s32 %s27, 1
      // Predicated region
      $region13: #{text_classifier_forward.1} parent=11 // pred_check
        %p472 = pneg %p74
      $region14: #{text_classifier_forward.1} parent=11 // pred_check_branch
        %474 = sbr.rel (%p472) target = $region16
      $region15: #{text_classifier_forward.1} parent=11 // pred_region
        _
      $region16: #{text_classifier_forward.1} parent=11 // pred_fallthru
        _
      // Predicated region
      $region17: #{text_classifier_forward.1} parent=11 // pred_check
        %p475 = pneg %p95
      $region18: #{text_classifier_forward.1} parent=11 // pred_check_branch
        %477 = sbr.rel (%p475) target = $region20
      $region19: #{text_classifier_forward.1} parent=11 // pred_region
        _
      $region20: #{text_classifier_forward.1} parent=11 // pred_fallthru
        _
      // Predicated region
      $region21: #{text_classifier_forward.1} parent=11 // pred_check
        %p478 = pneg %p116
      $region22: #{text_classifier_forward.1} parent=11 // pred_check_branch
        %480 = sbr.rel (%p478) target = $region24
      $region23: #{text_classifier_forward.1} parent=11 // pred_region
        _
      $region24: #{text_classifier_forward.1} parent=11 // pred_fallthru
        _
      // Predicated region
      $region25: #{text_classifier_forward.1} parent=11 // pred_check
        %p481 = pneg %p137
      $region26: #{text_classifier_forward.1} parent=11 // pred_check_branch
        %483 = sbr.rel (%p481) target = $region28
      $region27: #{text_classifier_forward.1} parent=11 // pred_region
        _
      $region28: #{text_classifier_forward.1} parent=11 // pred_fallthru
        _
      // Predicated region
      $region29: #{text_classifier_forward.1} parent=11 // pred_check
        %p484 = pneg %p158
      $region30: #{text_classifier_forward.1} parent=11 // pred_check_branch
        %486 = sbr.rel (%p484) target = $region32
      $region31: #{text_classifier_forward.1} parent=11 // pred_region
        _
      $region32: #{text_classifier_forward.1} parent=11 // pred_fallthru
        _
      // Predicated region
      $region33: #{text_classifier_forward.1} parent=11 // pred_check
        %p487 = pneg %p179
      $region34: #{text_classifier_forward.1} parent=11 // pred_check_branch
        %489 = sbr.rel (%p487) target = $region36
      $region35: #{text_classifier_forward.1} parent=11 // pred_region
        _
      $region36: #{text_classifier_forward.1} parent=11 // pred_fallthru
        _
      // Predicated region
      $region37: #{text_classifier_forward.1} parent=11 // pred_check
        %p490 = pneg %p200
      $region38: #{text_classifier_forward.1} parent=11 // pred_check_branch
        %492 = sbr.rel (%p490) target = $region40
      $region39: #{text_classifier_forward.1} parent=11 // pred_region
        _
      $region40: #{text_classifier_forward.1} parent=11 // pred_fallthru
        _
      // Predicated region
      $region41: #{text_classifier_forward.1} parent=11 // pred_check
        %p493 = pneg %p221
      $region42: #{text_classifier_forward.1} parent=11 // pred_check_branch
        %495 = sbr.rel (%p493) target = $region44
      $region43: #{text_classifier_forward.1} parent=11 // pred_region
        _
      $region44: #{text_classifier_forward.1} parent=11 // pred_fallthru
        _
      // Predicated region
      $region45: #{text_classifier_forward.1} parent=11 // pred_check
        %p496 = pneg %p242
      $region46: #{text_classifier_forward.1} parent=11 // pred_check_branch
        %498 = sbr.rel (%p496) target = $region48
      $region47: #{text_classifier_forward.1} parent=11 // pred_region
        _
      $region48: #{text_classifier_forward.1} parent=11 // pred_fallthru
        _
      // Predicated region
      $region49: #{text_classifier_forward.1} parent=11 // pred_check
        %p499 = pneg %p263
      $region50: #{text_classifier_forward.1} parent=11 // pred_check_branch
        %501 = sbr.rel (%p499) target = $region52
      $region51: #{text_classifier_forward.1} parent=11 // pred_region
        _
      $region52: #{text_classifier_forward.1} parent=11 // pred_fallthru
        _
      // Predicated region
      $region53: #{text_classifier_forward.1} parent=11 // pred_check
        %p502 = pneg %p284
      $region54: #{text_classifier_forward.1} parent=11 // pred_check_branch
        %504 = sbr.rel (%p502) target = $region56
      $region55: #{text_classifier_forward.1} parent=11 // pred_region
        _
      $region56: #{text_classifier_forward.1} parent=11 // pred_fallthru
        _
      // Predicated region
      $region57: #{text_classifier_forward.1} parent=11 // pred_check
        %p505 = pneg %p305
      $region58: #{text_classifier_forward.1} parent=11 // pred_check_branch
        %507 = sbr.rel (%p505) target = $region60
      $region59: #{text_classifier_forward.1} parent=11 // pred_region
        _
      $region60: #{text_classifier_forward.1} parent=11 // pred_fallthru
        _
      // Predicated region
      $region61: #{text_classifier_forward.1} parent=11 // pred_check
        %p508 = pneg %p326
      $region62: #{text_classifier_forward.1} parent=11 // pred_check_branch
        %510 = sbr.rel (%p508) target = $region64
      $region63: #{text_classifier_forward.1} parent=11 // pred_region
        _
      $region64: #{text_classifier_forward.1} parent=11 // pred_fallthru
        _
      // Predicated region
      $region65: #{text_classifier_forward.1} parent=11 // pred_check
        %p511 = pneg %p347
      $region66: #{text_classifier_forward.1} parent=11 // pred_check_branch
        %513 = sbr.rel (%p511) target = $region68
      $region67: #{text_classifier_forward.1} parent=11 // pred_region
        _
      $region68: #{text_classifier_forward.1} parent=11 // pred_fallthru
        _
      // Predicated region
      $region69: #{text_classifier_forward.1} parent=11 // pred_check
        %p514 = pneg %p368
      $region70: #{text_classifier_forward.1} parent=11 // pred_check_branch
        %516 = sbr.rel (%p514) target = $region72
      $region71: #{text_classifier_forward.1} parent=11 // pred_region
        _
      $region72: #{text_classifier_forward.1} parent=11 // pred_fallthru
        _
      // Predicated region
      $region73: #{text_classifier_forward.1} parent=11 // pred_check
        %p517 = pneg %p389
      $region74: #{text_classifier_forward.1} parent=11 // pred_check_branch
        %519 = sbr.rel (%p517) target = $region76
      $region75: #{text_classifier_forward.1} parent=11 // pred_region
        _
      $region76: #{text_classifier_forward.1} parent=11 // pred_fallthru
        _
      // Predicated region
      $region77: #{text_classifier_forward.1} parent=11 // pred_check
        %p520 = pneg %p410
      $region78: #{text_classifier_forward.1} parent=11 // pred_check_branch
        %522 = sbr.rel (%p520) target = $region80
      $region79: #{text_classifier_forward.1} parent=11 // pred_region
        _
      $region80: #{text_classifier_forward.1} parent=11 // pred_fallthru
        _
      // Predicated region
      $region81: #{text_classifier_forward.1} parent=11 // pred_check
        %p523 = pneg %p431
      $region82: #{text_classifier_forward.1} parent=11 // pred_check_branch
        %525 = sbr.rel (%p523) target = $region84
      $region83: #{text_classifier_forward.1} parent=11 // pred_region
        _
      $region84: #{text_classifier_forward.1} parent=11 // pred_fallthru
        _
    $region12: #{text_classifier_forward.1} parent=5 // pred_fallthru
      _
    %p526 = scmp.lt.s32.totalorder %s27, 2
    // Predicated region
    $region85: #{text_classifier_forward.1} parent=5 // pred_check
      %p527 = pneg %p526
    $region86: #{text_classifier_forward.1} parent=5 // pred_check_branch
      %529 = sbr.rel (%p527) target = $region88
    $region87: #{text_classifier_forward.1} parent=5 // pred_region
      // Predicated region
      $region89: #{text_classifier_forward.1} parent=87 // pred_check
        %p530 = pneg %p47
      $region90: #{text_classifier_forward.1} parent=87 // pred_check_branch
        %532 = sbr.rel (%p530) target = $region92
      $region91: #{text_classifier_forward.1} parent=87 // pred_region
        %p533 = scmp.lt.s32.totalorder %s27, 1
        %s534 = scalar_select %p533, %s27, 1
        %s535 = smul.addr %s534, 8
        %s536 = scalar_lea.vmem %s0, %s535
      $region92: #{text_classifier_forward.1} parent=87 // pred_fallthru
        _
    $region88: #{text_classifier_forward.1} parent=5 // pred_fallthru
      _
    %p537 = scmp.le.s32.totalorder 1, %s27
    %p538 = scmp.lt.s32.totalorder %s27, 3
    %p539 = pnand %p537, %p538
    %p540 = pneg %p539
    // Predicated region
    $region93: #{text_classifier_forward.1} parent=5 // pred_check
      _
    $region94: #{text_classifier_forward.1} parent=5 // pred_check_branch
      %542 = sbr.rel (%p539) target = $region96
    $region95: #{text_classifier_forward.1} parent=5 // pred_region
      %s543 = ssub.s32 %s27, 1
      %p544 = scmp.lt.s32.totalorder %s32, 1
      %s545 = scalar_select %p544, %s32, 1
      %s546 = smul.addr %s545, 8
      %s547 = scalar_lea.vmem %s0, %s546
      %p548 = pneg %p53
      %p549 = pneg %p50
      %p550 = pneg %p74
      %p551 = pneg %p71
      %p552 = pneg %p95
      %p553 = pneg %p92
      %p554 = pneg %p116
      %p555 = pneg %p113
      %p556 = pneg %p137
      %p557 = pneg %p134
      %p558 = pneg %p158
      %p559 = pneg %p155
      %p560 = pneg %p179
      %p561 = pneg %p176
      %p562 = pneg %p200
      %p563 = pneg %p197
      %p564 = pneg %p221
      %p565 = pneg %p218
      %p566 = pneg %p242
      %p567 = pneg %p239
      %p568 = pneg %p263
      %p569 = pneg %p260
      %p570 = pneg %p284
      %p571 = pneg %p281
      %p572 = pneg %p305
      %p573 = pneg %p302
      %p574 = pneg %p326
      %p575 = pneg %p323
      %p576 = pneg %p347
      %p577 = pneg %p344
      %p578 = pneg %p368
      %p579 = pneg %p365
      %p580 = pneg %p389
      %p581 = pneg %p386
      %p582 = pneg %p410
      %p583 = pneg %p407
      %p584 = pneg %p431
      %p585 = pneg %p428
      %p586 = pneg %p457
      %p587 = pneg %p454
      %p588 = scmp.lt.s32.totalorder %s32, 1
      %s589 = scalar_select %p588, %s32, 1
      %s590 = scalar_lea.vmem %s19, %s589
      %p591 = scmp.lt.s32.totalorder %s32, 1
      %s592 = scalar_select %p591, %s32, 1
      %s593 = smul.addr %s592, 8
      %s594 = scalar_lea.vmem %s0, %s593
      %p595 = scmp.lt.s32.totalorder %s32, 1
      %s596 = scalar_select %p595, %s32, 1
      %s597 = scalar_lea.vmem %s19, %s596
      %v599 = vld [vmem:[%s594] sm:$0xff]
      %v600 = vld [vmem:[%s1] sm:$0xff]
      %v601 = vld [vmem:[%s1 + $0x8] sm:$0xff]
      %v602 = vld [vmem:[%s1 + $0x10] sm:$0xff]
      %v603 = vld [vmem:[%s1 + $0x18] sm:$0xff]
      %v604 = vld [vmem:[%s1 + $0x20] sm:$0xff]
      %v605 = vld [vmem:[%s1 + $0x28] sm:$0xff]
      %v606 = vld [vmem:[%s1 + $0x30] sm:$0xff]
      %v607 = vld [vmem:[%s1 + $0x38] sm:$0xff]
      %v608 = vpack.c.bf16 %v599, %v599
      %v609 = vpack.c.bf16 %v601, %v600
      %v610 = vpack.c.bf16 %v603, %v602
      %v611 = vpack.c.bf16 %v605, %v604
      %v612 = vpack.c.bf16 %v607, %v606
      %v613 = vld [vmem:[%s2] sm:$0x1]
      %v615 = vlaneseq
      %v616 = vshrl.u32 %v615, 7
      %v617 = vsub.s32 0, %v616
      %v618 = vrot.slane %v613, %v617
      %vm620 = vcmask 523264
      %v622 = vsel %vm620, %v608, 0
      %624 = vmatprep.subr.bf16.mxu0 0
      %625 = vmatpush1.bf16.msra.mxu0 %v609
      %626 = vmatprep.subr.bf16.mxu0 0
      %627 = vmatpush1.bf16.msra.mxu0 %v610
      %628 = vmatprep.subr.bf16.mxu0 0
      %629 = vmatpush1.bf16.msra.mxu0 %v611
      %630 = vmatprep.subr.bf16.mxu0 0
      %631 = vmatpush1.bf16.msra.mxu0 %v612
      %632 = vmatprep.subr.bf16.mxu0 0
      %633 = vmatpush1.bf16.msra.mxu0 0
      %634 = vmatprep.subr.bf16.mxu0 0
      %635 = vmatpush1.bf16.msra.mxu0 0
      %636 = vmatprep.subr.bf16.mxu0 0
      %637 = vmatpush1.bf16.msra.mxu0 0
      %638 = vmatprep.subr.bf16.mxu0 0
      %639 = vmatpush1.bf16.msra.mxu0 0
      %640 = vmatprep.subr.bf16.mxu0 0
      %641 = vmatpush1.bf16.msra.mxu0 0
      %642 = vmatprep.subr.bf16.mxu0 0
      %643 = vmatpush1.bf16.msra.mxu0 0
      %644 = vmatprep.subr.bf16.mxu0 0
      %645 = vmatpush1.bf16.msra.mxu0 0
      %646 = vmatprep.subr.bf16.mxu0 0
      %647 = vmatpush1.bf16.msra.mxu0 0
      %648 = vmatprep.subr.bf16.mxu0 0
      %649 = vmatpush1.bf16.msra.mxu0 0
      %650 = vmatprep.subr.bf16.mxu0 0
      %651 = vmatpush1.bf16.msra.mxu0 0
      %652 = vmatprep.subr.bf16.mxu0 0
      %653 = vmatpush1.bf16.msra.mxu0 0
      %654 = vmatprep.subr.bf16.mxu0 0
      %655 = vmatpush1.bf16.msra.mxu0 0
      %656 = vmatprep.mubr.bf16.mxu0 0
      %657 = vmatmul.mubr.bf16.gmra.mrb[0].mxu0 %v622
      %v658 = vpop.f32.mrb[0].mxu0
      %v659 = vadd.f32 %v618, %v658
      %v660 = vpop.f32.mrb[0].mxu0
      %v661 = vpop.f32.mrb[0].mxu0
      %v662 = vpop.f32.mrb[0].mxu0
      %663 = vdwg.mxu0
      %v664 = vld [vmem:[%s3] sm:$0xff]
      %v665 = vld [vmem:[%s3 + $0x8] sm:$0xff]
      %v666 = vld [vmem:[%s3 + $0x10] sm:$0xff]
      %v667 = vld [vmem:[%s3 + $0x18] sm:$0xff]
      %v668 = vpack.c.bf16 %v659, %v659
      %v669 = vpack.c.bf16 %v665, %v664
      %v670 = vpack.c.bf16 %v667, %v666
      %v671 = vld [vmem:[%s4] sm:$0x1]
      %v673 = vlaneseq
      %v674 = vshrl.u32 %v673, 7
      %v675 = vsub.s32 0, %v674
      %v676 = vrot.slane %v671, %v675
      %vm678 = vcmask 261120
      %v680 = vsel %vm678, %v668, 0
      %682 = vmatprep.subr.bf16.mxu0 0
      %683 = vmatpush1.bf16.msra.mxu0 %v669
      %684 = vmatprep.subr.bf16.mxu0 0
      %685 = vmatpush1.bf16.msra.mxu0 %v670
      %686 = vmatprep.subr.bf16.mxu0 0
      %687 = vmatpush1.bf16.msra.mxu0 0
      %688 = vmatprep.subr.bf16.mxu0 0
      %689 = vmatpush1.bf16.msra.mxu0 0
      %690 = vmatprep.subr.bf16.mxu0 0
      %691 = vmatpush1.bf16.msra.mxu0 0
      %692 = vmatprep.subr.bf16.mxu0 0
      %693 = vmatpush1.bf16.msra.mxu0 0
      %694 = vmatprep.subr.bf16.mxu0 0
      %695 = vmatpush1.bf16.msra.mxu0 0
      %696 = vmatprep.subr.bf16.mxu0 0
      %697 = vmatpush1.bf16.msra.mxu0 0
      %698 = vmatprep.subr.bf16.mxu0 0
      %699 = vmatpush1.bf16.msra.mxu0 0
      %700 = vmatprep.subr.bf16.mxu0 0
      %701 = vmatpush1.bf16.msra.mxu0 0
      %702 = vmatprep.subr.bf16.mxu0 0
      %703 = vmatpush1.bf16.msra.mxu0 0
      %704 = vmatprep.subr.bf16.mxu0 0
      %705 = vmatpush1.bf16.msra.mxu0 0
      %706 = vmatprep.subr.bf16.mxu0 0
      %707 = vmatpush1.bf16.msra.mxu0 0
      %708 = vmatprep.subr.bf16.mxu0 0
      %709 = vmatpush1.bf16.msra.mxu0 0
      %710 = vmatprep.subr.bf16.mxu0 0
      %711 = vmatpush1.bf16.msra.mxu0 0
      %712 = vmatprep.subr.bf16.mxu0 0
      %713 = vmatpush1.bf16.msra.mxu0 0
      %714 = vmatprep.mubr.bf16.mxu0 0
      %715 = vmatmul.mubr.bf16.gmra.mrb[0].mxu0 %v680
      %v716 = vpop.f32.mrb[0].mxu0
      %v717 = vadd.f32 %v676, %v716
      %v718 = vpop.f32.mrb[0].mxu0
      %v719 = vpop.f32.mrb[0].mxu0
      %v720 = vpop.f32.mrb[0].mxu0
      %721 = vdwg.mxu0
      %s722 = scalar_lea.vmem %s3, 128
      %v723 = vld [vmem:[%s722] sm:$0xff]
      %v724 = vld [vmem:[%s722 + $0x8] sm:$0xff]
      %v725 = vld [vmem:[%s722 + $0x10] sm:$0xff]
      %v726 = vld [vmem:[%s722 + $0x18] sm:$0xff]
      %v727 = vpack.c.bf16 %v724, %v723
      %v728 = vpack.c.bf16 %v726, %v725
      %s729 = scalar_lea.vmem %s4, 4
      %v730 = vld [vmem:[%s729] sm:$0x1]
      %v732 = vlaneseq
      %v733 = vshrl.u32 %v732, 7
      %v734 = vsub.s32 0, %v733
      %v735 = vrot.slane %v730, %v734
      %737 = vmatprep.subr.bf16.mxu0 0
      %738 = vmatpush1.bf16.msra.mxu0 %v727
      %739 = vmatprep.subr.bf16.mxu0 0
      %740 = vmatpush1.bf16.msra.mxu0 %v728
      %741 = vmatprep.subr.bf16.mxu0 0
      %742 = vmatpush1.bf16.msra.mxu0 0
      %743 = vmatprep.subr.bf16.mxu0 0
      %744 = vmatpush1.bf16.msra.mxu0 0
      %745 = vmatprep.subr.bf16.mxu0 0
      %746 = vmatpush1.bf16.msra.mxu0 0
      %747 = vmatprep.subr.bf16.mxu0 0
      %748 = vmatpush1.bf16.msra.mxu0 0
      %749 = vmatprep.subr.bf16.mxu0 0
      %750 = vmatpush1.bf16.msra.mxu0 0
      %751 = vmatprep.subr.bf16.mxu0 0
      %752 = vmatpush1.bf16.msra.mxu0 0
      %753 = vmatprep.subr.bf16.mxu0 0
      %754 = vmatpush1.bf16.msra.mxu0 0
      %755 = vmatprep.subr.bf16.mxu0 0
      %756 = vmatpush1.bf16.msra.mxu0 0
      %757 = vmatprep.subr.bf16.mxu0 0
      %758 = vmatpush1.bf16.msra.mxu0 0
      %759 = vmatprep.subr.bf16.mxu0 0
      %760 = vmatpush1.bf16.msra.mxu0 0
      %761 = vmatprep.subr.bf16.mxu0 0
      %762 = vmatpush1.bf16.msra.mxu0 0
      %763 = vmatprep.subr.bf16.mxu0 0
      %764 = vmatpush1.bf16.msra.mxu0 0
      %765 = vmatprep.subr.bf16.mxu0 0
      %766 = vmatpush1.bf16.msra.mxu0 0
      %767 = vmatprep.subr.bf16.mxu0 0
      %768 = vmatpush1.bf16.msra.mxu0 0
      %769 = vmatprep.mubr.bf16.mxu0 0
      %770 = vmatmul.mubr.bf16.gmra.mrb[0].mxu0 %v680
      %v771 = vpop.f32.mrb[0].mxu0
      %v772 = vadd.f32 %v735, %v771
      %v773 = vpop.f32.mrb[0].mxu0
      %v774 = vpop.f32.mrb[0].mxu0
      %v775 = vpop.f32.mrb[0].mxu0
      %776 = vdwg.mxu0
      %s777 = scalar_lea.vmem %s3, 256
      %v778 = vld [vmem:[%s777] sm:$0xff]
      %v779 = vld [vmem:[%s777 + $0x8] sm:$0xff]
      %v780 = vld [vmem:[%s777 + $0x10] sm:$0xff]
      %v781 = vld [vmem:[%s777 + $0x18] sm:$0xff]
      %v782 = vpack.c.bf16 %v779, %v778
      %v783 = vpack.c.bf16 %v781, %v780
      %s784 = scalar_lea.vmem %s4, 8
      %v785 = vld [vmem:[%s784] sm:$0x1]
      %v787 = vlaneseq
      %v788 = vshrl.u32 %v787, 7
      %v789 = vsub.s32 0, %v788
      %v790 = vrot.slane %v785, %v789
      %792 = vmatprep.subr.bf16.mxu0 0
      %793 = vmatpush1.bf16.msra.mxu0 %v782
      %794 = vmatprep.subr.bf16.mxu0 0
      %795 = vmatpush1.bf16.msra.mxu0 %v783
      %796 = vmatprep.subr.bf16.mxu0 0
      %797 = vmatpush1.bf16.msra.mxu0 0
      %798 = vmatprep.subr.bf16.mxu0 0
      %799 = vmatpush1.bf16.msra.mxu0 0
      %800 = vmatprep.subr.bf16.mxu0 0
      %801 = vmatpush1.bf16.msra.mxu0 0
      %802 = vmatprep.subr.bf16.mxu0 0
      %803 = vmatpush1.bf16.msra.mxu0 0
      %804 = vmatprep.subr.bf16.mxu0 0
      %805 = vmatpush1.bf16.msra.mxu0 0
      %806 = vmatprep.subr.bf16.mxu0 0
      %807 = vmatpush1.bf16.msra.mxu0 0
      %808 = vmatprep.subr.bf16.mxu0 0
      %809 = vmatpush1.bf16.msra.mxu0 0
      %810 = vmatprep.subr.bf16.mxu0 0
      %811 = vmatpush1.bf16.msra.mxu0 0
      %812 = vmatprep.subr.bf16.mxu0 0
      %813 = vmatpush1.bf16.msra.mxu0 0
      %814 = vmatprep.subr.bf16.mxu0 0
      %815 = vmatpush1.bf16.msra.mxu0 0
      %816 = vmatprep.subr.bf16.mxu0 0
      %817 = vmatpush1.bf16.msra.mxu0 0
      %818 = vmatprep.subr.bf16.mxu0 0
      %819 = vmatpush1.bf16.msra.mxu0 0
      %820 = vmatprep.subr.bf16.mxu0 0
      %821 = vmatpush1.bf16.msra.mxu0 0
      %822 = vmatprep.subr.bf16.mxu0 0
      %823 = vmatpush1.bf16.msra.mxu0 0
      %824 = vmatprep.mubr.bf16.mxu0 0
      %825 = vmatmul.mubr.bf16.gmra.mrb[0].mxu0 %v680
      %v826 = vpop.f32.mrb[0].mxu0
      %v827 = vadd.f32 %v790, %v826
      %v828 = vpop.f32.mrb[0].mxu0
      %v829 = vpop.f32.mrb[0].mxu0
      %v830 = vpop.f32.mrb[0].mxu0
      %831 = vdwg.mxu0
      %v832 = vpack.c.bf16 %v717, %v717
      %v833 = vpack.c.bf16 %v772, %v772
      %vm834 = vcmask 64512
      %v836 = vsel %vm834, %v832, 0
      %v839 = vsel %vm834, %v833, 0
      %841 = vmatprep.subr.bf16.mxu0 0
      %842 = vmatpush1.bf16.xpose.msra.mxu0 %v839
      %843 = vmatprep.subr.bf16.mxu0 0
      %844 = vmatpush1.bf16.xpose.msra.mxu0 0
      %845 = vmatprep.subr.bf16.mxu0 0
      %846 = vmatpush1.bf16.xpose.msra.mxu0 0
      %847 = vmatprep.subr.bf16.mxu0 0
      %848 = vmatpush1.bf16.xpose.msra.mxu0 0
      %849 = vmatprep.subr.bf16.mxu0 0
      %850 = vmatpush1.bf16.xpose.msra.mxu0 0
      %851 = vmatprep.subr.bf16.mxu0 0
      %852 = vmatpush1.bf16.xpose.msra.mxu0 0
      %853 = vmatprep.subr.bf16.mxu0 0
      %854 = vmatpush1.bf16.xpose.msra.mxu0 0
      %855 = vmatprep.subr.bf16.mxu0 0
      %856 = vmatpush1.bf16.xpose.msra.mxu0 0
      %857 = vmatprep.subr.bf16.mxu0 0
      %858 = vmatpush1.bf16.xpose.msra.mxu0 0
      %859 = vmatprep.subr.bf16.mxu0 0
      %860 = vmatpush1.bf16.xpose.msra.mxu0 0
      %861 = vmatprep.subr.bf16.mxu0 0
      %862 = vmatpush1.bf16.xpose.msra.mxu0 0
      %863 = vmatprep.subr.bf16.mxu0 0
      %864 = vmatpush1.bf16.xpose.msra.mxu0 0
      %865 = vmatprep.subr.bf16.mxu0 0
      %866 = vmatpush1.bf16.xpose.msra.mxu0 0
      %867 = vmatprep.subr.bf16.mxu0 0
      %868 = vmatpush1.bf16.xpose.msra.mxu0 0
      %869 = vmatprep.subr.bf16.mxu0 0
      %870 = vmatpush1.bf16.xpose.msra.mxu0 0
      %871 = vmatprep.subr.bf16.mxu0 0
      %872 = vmatpush1.bf16.xpose.msra.mxu0 0
      %873 = vmatprep.mubr.bf16.mxu0 0
      %874 = vmatmul.mubr.bf16.gmra.mrb[0].mxu0 %v836
      %v875 = vpop.f32.mrb[0].mxu0
      %v876 = vadd.f32 0.0, %v875
      %v877 = vpop.f32.mrb[0].mxu0
      %v878 = vpop.f32.mrb[0].mxu0
      %v879 = vpop.f32.mrb[0].mxu0
      %880 = vdwg.mxu0
      %v881 = vmul.f32 %v876, 0.35355338
      %v882 = vsel %vm834, %v881, -inf
      %883 = vmax.xlane.f32.xlu0 %v882
      %v884 = vpop.xlane.xlu0 %883
      %v885 = vsub.f32 %v881, %v884
      %v886 = vmul.f32 %v885, 1.442695
      %v887 = vpow.pop %v886
      %v888 = vsel %vm834, %v887, 0.0
      %889 = vadd.xlane.f32.xlu0 %v888
      %v890 = vpop.xlane.xlu0 %889
      %v891 = vrcp.pop %v890
      %v892 = vmul.f32 %v887, %v891
      %v893 = vpack.c.bf16 %v892, %v892
      %v894 = vpack.c.bf16 %v827, %v827
      %v896 = vsel %vm834, %v893, 0
      %vm898 = vcmask 1043456
      %v900 = vsel %vm898, %v894, 0
      %902 = vmatprep.subr.bf16.mxu0 0
      %903 = vmatpush1.bf16.msra.mxu0 %v900
      %904 = vmatprep.subr.bf16.mxu0 0
      %905 = vmatpush1.bf16.msra.mxu0 0
      %906 = vmatprep.subr.bf16.mxu0 0
      %907 = vmatpush1.bf16.msra.mxu0 0
      %908 = vmatprep.subr.bf16.mxu0 0
      %909 = vmatpush1.bf16.msra.mxu0 0
      %910 = vmatprep.subr.bf16.mxu0 0
      %911 = vmatpush1.bf16.msra.mxu0 0
      %912 = vmatprep.subr.bf16.mxu0 0
      %913 = vmatpush1.bf16.msra.mxu0 0
      %914 = vmatprep.subr.bf16.mxu0 0
      %915 = vmatpush1.bf16.msra.mxu0 0
      %916 = vmatprep.subr.bf16.mxu0 0
      %917 = vmatpush1.bf16.msra.mxu0 0
      %918 = vmatprep.subr.bf16.mxu0 0
      %919 = vmatpush1.bf16.msra.mxu0 0
      %920 = vmatprep.subr.bf16.mxu0 0
      %921 = vmatpush1.bf16.msra.mxu0 0
      %922 = vmatprep.subr.bf16.mxu0 0
      %923 = vmatpush1.bf16.msra.mxu0 0
      %924 = vmatprep.subr.bf16.mxu0 0
      %925 = vmatpush1.bf16.msra.mxu0 0
      %926 = vmatprep.subr.bf16.mxu0 0
      %927 = vmatpush1.bf16.msra.mxu0 0
      %928 = vmatprep.subr.bf16.mxu0 0
      %929 = vmatpush1.bf16.msra.mxu0 0
      %930 = vmatprep.subr.bf16.mxu0 0
      %931 = vmatpush1.bf16.msra.mxu0 0
      %932 = vmatprep.subr.bf16.mxu0 0
      %933 = vmatpush1.bf16.msra.mxu0 0
      %934 = vmatprep.mubr.bf16.mxu0 0
      %935 = vmatmul.mubr.bf16.gmra.mrb[0].mxu0 %v896
      %v936 = vpop.f32.mrb[0].mxu0
      %v937 = vadd.f32 0.0, %v936
      %v938 = vpop.f32.mrb[0].mxu0
      %v939 = vpop.f32.mrb[0].mxu0
      %v940 = vpop.f32.mrb[0].mxu0
      %941 = vdwg.mxu0
      %s942 = scalar_lea.vmem %s3, 32
      %v943 = vld [vmem:[%s942] sm:$0xff]
      %v944 = vld [vmem:[%s942 + $0x8] sm:$0xff]
      %v945 = vld [vmem:[%s942 + $0x10] sm:$0xff]
      %v946 = vld [vmem:[%s942 + $0x18] sm:$0xff]
      %v947 = vpack.c.bf16 %v944, %v943
      %v948 = vpack.c.bf16 %v946, %v945
      %s949 = scalar_lea.vmem %s4, 1
      %v950 = vld [vmem:[%s949] sm:$0x1]
      %v952 = vlaneseq
      %v953 = vshrl.u32 %v952, 7
      %v954 = vsub.s32 0, %v953
      %v955 = vrot.slane %v950, %v954
      %957 = vmatprep.subr.bf16.mxu0 0
      %958 = vmatpush1.bf16.msra.mxu0 %v947
      %959 = vmatprep.subr.bf16.mxu0 0
      %960 = vmatpush1.bf16.msra.mxu0 %v948
      %961 = vmatprep.subr.bf16.mxu0 0
      %962 = vmatpush1.bf16.msra.mxu0 0
      %963 = vmatprep.subr.bf16.mxu0 0
      %964 = vmatpush1.bf16.msra.mxu0 0
      %965 = vmatprep.subr.bf16.mxu0 0
      %966 = vmatpush1.bf16.msra.mxu0 0
      %967 = vmatprep.subr.bf16.mxu0 0
      %968 = vmatpush1.bf16.msra.mxu0 0
      %969 = vmatprep.subr.bf16.mxu0 0
      %970 = vmatpush1.bf16.msra.mxu0 0
      %971 = vmatprep.subr.bf16.mxu0 0
      %972 = vmatpush1.bf16.msra.mxu0 0
      %973 = vmatprep.subr.bf16.mxu0 0
      %974 = vmatpush1.bf16.msra.mxu0 0
      %975 = vmatprep.subr.bf16.mxu0 0
      %976 = vmatpush1.bf16.msra.mxu0 0
      %977 = vmatprep.subr.bf16.mxu0 0
      %978 = vmatpush1.bf16.msra.mxu0 0
      %979 = vmatprep.subr.bf16.mxu0 0
      %980 = vmatpush1.bf16.msra.mxu0 0
      %981 = vmatprep.subr.bf16.mxu0 0
      %982 = vmatpush1.bf16.msra.mxu0 0
      %983 = vmatprep.subr.bf16.mxu0 0
      %984 = vmatpush1.bf16.msra.mxu0 0
      %985 = vmatprep.subr.bf16.mxu0 0
      %986 = vmatpush1.bf16.msra.mxu0 0
      %987 = vmatprep.subr.bf16.mxu0 0
      %988 = vmatpush1.bf16.msra.mxu0 0
      %989 = vmatprep.mubr.bf16.mxu0 0
      %990 = vmatmul.mubr.bf16.gmra.mrb[0].mxu0 %v680
      %v991 = vpop.f32.mrb[0].mxu0
      %v992 = vadd.f32 %v955, %v991
      %v993 = vpop.f32.mrb[0].mxu0
      %v994 = vpop.f32.mrb[0].mxu0
      %v995 = vpop.f32.mrb[0].mxu0
      %996 = vdwg.mxu0
      %s997 = scalar_lea.vmem %s3, 160
      %v998 = vld [vmem:[%s997] sm:$0xff]
      %v999 = vld [vmem:[%s997 + $0x8] sm:$0xff]
      %v1000 = vld [vmem:[%s997 + $0x10] sm:$0xff]
      %v1001 = vld [vmem:[%s997 + $0x18] sm:$0xff]
      %v1002 = vpack.c.bf16 %v999, %v998
      %v1003 = vpack.c.bf16 %v1001, %v1000
      %s1004 = scalar_lea.vmem %s4, 5
      %v1005 = vld [vmem:[%s1004] sm:$0x1]
      %v1007 = vlaneseq
      %v1008 = vshrl.u32 %v1007, 7
      %v1009 = vsub.s32 0, %v1008
      %v1010 = vrot.slane %v1005, %v1009
      %1012 = vmatprep.subr.bf16.mxu0 0
      %1013 = vmatpush1.bf16.msra.mxu0 %v1002
      %1014 = vmatprep.subr.bf16.mxu0 0
      %1015 = vmatpush1.bf16.msra.mxu0 %v1003
      %1016 = vmatprep.subr.bf16.mxu0 0
      %1017 = vmatpush1.bf16.msra.mxu0 0
      %1018 = vmatprep.subr.bf16.mxu0 0
      %1019 = vmatpush1.bf16.msra.mxu0 0
      %1020 = vmatprep.subr.bf16.mxu0 0
      %1021 = vmatpush1.bf16.msra.mxu0 0
      %1022 = vmatprep.subr.bf16.mxu0 0
      %1023 = vmatpush1.bf16.msra.mxu0 0
      %1024 = vmatprep.subr.bf16.mxu0 0
      %1025 = vmatpush1.bf16.msra.mxu0 0
      %1026 = vmatprep.subr.bf16.mxu0 0
      %1027 = vmatpush1.bf16.msra.mxu0 0
      %1028 = vmatprep.subr.bf16.mxu0 0
      %1029 = vmatpush1.bf16.msra.mxu0 0
      %1030 = vmatprep.subr.bf16.mxu0 0
      %1031 = vmatpush1.bf16.msra.mxu0 0
      %1032 = vmatprep.subr.bf16.mxu0 0
      %1033 = vmatpush1.bf16.msra.mxu0 0
      %1034 = vmatprep.subr.bf16.mxu0 0
      %1035 = vmatpush1.bf16.msra.mxu0 0
      %1036 = vmatprep.subr.bf16.mxu0 0
      %1037 = vmatpush1.bf16.msra.mxu0 0
      %1038 = vmatprep.subr.bf16.mxu0 0
      %1039 = vmatpush1.bf16.msra.mxu0 0
      %1040 = vmatprep.subr.bf16.mxu0 0
      %1041 = vmatpush1.bf16.msra.mxu0 0
      %1042 = vmatprep.subr.bf16.mxu0 0
      %1043 = vmatpush1.bf16.msra.mxu0 0
      %1044 = vmatprep.mubr.bf16.mxu0 0
      %1045 = vmatmul.mubr.bf16.gmra.mrb[0].mxu0 %v680
      %v1046 = vpop.f32.mrb[0].mxu0
      %v1047 = vadd.f32 %v1010, %v1046
      %v1048 = vpop.f32.mrb[0].mxu0
      %v1049 = vpop.f32.mrb[0].mxu0
      %v1050 = vpop.f32.mrb[0].mxu0
      %1051 = vdwg.mxu0
      %s1052 = scalar_lea.vmem %s3, 288
      %v1053 = vld [vmem:[%s1052] sm:$0xff]
      %v1054 = vld [vmem:[%s1052 + $0x8] sm:$0xff]
      %v1055 = vld [vmem:[%s1052 + $0x10] sm:$0xff]
      %v1056 = vld [vmem:[%s1052 + $0x18] sm:$0xff]
      %v1057 = vpack.c.bf16 %v1054, %v1053
      %v1058 = vpack.c.bf16 %v1056, %v1055
      %s1059 = scalar_lea.vmem %s4, 9
      %v1060 = vld [vmem:[%s1059] sm:$0x1]
      %v1062 = vlaneseq
      %v1063 = vshrl.u32 %v1062, 7
      %v1064 = vsub.s32 0, %v1063
      %v1065 = vrot.slane %v1060, %v1064
      %1067 = vmatprep.subr.bf16.mxu0 0
      %1068 = vmatpush1.bf16.msra.mxu0 %v1057
      %1069 = vmatprep.subr.bf16.mxu0 0
      %1070 = vmatpush1.bf16.msra.mxu0 %v1058
      %1071 = vmatprep.subr.bf16.mxu0 0
      %1072 = vmatpush1.bf16.msra.mxu0 0
      %1073 = vmatprep.subr.bf16.mxu0 0
      %1074 = vmatpush1.bf16.msra.mxu0 0
      %1075 = vmatprep.subr.bf16.mxu0 0
      %1076 = vmatpush1.bf16.msra.mxu0 0
      %1077 = vmatprep.subr.bf16.mxu0 0
      %1078 = vmatpush1.bf16.msra.mxu0 0
      %1079 = vmatprep.subr.bf16.mxu0 0
      %1080 = vmatpush1.bf16.msra.mxu0 0
      %1081 = vmatprep.subr.bf16.mxu0 0
      %1082 = vmatpush1.bf16.msra.mxu0 0
      %1083 = vmatprep.subr.bf16.mxu0 0
      %1084 = vmatpush1.bf16.msra.mxu0 0
      %1085 = vmatprep.subr.bf16.mxu0 0
      %1086 = vmatpush1.bf16.msra.mxu0 0
      %1087 = vmatprep.subr.bf16.mxu0 0
      %1088 = vmatpush1.bf16.msra.mxu0 0
      %1089 = vmatprep.subr.bf16.mxu0 0
      %1090 = vmatpush1.bf16.msra.mxu0 0
      %1091 = vmatprep.subr.bf16.mxu0 0
      %1092 = vmatpush1.bf16.msra.mxu0 0
      %1093 = vmatprep.subr.bf16.mxu0 0
      %1094 = vmatpush1.bf16.msra.mxu0 0
      %1095 = vmatprep.subr.bf16.mxu0 0
      %1096 = vmatpush1.bf16.msra.mxu0 0
      %1097 = vmatprep.subr.bf16.mxu0 0
      %1098 = vmatpush1.bf16.msra.mxu0 0
      %1099 = vmatprep.mubr.bf16.mxu0 0
      %1100 = vmatmul.mubr.bf16.gmra.mrb[0].mxu0 %v680
      %v1101 = vpop.f32.mrb[0].mxu0
      %v1102 = vadd.f32 %v1065, %v1101
      %v1103 = vpop.f32.mrb[0].mxu0
      %v1104 = vpop.f32.mrb[0].mxu0
      %v1105 = vpop.f32.mrb[0].mxu0
      %1106 = vdwg.mxu0
      %v1107 = vpack.c.bf16 %v992, %v992
      %v1108 = vpack.c.bf16 %v1047, %v1047
      %v1110 = vsel %vm834, %v1107, 0
      %v1113 = vsel %vm834, %v1108, 0
      %1115 = vmatprep.subr.bf16.mxu0 0
      %1116 = vmatpush1.bf16.xpose.msra.mxu0 %v1113
      %1117 = vmatprep.subr.bf16.mxu0 0
      %1118 = vmatpush1.bf16.xpose.msra.mxu0 0
      %1119 = vmatprep.subr.bf16.mxu0 0
      %1120 = vmatpush1.bf16.xpose.msra.mxu0 0
      %1121 = vmatprep.subr.bf16.mxu0 0
      %1122 = vmatpush1.bf16.xpose.msra.mxu0 0
      %1123 = vmatprep.subr.bf16.mxu0 0
      %1124 = vmatpush1.bf16.xpose.msra.mxu0 0
      %1125 = vmatprep.subr.bf16.mxu0 0
      %1126 = vmatpush1.bf16.xpose.msra.mxu0 0
      %1127 = vmatprep.subr.bf16.mxu0 0
      %1128 = vmatpush1.bf16.xpose.msra.mxu0 0
      %1129 = vmatprep.subr.bf16.mxu0 0
      %1130 = vmatpush1.bf16.xpose.msra.mxu0 0
      %1131 = vmatprep.subr.bf16.mxu0 0
      %1132 = vmatpush1.bf16.xpose.msra.mxu0 0
      %1133 = vmatprep.subr.bf16.mxu0 0
      %1134 = vmatpush1.bf16.xpose.msra.mxu0 0
      %1135 = vmatprep.subr.bf16.mxu0 0
      %1136 = vmatpush1.bf16.xpose.msra.mxu0 0
      %1137 = vmatprep.subr.bf16.mxu0 0
      %1138 = vmatpush1.bf16.xpose.msra.mxu0 0
      %1139 = vmatprep.subr.bf16.mxu0 0
      %1140 = vmatpush1.bf16.xpose.msra.mxu0 0
      %1141 = vmatprep.subr.bf16.mxu0 0
      %1142 = vmatpush1.bf16.xpose.msra.mxu0 0
      %1143 = vmatprep.subr.bf16.mxu0 0
      %1144 = vmatpush1.bf16.xpose.msra.mxu0 0
      %1145 = vmatprep.subr.bf16.mxu0 0
      %1146 = vmatpush1.bf16.xpose.msra.mxu0 0
      %1147 = vmatprep.mubr.bf16.mxu0 0
      %1148 = vmatmul.mubr.bf16.gmra.mrb[0].mxu0 %v1110
      %v1149 = vpop.f32.mrb[0].mxu0
      %v1150 = vadd.f32 0.0, %v1149
      %v1151 = vpop.f32.mrb[0].mxu0
      %v1152 = vpop.f32.mrb[0].mxu0
      %v1153 = vpop.f32.mrb[0].mxu0
      %1154 = vdwg.mxu0
      %v1155 = vmul.f32 %v1150, 0.35355338
      %v1156 = vsel %vm834, %v1155, -inf
      %1157 = vmax.xlane.f32.xlu0 %v1156
      %v1158 = vpop.xlane.xlu0 %1157
      %v1159 = vsub.f32 %v1155, %v1158
      %v1160 = vmul.f32 %v1159, 1.442695
      %v1161 = vpow.pop %v1160
      %v1162 = vsel %vm834, %v1161, 0.0
      %1163 = vadd.xlane.f32.xlu0 %v1162
      %v1164 = vpop.xlane.xlu0 %1163
      %v1165 = vrcp.pop %v1164
      %v1166 = vmul.f32 %v1161, %v1165
      %v1167 = vpack.c.bf16 %v1166, %v1166
      %v1168 = vpack.c.bf16 %v1102, %v1102
      %v1170 = vsel %vm834, %v1167, 0
      %v1173 = vsel %vm898, %v1168, 0
      %1175 = vmatprep.subr.bf16.mxu0 0
      %1176 = vmatpush1.bf16.msra.mxu0 %v1173
      %1177 = vmatprep.subr.bf16.mxu0 0
      %1178 = vmatpush1.bf16.msra.mxu0 0
      %1179 = vmatprep.subr.bf16.mxu0 0
      %1180 = vmatpush1.bf16.msra.mxu0 0
      %1181 = vmatprep.subr.bf16.mxu0 0
      %1182 = vmatpush1.bf16.msra.mxu0 0
      %1183 = vmatprep.subr.bf16.mxu0 0
      %1184 = vmatpush1.bf16.msra.mxu0 0
      %1185 = vmatprep.subr.bf16.mxu0 0
      %1186 = vmatpush1.bf16.msra.mxu0 0
      %1187 = vmatprep.subr.bf16.mxu0 0
      %1188 = vmatpush1.bf16.msra.mxu0 0
      %1189 = vmatprep.subr.bf16.mxu0 0
      %1190 = vmatpush1.bf16.msra.mxu0 0
      %1191 = vmatprep.subr.bf16.mxu0 0
      %1192 = vmatpush1.bf16.msra.mxu0 0
      %1193 = vmatprep.subr.bf16.mxu0 0
      %1194 = vmatpush1.bf16.msra.mxu0 0
      %1195 = vmatprep.subr.bf16.mxu0 0
      %1196 = vmatpush1.bf16.msra.mxu0 0
      %1197 = vmatprep.subr.bf16.mxu0 0
      %1198 = vmatpush1.bf16.msra.mxu0 0
      %1199 = vmatprep.subr.bf16.mxu0 0
      %1200 = vmatpush1.bf16.msra.mxu0 0
      %1201 = vmatprep.subr.bf16.mxu0 0
      %1202 = vmatpush1.bf16.msra.mxu0 0
      %1203 = vmatprep.subr.bf16.mxu0 0
      %1204 = vmatpush1.bf16.msra.mxu0 0
      %1205 = vmatprep.subr.bf16.mxu0 0
      %1206 = vmatpush1.bf16.msra.mxu0 0
      %1207 = vmatprep.mubr.bf16.mxu0 0
      %1208 = vmatmul.mubr.bf16.gmra.mrb[0].mxu0 %v1170
      %v1209 = vpop.f32.mrb[0].mxu0
      %v1210 = vadd.f32 0.0, %v1209
      %v1211 = vpop.f32.mrb[0].mxu0
      %v1212 = vpop.f32.mrb[0].mxu0
      %v1213 = vpop.f32.mrb[0].mxu0
      %1214 = vdwg.mxu0
      %s1215 = scalar_lea.vmem %s3, 64
      %v1216 = vld [vmem:[%s1215] sm:$0xff]
      %v1217 = vld [vmem:[%s1215 + $0x8] sm:$0xff]
      %v1218 = vld [vmem:[%s1215 + $0x10] sm:$0xff]
      %v1219 = vld [vmem:[%s1215 + $0x18] sm:$0xff]
      %v1220 = vpack.c.bf16 %v1217, %v1216
      %v1221 = vpack.c.bf16 %v1219, %v1218
      %s1222 = scalar_lea.vmem %s4, 2
      %v1223 = vld [vmem:[%s1222] sm:$0x1]
      %v1225 = vlaneseq
      %v1226 = vshrl.u32 %v1225, 7
      %v1227 = vsub.s32 0, %v1226
      %v1228 = vrot.slane %v1223, %v1227
      %1230 = vmatprep.subr.bf16.mxu0 0
      %1231 = vmatpush1.bf16.msra.mxu0 %v1220
      %1232 = vmatprep.subr.bf16.mxu0 0
      %1233 = vmatpush1.bf16.msra.mxu0 %v1221
      %1234 = vmatprep.subr.bf16.mxu0 0
      %1235 = vmatpush1.bf16.msra.mxu0 0
      %1236 = vmatprep.subr.bf16.mxu0 0
      %1237 = vmatpush1.bf16.msra.mxu0 0
      %1238 = vmatprep.subr.bf16.mxu0 0
      %1239 = vmatpush1.bf16.msra.mxu0 0
      %1240 = vmatprep.subr.bf16.mxu0 0
      %1241 = vmatpush1.bf16.msra.mxu0 0
      %1242 = vmatprep.subr.bf16.mxu0 0
      %1243 = vmatpush1.bf16.msra.mxu0 0
      %1244 = vmatprep.subr.bf16.mxu0 0
      %1245 = vmatpush1.bf16.msra.mxu0 0
      %1246 = vmatprep.subr.bf16.mxu0 0
      %1247 = vmatpush1.bf16.msra.mxu0 0
      %1248 = vmatprep.subr.bf16.mxu0 0
      %1249 = vmatpush1.bf16.msra.mxu0 0
      %1250 = vmatprep.subr.bf16.mxu0 0
      %1251 = vmatpush1.bf16.msra.mxu0 0
      %1252 = vmatprep.subr.bf16.mxu0 0
      %1253 = vmatpush1.bf16.msra.mxu0 0
      %1254 = vmatprep.subr.bf16.mxu0 0
      %1255 = vmatpush1.bf16.msra.mxu0 0
      %1256 = vmatprep.subr.bf16.mxu0 0
      %1257 = vmatpush1.bf16.msra.mxu0 0
      %1258 = vmatprep.subr.bf16.mxu0 0
      %1259 = vmatpush1.bf16.msra.mxu0 0
      %1260 = vmatprep.subr.bf16.mxu0 0
      %1261 = vmatpush1.bf16.msra.mxu0 0
      %1262 = vmatprep.mubr.bf16.mxu0 0
      %1263 = vmatmul.mubr.bf16.gmra.mrb[0].mxu0 %v680
      %v1264 = vpop.f32.mrb[0].mxu0
      %v1265 = vadd.f32 %v1228, %v1264
      %v1266 = vpop.f32.mrb[0].mxu0
      %v1267 = vpop.f32.mrb[0].mxu0
      %v1268 = vpop.f32.mrb[0].mxu0
      %1269 = vdwg.mxu0
      %s1270 = scalar_lea.vmem %s3, 192
      %v1271 = vld [vmem:[%s1270] sm:$0xff]
      %v1272 = vld [vmem:[%s1270 + $0x8] sm:$0xff]
      %v1273 = vld [vmem:[%s1270 + $0x10] sm:$0xff]
      %v1274 = vld [vmem:[%s1270 + $0x18] sm:$0xff]
      %v1275 = vpack.c.bf16 %v1272, %v1271
      %v1276 = vpack.c.bf16 %v1274, %v1273
      %s1277 = scalar_lea.vmem %s4, 6
      %v1278 = vld [vmem:[%s1277] sm:$0x1]
      %v1280 = vlaneseq
      %v1281 = vshrl.u32 %v1280, 7
      %v1282 = vsub.s32 0, %v1281
      %v1283 = vrot.slane %v1278, %v1282
      %1285 = vmatprep.subr.bf16.mxu0 0
      %1286 = vmatpush1.bf16.msra.mxu0 %v1275
      %1287 = vmatprep.subr.bf16.mxu0 0
      %1288 = vmatpush1.bf16.msra.mxu0 %v1276
      %1289 = vmatprep.subr.bf16.mxu0 0
      %1290 = vmatpush1.bf16.msra.mxu0 0
      %1291 = vmatprep.subr.bf16.mxu0 0
      %1292 = vmatpush1.bf16.msra.mxu0 0
      %1293 = vmatprep.subr.bf16.mxu0 0
      %1294 = vmatpush1.bf16.msra.mxu0 0
      %1295 = vmatprep.subr.bf16.mxu0 0
      %1296 = vmatpush1.bf16.msra.mxu0 0
      %1297 = vmatprep.subr.bf16.mxu0 0
      %1298 = vmatpush1.bf16.msra.mxu0 0
      %1299 = vmatprep.subr.bf16.mxu0 0
      %1300 = vmatpush1.bf16.msra.mxu0 0
      %1301 = vmatprep.subr.bf16.mxu0 0
      %1302 = vmatpush1.bf16.msra.mxu0 0
      %1303 = vmatprep.subr.bf16.mxu0 0
      %1304 = vmatpush1.bf16.msra.mxu0 0
      %1305 = vmatprep.subr.bf16.mxu0 0
      %1306 = vmatpush1.bf16.msra.mxu0 0
      %1307 = vmatprep.subr.bf16.mxu0 0
      %1308 = vmatpush1.bf16.msra.mxu0 0
      %1309 = vmatprep.subr.bf16.mxu0 0
      %1310 = vmatpush1.bf16.msra.mxu0 0
      %1311 = vmatprep.subr.bf16.mxu0 0
      %1312 = vmatpush1.bf16.msra.mxu0 0
      %1313 = vmatprep.subr.bf16.mxu0 0
      %1314 = vmatpush1.bf16.msra.mxu0 0
      %1315 = vmatprep.subr.bf16.mxu0 0
      %1316 = vmatpush1.bf16.msra.mxu0 0
      %1317 = vmatprep.mubr.bf16.mxu0 0
      %1318 = vmatmul.mubr.bf16.gmra.mrb[0].mxu0 %v680
      %v1319 = vpop.f32.mrb[0].mxu0
      %v1320 = vadd.f32 %v1283, %v1319
      %v1321 = vpop.f32.mrb[0].mxu0
      %v1322 = vpop.f32.mrb[0].mxu0
      %v1323 = vpop.f32.mrb[0].mxu0
      %1324 = vdwg.mxu0
      %s1325 = scalar_lea.vmem %s3, 320
      %v1326 = vld [vmem:[%s1325] sm:$0xff]
      %v1327 = vld [vmem:[%s1325 + $0x8] sm:$0xff]
      %v1328 = vld [vmem:[%s1325 + $0x10] sm:$0xff]
      %v1329 = vld [vmem:[%s1325 + $0x18] sm:$0xff]
      %v1330 = vpack.c.bf16 %v1327, %v1326
      %v1331 = vpack.c.bf16 %v1329, %v1328
      %s1332 = scalar_lea.vmem %s4, 10
      %v1333 = vld [vmem:[%s1332] sm:$0x1]
      %v1335 = vlaneseq
      %v1336 = vshrl.u32 %v1335, 7
      %v1337 = vsub.s32 0, %v1336
      %v1338 = vrot.slane %v1333, %v1337
      %1340 = vmatprep.subr.bf16.mxu0 0
      %1341 = vmatpush1.bf16.msra.mxu0 %v1330
      %1342 = vmatprep.subr.bf16.mxu0 0
      %1343 = vmatpush1.bf16.msra.mxu0 %v1331
      %1344 = vmatprep.subr.bf16.mxu0 0
      %1345 = vmatpush1.bf16.msra.mxu0 0
      %1346 = vmatprep.subr.bf16.mxu0 0
      %1347 = vmatpush1.bf16.msra.mxu0 0
      %1348 = vmatprep.subr.bf16.mxu0 0
      %1349 = vmatpush1.bf16.msra.mxu0 0
      %1350 = vmatprep.subr.bf16.mxu0 0
      %1351 = vmatpush1.bf16.msra.mxu0 0
      %1352 = vmatprep.subr.bf16.mxu0 0
      %1353 = vmatpush1.bf16.msra.mxu0 0
      %1354 = vmatprep.subr.bf16.mxu0 0
      %1355 = vmatpush1.bf16.msra.mxu0 0
      %1356 = vmatprep.subr.bf16.mxu0 0
      %1357 = vmatpush1.bf16.msra.mxu0 0
      %1358 = vmatprep.subr.bf16.mxu0 0
      %1359 = vmatpush1.bf16.msra.mxu0 0
      %1360 = vmatprep.subr.bf16.mxu0 0
      %1361 = vmatpush1.bf16.msra.mxu0 0
      %1362 = vmatprep.subr.bf16.mxu0 0
      %1363 = vmatpush1.bf16.msra.mxu0 0
      %1364 = vmatprep.subr.bf16.mxu0 0
      %1365 = vmatpush1.bf16.msra.mxu0 0
      %1366 = vmatprep.subr.bf16.mxu0 0
      %1367 = vmatpush1.bf16.msra.mxu0 0
      %1368 = vmatprep.subr.bf16.mxu0 0
      %1369 = vmatpush1.bf16.msra.mxu0 0
      %1370 = vmatprep.subr.bf16.mxu0 0
      %1371 = vmatpush1.bf16.msra.mxu0 0
      %1372 = vmatprep.mubr.bf16.mxu0 0
      %1373 = vmatmul.mubr.bf16.gmra.mrb[0].mxu0 %v680
      %v1374 = vpop.f32.mrb[0].mxu0
      %v1375 = vadd.f32 %v1338, %v1374
      %v1376 = vpop.f32.mrb[0].mxu0
      %v1377 = vpop.f32.mrb[0].mxu0
      %v1378 = vpop.f32.mrb[0].mxu0
      %1379 = vdwg.mxu0
      %v1380 = vpack.c.bf16 %v1265, %v1265
      %v1381 = vpack.c.bf16 %v1320, %v1320
      %v1383 = vsel %vm834, %v1380, 0
      %v1386 = vsel %vm834, %v1381, 0
      %1388 = vmatprep.subr.bf16.mxu0 0
      %1389 = vmatpush1.bf16.xpose.msra.mxu0 %v1386
      %1390 = vmatprep.subr.bf16.mxu0 0
      %1391 = vmatpush1.bf16.xpose.msra.mxu0 0
      %1392 = vmatprep.subr.bf16.mxu0 0
      %1393 = vmatpush1.bf16.xpose.msra.mxu0 0
      %1394 = vmatprep.subr.bf16.mxu0 0
      %1395 = vmatpush1.bf16.xpose.msra.mxu0 0
      %1396 = vmatprep.subr.bf16.mxu0 0
      %1397 = vmatpush1.bf16.xpose.msra.mxu0 0
      %1398 = vmatprep.subr.bf16.mxu0 0
      %1399 = vmatpush1.bf16.xpose.msra.mxu0 0
      %1400 = vmatprep.subr.bf16.mxu0 0
      %1401 = vmatpush1.bf16.xpose.msra.mxu0 0
      %1402 = vmatprep.subr.bf16.mxu0 0
      %1403 = vmatpush1.bf16.xpose.msra.mxu0 0
      %1404 = vmatprep.subr.bf16.mxu0 0
      %1405 = vmatpush1.bf16.xpose.msra.mxu0 0
      %1406 = vmatprep.subr.bf16.mxu0 0
      %1407 = vmatpush1.bf16.xpose.msra.mxu0 0
      %1408 = vmatprep.subr.bf16.mxu0 0
      %1409 = vmatpush1.bf16.xpose.msra.mxu0 0
      %1410 = vmatprep.subr.bf16.mxu0 0
      %1411 = vmatpush1.bf16.xpose.msra.mxu0 0
      %1412 = vmatprep.subr.bf16.mxu0 0
      %1413 = vmatpush1.bf16.xpose.msra.mxu0 0
      %1414 = vmatprep.subr.bf16.mxu0 0
      %1415 = vmatpush1.bf16.xpose.msra.mxu0 0
      %1416 = vmatprep.subr.bf16.mxu0 0
      %1417 = vmatpush1.bf16.xpose.msra.mxu0 0
      %1418 = vmatprep.subr.bf16.mxu0 0
      %1419 = vmatpush1.bf16.xpose.msra.mxu0 0
      %1420 = vmatprep.mubr.bf16.mxu0 0
      %1421 = vmatmul.mubr.bf16.gmra.mrb[0].mxu0 %v1383
      %v1422 = vpop.f32.mrb[0].mxu0
      %v1423 = vadd.f32 0.0, %v1422
      %v1424 = vpop.f32.mrb[0].mxu0
      %v1425 = vpop.f32.mrb[0].mxu0
      %v1426 = vpop.f32.mrb[0].mxu0
      %1427 = vdwg.mxu0
      %v1428 = vmul.f32 %v1423, 0.35355338
      %v1429 = vsel %vm834, %v1428, -inf
      %1430 = vmax.xlane.f32.xlu0 %v1429
      %v1431 = vpop.xlane.xlu0 %1430
      %v1432 = vsub.f32 %v1428, %v1431
      %v1433 = vmul.f32 %v1432, 1.442695
      %v1434 = vpow.pop %v1433
      %v1435 = vsel %vm834, %v1434, 0.0
      %1436 = vadd.xlane.f32.xlu0 %v1435
      %v1437 = vpop.xlane.xlu0 %1436
      %v1438 = vrcp.pop %v1437
      %v1439 = vmul.f32 %v1434, %v1438
      %v1440 = vpack.c.bf16 %v1439, %v1439
      %v1441 = vpack.c.bf16 %v1375, %v1375
      %v1443 = vsel %vm834, %v1440, 0
      %v1446 = vsel %vm898, %v1441, 0
      %1448 = vmatprep.subr.bf16.mxu0 0
      %1449 = vmatpush1.bf16.msra.mxu0 %v1446
      %1450 = vmatprep.subr.bf16.mxu0 0
      %1451 = vmatpush1.bf16.msra.mxu0 0
      %1452 = vmatprep.subr.bf16.mxu0 0
      %1453 = vmatpush1.bf16.msra.mxu0 0
      %1454 = vmatprep.subr.bf16.mxu0 0
      %1455 = vmatpush1.bf16.msra.mxu0 0
      %1456 = vmatprep.subr.bf16.mxu0 0
      %1457 = vmatpush1.bf16.msra.mxu0 0
      %1458 = vmatprep.subr.bf16.mxu0 0
      %1459 = vmatpush1.bf16.msra.mxu0 0
      %1460 = vmatprep.subr.bf16.mxu0 0
      %1461 = vmatpush1.bf16.msra.mxu0 0
      %1462 = vmatprep.subr.bf16.mxu0 0
      %1463 = vmatpush1.bf16.msra.mxu0 0
      %1464 = vmatprep.subr.bf16.mxu0 0
      %1465 = vmatpush1.bf16.msra.mxu0 0
      %1466 = vmatprep.subr.bf16.mxu0 0
      %1467 = vmatpush1.bf16.msra.mxu0 0
      %1468 = vmatprep.subr.bf16.mxu0 0
      %1469 = vmatpush1.bf16.msra.mxu0 0
      %1470 = vmatprep.subr.bf16.mxu0 0
      %1471 = vmatpush1.bf16.msra.mxu0 0
      %1472 = vmatprep.subr.bf16.mxu0 0
      %1473 = vmatpush1.bf16.msra.mxu0 0
      %1474 = vmatprep.subr.bf16.mxu0 0
      %1475 = vmatpush1.bf16.msra.mxu0 0
      %1476 = vmatprep.subr.bf16.mxu0 0
      %1477 = vmatpush1.bf16.msra.mxu0 0
      %1478 = vmatprep.subr.bf16.mxu0 0
      %1479 = vmatpush1.bf16.msra.mxu0 0
      %1480 = vmatprep.mubr.bf16.mxu0 0
      %1481 = vmatmul.mubr.bf16.gmra.mrb[0].mxu0 %v1443
      %v1482 = vpop.f32.mrb[0].mxu0
      %v1483 = vadd.f32 0.0, %v1482
      %v1484 = vpop.f32.mrb[0].mxu0
      %v1485 = vpop.f32.mrb[0].mxu0
      %v1486 = vpop.f32.mrb[0].mxu0
      %1487 = vdwg.mxu0
      %s1488 = scalar_lea.vmem %s3, 96
      %v1489 = vld [vmem:[%s1488] sm:$0xff]
      %v1490 = vld [vmem:[%s1488 + $0x8] sm:$0xff]
      %v1491 = vld [vmem:[%s1488 + $0x10] sm:$0xff]
      %v1492 = vld [vmem:[%s1488 + $0x18] sm:$0xff]
      %v1493 = vpack.c.bf16 %v1490, %v1489
      %v1494 = vpack.c.bf16 %v1492, %v1491
      %s1495 = scalar_lea.vmem %s4, 3
      %v1496 = vld [vmem:[%s1495] sm:$0x1]
      %v1498 = vlaneseq
      %v1499 = vshrl.u32 %v1498, 7
      %v1500 = vsub.s32 0, %v1499
      %v1501 = vrot.slane %v1496, %v1500
      %1503 = vmatprep.subr.bf16.mxu0 0
      %1504 = vmatpush1.bf16.msra.mxu0 %v1493
      %1505 = vmatprep.subr.bf16.mxu0 0
      %1506 = vmatpush1.bf16.msra.mxu0 %v1494
      %1507 = vmatprep.subr.bf16.mxu0 0
      %1508 = vmatpush1.bf16.msra.mxu0 0
      %1509 = vmatprep.subr.bf16.mxu0 0
      %1510 = vmatpush1.bf16.msra.mxu0 0
      %1511 = vmatprep.subr.bf16.mxu0 0
      %1512 = vmatpush1.bf16.msra.mxu0 0
      %1513 = vmatprep.subr.bf16.mxu0 0
      %1514 = vmatpush1.bf16.msra.mxu0 0
      %1515 = vmatprep.subr.bf16.mxu0 0
      %1516 = vmatpush1.bf16.msra.mxu0 0
      %1517 = vmatprep.subr.bf16.mxu0 0
      %1518 = vmatpush1.bf16.msra.mxu0 0
      %1519 = vmatprep.subr.bf16.mxu0 0
      %1520 = vmatpush1.bf16.msra.mxu0 0
      %1521 = vmatprep.subr.bf16.mxu0 0
      %1522 = vmatpush1.bf16.msra.mxu0 0
      %1523 = vmatprep.subr.bf16.mxu0 0
      %1524 = vmatpush1.bf16.msra.mxu0 0
      %1525 = vmatprep.subr.bf16.mxu0 0
      %1526 = vmatpush1.bf16.msra.mxu0 0
      %1527 = vmatprep.subr.bf16.mxu0 0
      %1528 = vmatpush1.bf16.msra.mxu0 0
      %1529 = vmatprep.subr.bf16.mxu0 0
      %1530 = vmatpush1.bf16.msra.mxu0 0
      %1531 = vmatprep.subr.bf16.mxu0 0
      %1532 = vmatpush1.bf16.msra.mxu0 0
      %1533 = vmatprep.subr.bf16.mxu0 0
      %1534 = vmatpush1.bf16.msra.mxu0 0
      %1535 = vmatprep.mubr.bf16.mxu0 0
      %1536 = vmatmul.mubr.bf16.gmra.mrb[0].mxu0 %v680
      %v1537 = vpop.f32.mrb[0].mxu0
      %v1538 = vadd.f32 %v1501, %v1537
      %v1539 = vpop.f32.mrb[0].mxu0
      %v1540 = vpop.f32.mrb[0].mxu0
      %v1541 = vpop.f32.mrb[0].mxu0
      %1542 = vdwg.mxu0
      %s1543 = scalar_lea.vmem %s3, 224
      %v1544 = vld [vmem:[%s1543] sm:$0xff]
      %v1545 = vld [vmem:[%s1543 + $0x8] sm:$0xff]
      %v1546 = vld [vmem:[%s1543 + $0x10] sm:$0xff]
      %v1547 = vld [vmem:[%s1543 + $0x18] sm:$0xff]
      %v1548 = vpack.c.bf16 %v1545, %v1544
      %v1549 = vpack.c.bf16 %v1547, %v1546
      %s1550 = scalar_lea.vmem %s4, 7
      %v1551 = vld [vmem:[%s1550] sm:$0x1]
      %v1553 = vlaneseq
      %v1554 = vshrl.u32 %v1553, 7
      %v1555 = vsub.s32 0, %v1554
      %v1556 = vrot.slane %v1551, %v1555
      %1558 = vmatprep.subr.bf16.mxu0 0
      %1559 = vmatpush1.bf16.msra.mxu0 %v1548
      %1560 = vmatprep.subr.bf16.mxu0 0
      %1561 = vmatpush1.bf16.msra.mxu0 %v1549
      %1562 = vmatprep.subr.bf16.mxu0 0
      %1563 = vmatpush1.bf16.msra.mxu0 0
      %1564 = vmatprep.subr.bf16.mxu0 0
      %1565 = vmatpush1.bf16.msra.mxu0 0
      %1566 = vmatprep.subr.bf16.mxu0 0
      %1567 = vmatpush1.bf16.msra.mxu0 0
      %1568 = vmatprep.subr.bf16.mxu0 0
      %1569 = vmatpush1.bf16.msra.mxu0 0
      %1570 = vmatprep.subr.bf16.mxu0 0
      %1571 = vmatpush1.bf16.msra.mxu0 0
      %1572 = vmatprep.subr.bf16.mxu0 0
      %1573 = vmatpush1.bf16.msra.mxu0 0
      %1574 = vmatprep.subr.bf16.mxu0 0
      %1575 = vmatpush1.bf16.msra.mxu0 0
      %1576 = vmatprep.subr.bf16.mxu0 0
      %1577 = vmatpush1.bf16.msra.mxu0 0
      %1578 = vmatprep.subr.bf16.mxu0 0
      %1579 = vmatpush1.bf16.msra.mxu0 0
      %1580 = vmatprep.subr.bf16.mxu0 0
      %1581 = vmatpush1.bf16.msra.mxu0 0
      %1582 = vmatprep.subr.bf16.mxu0 0
      %1583 = vmatpush1.bf16.msra.mxu0 0
      %1584 = vmatprep.subr.bf16.mxu0 0
      %1585 = vmatpush1.bf16.msra.mxu0 0
      %1586 = vmatprep.subr.bf16.mxu0 0
      %1587 = vmatpush1.bf16.msra.mxu0 0
      %1588 = vmatprep.subr.bf16.mxu0 0
      %1589 = vmatpush1.bf16.msra.mxu0 0
      %1590 = vmatprep.mubr.bf16.mxu0 0
      %1591 = vmatmul.mubr.bf16.gmra.mrb[0].mxu0 %v680
      %v1592 = vpop.f32.mrb[0].mxu0
      %v1593 = vadd.f32 %v1556, %v1592
      %v1594 = vpop.f32.mrb[0].mxu0
      %v1595 = vpop.f32.mrb[0].mxu0
      %v1596 = vpop.f32.mrb[0].mxu0
      %1597 = vdwg.mxu0
      %s1598 = scalar_lea.vmem %s3, 352
      %v1599 = vld [vmem:[%s1598] sm:$0xff]
      %v1600 = vld [vmem:[%s1598 + $0x8] sm:$0xff]
      %v1601 = vld [vmem:[%s1598 + $0x10] sm:$0xff]
      %v1602 = vld [vmem:[%s1598 + $0x18] sm:$0xff]
      %v1603 = vpack.c.bf16 %v1600, %v1599
      %v1604 = vpack.c.bf16 %v1602, %v1601
      %s1605 = scalar_lea.vmem %s4, 11
      %v1606 = vld [vmem:[%s1605] sm:$0x1]
      %v1608 = vlaneseq
      %v1609 = vshrl.u32 %v1608, 7
      %v1610 = vsub.s32 0, %v1609
      %v1611 = vrot.slane %v1606, %v1610
      %1613 = vmatprep.subr.bf16.mxu0 0
      %1614 = vmatpush1.bf16.msra.mxu0 %v1603
      %1615 = vmatprep.subr.bf16.mxu0 0
      %1616 = vmatpush1.bf16.msra.mxu0 %v1604
      %1617 = vmatprep.subr.bf16.mxu0 0
      %1618 = vmatpush1.bf16.msra.mxu0 0
      %1619 = vmatprep.subr.bf16.mxu0 0
      %1620 = vmatpush1.bf16.msra.mxu0 0
      %1621 = vmatprep.subr.bf16.mxu0 0
      %1622 = vmatpush1.bf16.msra.mxu0 0
      %1623 = vmatprep.subr.bf16.mxu0 0
      %1624 = vmatpush1.bf16.msra.mxu0 0
      %1625 = vmatprep.subr.bf16.mxu0 0
      %1626 = vmatpush1.bf16.msra.mxu0 0
      %1627 = vmatprep.subr.bf16.mxu0 0
      %1628 = vmatpush1.bf16.msra.mxu0 0
      %1629 = vmatprep.subr.bf16.mxu0 0
      %1630 = vmatpush1.bf16.msra.mxu0 0
      %1631 = vmatprep.subr.bf16.mxu0 0
      %1632 = vmatpush1.bf16.msra.mxu0 0
      %1633 = vmatprep.subr.bf16.mxu0 0
      %1634 = vmatpush1.bf16.msra.mxu0 0
      %1635 = vmatprep.subr.bf16.mxu0 0
      %1636 = vmatpush1.bf16.msra.mxu0 0
      %1637 = vmatprep.subr.bf16.mxu0 0
      %1638 = vmatpush1.bf16.msra.mxu0 0
      %1639 = vmatprep.subr.bf16.mxu0 0
      %1640 = vmatpush1.bf16.msra.mxu0 0
      %1641 = vmatprep.subr.bf16.mxu0 0
      %1642 = vmatpush1.bf16.msra.mxu0 0
      %1643 = vmatprep.subr.bf16.mxu0 0
      %1644 = vmatpush1.bf16.msra.mxu0 0
      %1645 = vmatprep.mubr.bf16.mxu0 0
      %1646 = vmatmul.mubr.bf16.gmra.mrb[0].mxu0 %v680
      %v1647 = vpop.f32.mrb[0].mxu0
      %v1648 = vadd.f32 %v1611, %v1647
      %v1649 = vpop.f32.mrb[0].mxu0
      %v1650 = vpop.f32.mrb[0].mxu0
      %v1651 = vpop.f32.mrb[0].mxu0
      %1652 = vdwg.mxu0
      %v1653 = vpack.c.bf16 %v1538, %v1538
      %v1654 = vpack.c.bf16 %v1593, %v1593
      %v1656 = vsel %vm834, %v1653, 0
      %v1659 = vsel %vm834, %v1654, 0
      %1661 = vmatprep.subr.bf16.mxu0 0
      %1662 = vmatpush1.bf16.xpose.msra.mxu0 %v1659
      %1663 = vmatprep.subr.bf16.mxu0 0
      %1664 = vmatpush1.bf16.xpose.msra.mxu0 0
      %1665 = vmatprep.subr.bf16.mxu0 0
      %1666 = vmatpush1.bf16.xpose.msra.mxu0 0
      %1667 = vmatprep.subr.bf16.mxu0 0
      %1668 = vmatpush1.bf16.xpose.msra.mxu0 0
      %1669 = vmatprep.subr.bf16.mxu0 0
      %1670 = vmatpush1.bf16.xpose.msra.mxu0 0
      %1671 = vmatprep.subr.bf16.mxu0 0
      %1672 = vmatpush1.bf16.xpose.msra.mxu0 0
      %1673 = vmatprep.subr.bf16.mxu0 0
      %1674 = vmatpush1.bf16.xpose.msra.mxu0 0
      %1675 = vmatprep.subr.bf16.mxu0 0
      %1676 = vmatpush1.bf16.xpose.msra.mxu0 0
      %1677 = vmatprep.subr.bf16.mxu0 0
      %1678 = vmatpush1.bf16.xpose.msra.mxu0 0
      %1679 = vmatprep.subr.bf16.mxu0 0
      %1680 = vmatpush1.bf16.xpose.msra.mxu0 0
      %1681 = vmatprep.subr.bf16.mxu0 0
      %1682 = vmatpush1.bf16.xpose.msra.mxu0 0
      %1683 = vmatprep.subr.bf16.mxu0 0
      %1684 = vmatpush1.bf16.xpose.msra.mxu0 0
      %1685 = vmatprep.subr.bf16.mxu0 0
      %1686 = vmatpush1.bf16.xpose.msra.mxu0 0
      %1687 = vmatprep.subr.bf16.mxu0 0
      %1688 = vmatpush1.bf16.xpose.msra.mxu0 0
      %1689 = vmatprep.subr.bf16.mxu0 0
      %1690 = vmatpush1.bf16.xpose.msra.mxu0 0
      %1691 = vmatprep.subr.bf16.mxu0 0
      %1692 = vmatpush1.bf16.xpose.msra.mxu0 0
      %1693 = vmatprep.mubr.bf16.mxu0 0
      %1694 = vmatmul.mubr.bf16.gmra.mrb[0].mxu0 %v1656
      %v1695 = vpop.f32.mrb[0].mxu0
      %v1696 = vadd.f32 0.0, %v1695
      %v1697 = vpop.f32.mrb[0].mxu0
      %v1698 = vpop.f32.mrb[0].mxu0
      %v1699 = vpop.f32.mrb[0].mxu0
      %1700 = vdwg.mxu0
      %v1701 = vmul.f32 %v1696, 0.35355338
      %v1702 = vsel %vm834, %v1701, -inf
      %1703 = vmax.xlane.f32.xlu0 %v1702
      %v1704 = vpop.xlane.xlu0 %1703
      %v1705 = vsub.f32 %v1701, %v1704
      %v1706 = vmul.f32 %v1705, 1.442695
      %v1707 = vpow.pop %v1706
      %v1708 = vsel %vm834, %v1707, 0.0
      %1709 = vadd.xlane.f32.xlu0 %v1708
      %v1710 = vpop.xlane.xlu0 %1709
      %v1711 = vrcp.pop %v1710
      %v1712 = vmul.f32 %v1707, %v1711
      %v1713 = vpack.c.bf16 %v1712, %v1712
      %v1714 = vpack.c.bf16 %v1648, %v1648
      %v1716 = vsel %vm834, %v1713, 0
      %v1719 = vsel %vm898, %v1714, 0
      %1721 = vmatprep.subr.bf16.mxu0 0
      %1722 = vmatpush1.bf16.msra.mxu0 %v1719
      %1723 = vmatprep.subr.bf16.mxu0 0
      %1724 = vmatpush1.bf16.msra.mxu0 0
      %1725 = vmatprep.subr.bf16.mxu0 0
      %1726 = vmatpush1.bf16.msra.mxu0 0
      %1727 = vmatprep.subr.bf16.mxu0 0
      %1728 = vmatpush1.bf16.msra.mxu0 0
      %1729 = vmatprep.subr.bf16.mxu0 0
      %1730 = vmatpush1.bf16.msra.mxu0 0
      %1731 = vmatprep.subr.bf16.mxu0 0
      %1732 = vmatpush1.bf16.msra.mxu0 0
      %1733 = vmatprep.subr.bf16.mxu0 0
      %1734 = vmatpush1.bf16.msra.mxu0 0
      %1735 = vmatprep.subr.bf16.mxu0 0
      %1736 = vmatpush1.bf16.msra.mxu0 0
      %1737 = vmatprep.subr.bf16.mxu0 0
      %1738 = vmatpush1.bf16.msra.mxu0 0
      %1739 = vmatprep.subr.bf16.mxu0 0
      %1740 = vmatpush1.bf16.msra.mxu0 0
      %1741 = vmatprep.subr.bf16.mxu0 0
      %1742 = vmatpush1.bf16.msra.mxu0 0
      %1743 = vmatprep.subr.bf16.mxu0 0
      %1744 = vmatpush1.bf16.msra.mxu0 0
      %1745 = vmatprep.subr.bf16.mxu0 0
      %1746 = vmatpush1.bf16.msra.mxu0 0
      %1747 = vmatprep.subr.bf16.mxu0 0
      %1748 = vmatpush1.bf16.msra.mxu0 0
      %1749 = vmatprep.subr.bf16.mxu0 0
      %1750 = vmatpush1.bf16.msra.mxu0 0
      %1751 = vmatprep.subr.bf16.mxu0 0
      %1752 = vmatpush1.bf16.msra.mxu0 0
      %1753 = vmatprep.mubr.bf16.mxu0 0
      %1754 = vmatmul.mubr.bf16.gmra.mrb[0].mxu0 %v1716
      %v1755 = vpop.f32.mrb[0].mxu0
      %v1756 = vadd.f32 0.0, %v1755
      %v1757 = vpop.f32.mrb[0].mxu0
      %v1758 = vpop.f32.mrb[0].mxu0
      %v1759 = vpop.f32.mrb[0].mxu0
      %1760 = vdwg.mxu0
      %1762 = vrot.lane.b32.xlu0 %v1210, 8
      %v1763 = vpop.permute.xlu0 %1762
      %1766 = vrot.lane.b32.xlu0 %v1483, 16
      %v1767 = vpop.permute.xlu0 %1766
      %1770 = vrot.lane.b32.xlu0 %v1756, 24
      %v1771 = vpop.permute.xlu0 %1770
      %v1773 = vsel %vm834, %v937, %v1763
      %vm1774 = vcmask 130048
      %v1775 = vsel %vm1774, %v1773, %v1767
      %vm1776 = vcmask 195584
      %v1777 = vsel %vm1776, %v1775, %v1771
      %v1778 = vld [vmem:[%s5] sm:$0xff]
      %v1779 = vld [vmem:[%s5 + $0x8] sm:$0xff]
      %v1780 = vld [vmem:[%s5 + $0x10] sm:$0xff]
      %v1781 = vld [vmem:[%s5 + $0x18] sm:$0xff]
      %v1782 = vpack.c.bf16 %v1777, %v1777
      %v1783 = vpack.c.bf16 %v1779, %v1778
      %v1784 = vpack.c.bf16 %v1781, %v1780
      %v1785 = vld [vmem:[%s6] sm:$0x1]
      %v1787 = vlaneseq
      %v1788 = vshrl.u32 %v1787, 7
      %v1789 = vsub.s32 0, %v1788
      %v1790 = vrot.slane %v1785, %v1789
      %v1793 = vsel %vm678, %v1782, 0
      %1795 = vmatprep.subr.bf16.mxu0 0
      %1796 = vmatpush1.bf16.msra.mxu0 %v1783
      %1797 = vmatprep.subr.bf16.mxu0 0
      %1798 = vmatpush1.bf16.msra.mxu0 %v1784
      %1799 = vmatprep.subr.bf16.mxu0 0
      %1800 = vmatpush1.bf16.msra.mxu0 0
      %1801 = vmatprep.subr.bf16.mxu0 0
      %1802 = vmatpush1.bf16.msra.mxu0 0
      %1803 = vmatprep.subr.bf16.mxu0 0
      %1804 = vmatpush1.bf16.msra.mxu0 0
      %1805 = vmatprep.subr.bf16.mxu0 0
      %1806 = vmatpush1.bf16.msra.mxu0 0
      %1807 = vmatprep.subr.bf16.mxu0 0
      %1808 = vmatpush1.bf16.msra.mxu0 0
      %1809 = vmatprep.subr.bf16.mxu0 0
      %1810 = vmatpush1.bf16.msra.mxu0 0
      %1811 = vmatprep.subr.bf16.mxu0 0
      %1812 = vmatpush1.bf16.msra.mxu0 0
      %1813 = vmatprep.subr.bf16.mxu0 0
      %1814 = vmatpush1.bf16.msra.mxu0 0
      %1815 = vmatprep.subr.bf16.mxu0 0
      %1816 = vmatpush1.bf16.msra.mxu0 0
      %1817 = vmatprep.subr.bf16.mxu0 0
      %1818 = vmatpush1.bf16.msra.mxu0 0
      %1819 = vmatprep.subr.bf16.mxu0 0
      %1820 = vmatpush1.bf16.msra.mxu0 0
      %1821 = vmatprep.subr.bf16.mxu0 0
      %1822 = vmatpush1.bf16.msra.mxu0 0
      %1823 = vmatprep.subr.bf16.mxu0 0
      %1824 = vmatpush1.bf16.msra.mxu0 0
      %1825 = vmatprep.subr.bf16.mxu0 0
      %1826 = vmatpush1.bf16.msra.mxu0 0
      %1827 = vmatprep.mubr.bf16.mxu0 0
      %1828 = vmatmul.mubr.bf16.gmra.mrb[0].mxu0 %v1793
      %v1829 = vpop.f32.mrb[0].mxu0
      %v1830 = vadd.f32 %v1790, %v1829
      %v1831 = vpop.f32.mrb[0].mxu0
      %v1832 = vpop.f32.mrb[0].mxu0
      %v1833 = vpop.f32.mrb[0].mxu0
      %1834 = vdwg.mxu0
      %v1835 = vadd.f32 %v659, %v1830
      %v1836 = vld [vmem:[%s7] sm:$0x1]
      %v1837 = vld [vmem:[%s8] sm:$0x1]
      %v1838 = vsel %vm678, %v1835, 0.0
      %1839 = vadd.xlane.f32.xlu0 %v1838
      %v1840 = vpop.xlane.xlu0 %1839
      %v1841 = vrcp.pop 32.0
      %v1842 = vmul.f32 %v1840, %v1841
      %v1843 = vsub.f32 %v1835, %v1842
      %v1844 = vmul.f32 %v1843, %v1843
      %v1845 = vsel %vm678, %v1844, 0.0
      %1846 = vadd.xlane.f32.xlu0 %v1845
      %v1847 = vpop.xlane.xlu0 %1846
      %v1848 = vmul.f32 %v1847, %v1841
      %v1849 = vadd.f32 %v1848, 1e-05
      %v1850 = vrsqrt.pop %v1849
      %v1851 = vmul.f32 %v1843, %v1850
      %v1853 = vlaneseq
      %v1854 = vshrl.u32 %v1853, 7
      %v1855 = vsub.s32 0, %v1854
      %v1856 = vrot.slane %v1836, %v1855
      %v1858 = vmul.f32 %v1851, %v1856
      %v1860 = vlaneseq
      %v1861 = vshrl.u32 %v1860, 7
      %v1862 = vsub.s32 0, %v1861
      %v1863 = vrot.slane %v1837, %v1862
      %v1865 = vadd.f32 %v1858, %v1863
      %v1866 = vld [vmem:[%s9] sm:$0xff]
      %v1867 = vld [vmem:[%s9 + $0x8] sm:$0xff]
      %v1868 = vld [vmem:[%s9 + $0x10] sm:$0xff]
      %v1869 = vld [vmem:[%s9 + $0x18] sm:$0xff]
      %v1870 = vpack.c.bf16 %v1865, %v1865
      %v1871 = vpack.c.bf16 %v1867, %v1866
      %v1872 = vpack.c.bf16 %v1869, %v1868
      %v1873 = vld [vmem:[%s10] sm:$0x1]
      %v1875 = vlaneseq
      %v1876 = vshrl.u32 %v1875, 7
      %v1877 = vsub.s32 0, %v1876
      %v1878 = vrot.slane %v1873, %v1877
      %v1881 = vsel %vm678, %v1870, 0
      %1883 = vmatprep.subr.bf16.mxu0 0
      %1884 = vmatpush1.bf16.msra.mxu0 %v1871
      %1885 = vmatprep.subr.bf16.mxu0 0
      %1886 = vmatpush1.bf16.msra.mxu0 %v1872
      %1887 = vmatprep.subr.bf16.mxu0 0
      %1888 = vmatpush1.bf16.msra.mxu0 0
      %1889 = vmatprep.subr.bf16.mxu0 0
      %1890 = vmatpush1.bf16.msra.mxu0 0
      %1891 = vmatprep.subr.bf16.mxu0 0
      %1892 = vmatpush1.bf16.msra.mxu0 0
      %1893 = vmatprep.subr.bf16.mxu0 0
      %1894 = vmatpush1.bf16.msra.mxu0 0
      %1895 = vmatprep.subr.bf16.mxu0 0
      %1896 = vmatpush1.bf16.msra.mxu0 0
      %1897 = vmatprep.subr.bf16.mxu0 0
      %1898 = vmatpush1.bf16.msra.mxu0 0
      %1899 = vmatprep.subr.bf16.mxu0 0
      %1900 = vmatpush1.bf16.msra.mxu0 0
      %1901 = vmatprep.subr.bf16.mxu0 0
      %1902 = vmatpush1.bf16.msra.mxu0 0
      %1903 = vmatprep.subr.bf16.mxu0 0
      %1904 = vmatpush1.bf16.msra.mxu0 0
      %1905 = vmatprep.subr.bf16.mxu0 0
      %1906 = vmatpush1.bf16.msra.mxu0 0
      %1907 = vmatprep.subr.bf16.mxu0 0
      %1908 = vmatpush1.bf16.msra.mxu0 0
      %1909 = vmatprep.subr.bf16.mxu0 0
      %1910 = vmatpush1.bf16.msra.mxu0 0
      %1911 = vmatprep.subr.bf16.mxu0 0
      %1912 = vmatpush1.bf16.msra.mxu0 0
      %1913 = vmatprep.subr.bf16.mxu0 0
      %1914 = vmatpush1.bf16.msra.mxu0 0
      %1915 = vmatprep.mubr.bf16.mxu0 0
      %1916 = vmatmul.mubr.bf16.gmra.mrb[0].mxu0 %v1881
      %v1917 = vpop.f32.mrb[0].mxu0
      %v1918 = vadd.f32 %v1878, %v1917
      %v1919 = vpop.f32.mrb[0].mxu0
      %v1920 = vpop.f32.mrb[0].mxu0
      %v1921 = vpop.f32.mrb[0].mxu0
      %1922 = vdwg.mxu0
      %v1923 = vmax.f32 %v1918, 0.0
      %v1924 = vld [vmem:[%s11] sm:$0xff]
      %v1925 = vld [vmem:[%s11 + $0x8] sm:$0xff]
      %v1926 = vld [vmem:[%s11 + $0x10] sm:$0xff]
      %v1927 = vld [vmem:[%s11 + $0x18] sm:$0xff]
      %v1928 = vpack.c.bf16 %v1923, %v1923
      %v1929 = vpack.c.bf16 %v1925, %v1924
      %v1930 = vpack.c.bf16 %v1927, %v1926
      %v1931 = vld [vmem:[%s12] sm:$0x1]
      %v1933 = vlaneseq
      %v1934 = vshrl.u32 %v1933, 7
      %v1935 = vsub.s32 0, %v1934
      %v1936 = vrot.slane %v1931, %v1935
      %v1939 = vsel %vm678, %v1928, 0
      %1941 = vmatprep.subr.bf16.mxu0 0
      %1942 = vmatpush1.bf16.msra.mxu0 %v1929
      %1943 = vmatprep.subr.bf16.mxu0 0
      %1944 = vmatpush1.bf16.msra.mxu0 %v1930
      %1945 = vmatprep.subr.bf16.mxu0 0
      %1946 = vmatpush1.bf16.msra.mxu0 0
      %1947 = vmatprep.subr.bf16.mxu0 0
      %1948 = vmatpush1.bf16.msra.mxu0 0
      %1949 = vmatprep.subr.bf16.mxu0 0
      %1950 = vmatpush1.bf16.msra.mxu0 0
      %1951 = vmatprep.subr.bf16.mxu0 0
      %1952 = vmatpush1.bf16.msra.mxu0 0
      %1953 = vmatprep.subr.bf16.mxu0 0
      %1954 = vmatpush1.bf16.msra.mxu0 0
      %1955 = vmatprep.subr.bf16.mxu0 0
      %1956 = vmatpush1.bf16.msra.mxu0 0
      %1957 = vmatprep.subr.bf16.mxu0 0
      %1958 = vmatpush1.bf16.msra.mxu0 0
      %1959 = vmatprep.subr.bf16.mxu0 0
      %1960 = vmatpush1.bf16.msra.mxu0 0
      %1961 = vmatprep.subr.bf16.mxu0 0
      %1962 = vmatpush1.bf16.msra.mxu0 0
      %1963 = vmatprep.subr.bf16.mxu0 0
      %1964 = vmatpush1.bf16.msra.mxu0 0
      %1965 = vmatprep.subr.bf16.mxu0 0
      %1966 = vmatpush1.bf16.msra.mxu0 0
      %1967 = vmatprep.subr.bf16.mxu0 0
      %1968 = vmatpush1.bf16.msra.mxu0 0
      %1969 = vmatprep.subr.bf16.mxu0 0
      %1970 = vmatpush1.bf16.msra.mxu0 0
      %1971 = vmatprep.subr.bf16.mxu0 0
      %1972 = vmatpush1.bf16.msra.mxu0 0
      %1973 = vmatprep.mubr.bf16.mxu0 0
      %1974 = vmatmul.mubr.bf16.gmra.mrb[0].mxu0 %v1939
      %v1975 = vpop.f32.mrb[0].mxu0
      %v1976 = vadd.f32 %v1936, %v1975
      %v1977 = vpop.f32.mrb[0].mxu0
      %v1978 = vpop.f32.mrb[0].mxu0
      %v1979 = vpop.f32.mrb[0].mxu0
      %1980 = vdwg.mxu0
      %v1981 = vadd.f32 %v1865, %v1976
      %v1982 = vld [vmem:[%s13] sm:$0x1]
      %v1983 = vld [vmem:[%s14] sm:$0x1]
      %v1984 = vsel %vm678, %v1981, 0.0
      %1985 = vadd.xlane.f32.xlu0 %v1984
      %v1986 = vpop.xlane.xlu0 %1985
      %v1987 = vmul.f32 %v1986, %v1841
      %v1988 = vsub.f32 %v1981, %v1987
      %v1989 = vmul.f32 %v1988, %v1988
      %v1990 = vsel %vm678, %v1989, 0.0
      %1991 = vadd.xlane.f32.xlu0 %v1990
      %v1992 = vpop.xlane.xlu0 %1991
      %v1993 = vmul.f32 %v1992, %v1841
      %v1994 = vadd.f32 %v1993, 1e-05
      %v1995 = vrsqrt.pop %v1994
      %v1996 = vmul.f32 %v1988, %v1995
      %v1998 = vlaneseq
      %v1999 = vshrl.u32 %v1998, 7
      %v2000 = vsub.s32 0, %v1999
      %v2001 = vrot.slane %v1982, %v2000
      %v2003 = vmul.f32 %v1996, %v2001
      %v2005 = vlaneseq
      %v2006 = vshrl.u32 %v2005, 7
      %v2007 = vsub.s32 0, %v2006
      %v2008 = vrot.slane %v1983, %v2007
      %v2010 = vadd.f32 %v2003, %v2008
      %s2011 = scalar_lea.vmem %s3, 384
      %v2012 = vld [vmem:[%s2011] sm:$0xff]
      %v2013 = vld [vmem:[%s2011 + $0x8] sm:$0xff]
      %v2014 = vld [vmem:[%s2011 + $0x10] sm:$0xff]
      %v2015 = vld [vmem:[%s2011 + $0x18] sm:$0xff]
      %v2016 = vpack.c.bf16 %v2010, %v2010
      %v2017 = vpack.c.bf16 %v2013, %v2012
      %v2018 = vpack.c.bf16 %v2015, %v2014
      %s2019 = scalar_lea.vmem %s4, 12
      %v2020 = vld [vmem:[%s2019] sm:$0x1]
      %v2022 = vlaneseq
      %v2023 = vshrl.u32 %v2022, 7
      %v2024 = vsub.s32 0, %v2023
      %v2025 = vrot.slane %v2020, %v2024
      %v2028 = vsel %vm678, %v2016, 0
      %2030 = vmatprep.subr.bf16.mxu0 0
      %2031 = vmatpush1.bf16.msra.mxu0 %v2017
      %2032 = vmatprep.subr.bf16.mxu0 0
      %2033 = vmatpush1.bf16.msra.mxu0 %v2018
      %2034 = vmatprep.subr.bf16.mxu0 0
      %2035 = vmatpush1.bf16.msra.mxu0 0
      %2036 = vmatprep.subr.bf16.mxu0 0
      %2037 = vmatpush1.bf16.msra.mxu0 0
      %2038 = vmatprep.subr.bf16.mxu0 0
      %2039 = vmatpush1.bf16.msra.mxu0 0
      %2040 = vmatprep.subr.bf16.mxu0 0
      %2041 = vmatpush1.bf16.msra.mxu0 0
      %2042 = vmatprep.subr.bf16.mxu0 0
      %2043 = vmatpush1.bf16.msra.mxu0 0
      %2044 = vmatprep.subr.bf16.mxu0 0
      %2045 = vmatpush1.bf16.msra.mxu0 0
      %2046 = vmatprep.subr.bf16.mxu0 0
      %2047 = vmatpush1.bf16.msra.mxu0 0
      %2048 = vmatprep.subr.bf16.mxu0 0
      %2049 = vmatpush1.bf16.msra.mxu0 0
      %2050 = vmatprep.subr.bf16.mxu0 0
      %2051 = vmatpush1.bf16.msra.mxu0 0
      %2052 = vmatprep.subr.bf16.mxu0 0
      %2053 = vmatpush1.bf16.msra.mxu0 0
      %2054 = vmatprep.subr.bf16.mxu0 0
      %2055 = vmatpush1.bf16.msra.mxu0 0
      %2056 = vmatprep.subr.bf16.mxu0 0
      %2057 = vmatpush1.bf16.msra.mxu0 0
      %2058 = vmatprep.subr.bf16.mxu0 0
      %2059 = vmatpush1.bf16.msra.mxu0 0
      %2060 = vmatprep.subr.bf16.mxu0 0
      %2061 = vmatpush1.bf16.msra.mxu0 0
      %2062 = vmatprep.mubr.bf16.mxu0 0
      %2063 = vmatmul.mubr.bf16.gmra.mrb[0].mxu0 %v2028
      %v2064 = vpop.f32.mrb[0].mxu0
      %v2065 = vadd.f32 %v2025, %v2064
      %v2066 = vpop.f32.mrb[0].mxu0
      %v2067 = vpop.f32.mrb[0].mxu0
      %v2068 = vpop.f32.mrb[0].mxu0
      %2069 = vdwg.mxu0
      %s2070 = scalar_lea.vmem %s3, 512
      %v2071 = vld [vmem:[%s2070] sm:$0xff]
      %v2072 = vld [vmem:[%s2070 + $0x8] sm:$0xff]
      %v2073 = vld [vmem:[%s2070 + $0x10] sm:$0xff]
      %v2074 = vld [vmem:[%s2070 + $0x18] sm:$0xff]
      %v2075 = vpack.c.bf16 %v2072, %v2071
      %v2076 = vpack.c.bf16 %v2074, %v2073
      %s2077 = scalar_lea.vmem %s4, 16
      %v2078 = vld [vmem:[%s2077] sm:$0x1]
      %v2080 = vlaneseq
      %v2081 = vshrl.u32 %v2080, 7
      %v2082 = vsub.s32 0, %v2081
      %v2083 = vrot.slane %v2078, %v2082
      %2085 = vmatprep.subr.bf16.mxu0 0
      %2086 = vmatpush1.bf16.msra.mxu0 %v2075
      %2087 = vmatprep.subr.bf16.mxu0 0
      %2088 = vmatpush1.bf16.msra.mxu0 %v2076
      %2089 = vmatprep.subr.bf16.mxu0 0
      %2090 = vmatpush1.bf16.msra.mxu0 0
      %2091 = vmatprep.subr.bf16.mxu0 0
      %2092 = vmatpush1.bf16.msra.mxu0 0
      %2093 = vmatprep.subr.bf16.mxu0 0
      %2094 = vmatpush1.bf16.msra.mxu0 0
      %2095 = vmatprep.subr.bf16.mxu0 0
      %2096 = vmatpush1.bf16.msra.mxu0 0
      %2097 = vmatprep.subr.bf16.mxu0 0
      %2098 = vmatpush1.bf16.msra.mxu0 0
      %2099 = vmatprep.subr.bf16.mxu0 0
      %2100 = vmatpush1.bf16.msra.mxu0 0
      %2101 = vmatprep.subr.bf16.mxu0 0
      %2102 = vmatpush1.bf16.msra.mxu0 0
      %2103 = vmatprep.subr.bf16.mxu0 0
      %2104 = vmatpush1.bf16.msra.mxu0 0
      %2105 = vmatprep.subr.bf16.mxu0 0
      %2106 = vmatpush1.bf16.msra.mxu0 0
      %2107 = vmatprep.subr.bf16.mxu0 0
      %2108 = vmatpush1.bf16.msra.mxu0 0
      %2109 = vmatprep.subr.bf16.mxu0 0
      %2110 = vmatpush1.bf16.msra.mxu0 0
      %2111 = vmatprep.subr.bf16.mxu0 0
      %2112 = vmatpush1.bf16.msra.mxu0 0
      %2113 = vmatprep.subr.bf16.mxu0 0
      %2114 = vmatpush1.bf16.msra.mxu0 0
      %2115 = vmatprep.subr.bf16.mxu0 0
      %2116 = vmatpush1.bf16.msra.mxu0 0
      %2117 = vmatprep.mubr.bf16.mxu0 0
      %2118 = vmatmul.mubr.bf16.gmra.mrb[0].mxu0 %v2028
      %v2119 = vpop.f32.mrb[0].mxu0
      %v2120 = vadd.f32 %v2083, %v2119
      %v2121 = vpop.f32.mrb[0].mxu0
      %v2122 = vpop.f32.mrb[0].mxu0
      %v2123 = vpop.f32.mrb[0].mxu0
      %2124 = vdwg.mxu0
      %s2125 = scalar_lea.vmem %s3, 640
      %v2126 = vld [vmem:[%s2125] sm:$0xff]
      %v2127 = vld [vmem:[%s2125 + $0x8] sm:$0xff]
      %v2128 = vld [vmem:[%s2125 + $0x10] sm:$0xff]
      %v2129 = vld [vmem:[%s2125 + $0x18] sm:$0xff]
      %v2130 = vpack.c.bf16 %v2127, %v2126
      %v2131 = vpack.c.bf16 %v2129, %v2128
      %s2132 = scalar_lea.vmem %s4, 20
      %v2133 = vld [vmem:[%s2132] sm:$0x1]
      %v2135 = vlaneseq
      %v2136 = vshrl.u32 %v2135, 7
      %v2137 = vsub.s32 0, %v2136
      %v2138 = vrot.slane %v2133, %v2137
      %2140 = vmatprep.subr.bf16.mxu0 0
      %2141 = vmatpush1.bf16.msra.mxu0 %v2130
      %2142 = vmatprep.subr.bf16.mxu0 0
      %2143 = vmatpush1.bf16.msra.mxu0 %v2131
      %2144 = vmatprep.subr.bf16.mxu0 0
      %2145 = vmatpush1.bf16.msra.mxu0 0
      %2146 = vmatprep.subr.bf16.mxu0 0
      %2147 = vmatpush1.bf16.msra.mxu0 0
      %2148 = vmatprep.subr.bf16.mxu0 0
      %2149 = vmatpush1.bf16.msra.mxu0 0
      %2150 = vmatprep.subr.bf16.mxu0 0
      %2151 = vmatpush1.bf16.msra.mxu0 0
      %2152 = vmatprep.subr.bf16.mxu0 0
      %2153 = vmatpush1.bf16.msra.mxu0 0
      %2154 = vmatprep.subr.bf16.mxu0 0
      %2155 = vmatpush1.bf16.msra.mxu0 0
      %2156 = vmatprep.subr.bf16.mxu0 0
      %2157 = vmatpush1.bf16.msra.mxu0 0
      %2158 = vmatprep.subr.bf16.mxu0 0
      %2159 = vmatpush1.bf16.msra.mxu0 0
      %2160 = vmatprep.subr.bf16.mxu0 0
      %2161 = vmatpush1.bf16.msra.mxu0 0
      %2162 = vmatprep.subr.bf16.mxu0 0
      %2163 = vmatpush1.bf16.msra.mxu0 0
      %2164 = vmatprep.subr.bf16.mxu0 0
      %2165 = vmatpush1.bf16.msra.mxu0 0
      %2166 = vmatprep.subr.bf16.mxu0 0
      %2167 = vmatpush1.bf16.msra.mxu0 0
      %2168 = vmatprep.subr.bf16.mxu0 0
      %2169 = vmatpush1.bf16.msra.mxu0 0
      %2170 = vmatprep.subr.bf16.mxu0 0
      %2171 = vmatpush1.bf16.msra.mxu0 0
      %2172 = vmatprep.mubr.bf16.mxu0 0
      %2173 = vmatmul.mubr.bf16.gmra.mrb[0].mxu0 %v2028
      %v2174 = vpop.f32.mrb[0].mxu0
      %v2175 = vadd.f32 %v2138, %v2174
      %v2176 = vpop.f32.mrb[0].mxu0
      %v2177 = vpop.f32.mrb[0].mxu0
      %v2178 = vpop.f32.mrb[0].mxu0
      %2179 = vdwg.mxu0
      %v2180 = vpack.c.bf16 %v2065, %v2065
      %v2181 = vpack.c.bf16 %v2120, %v2120
      %v2183 = vsel %vm834, %v2180, 0
      %v2186 = vsel %vm834, %v2181, 0
      %2188 = vmatprep.subr.bf16.mxu0 0
      %2189 = vmatpush1.bf16.xpose.msra.mxu0 %v2186
      %2190 = vmatprep.subr.bf16.mxu0 0
      %2191 = vmatpush1.bf16.xpose.msra.mxu0 0
      %2192 = vmatprep.subr.bf16.mxu0 0
      %2193 = vmatpush1.bf16.xpose.msra.mxu0 0
      %2194 = vmatprep.subr.bf16.mxu0 0
      %2195 = vmatpush1.bf16.xpose.msra.mxu0 0
      %2196 = vmatprep.subr.bf16.mxu0 0
      %2197 = vmatpush1.bf16.xpose.msra.mxu0 0
      %2198 = vmatprep.subr.bf16.mxu0 0
      %2199 = vmatpush1.bf16.xpose.msra.mxu0 0
      %2200 = vmatprep.subr.bf16.mxu0 0
      %2201 = vmatpush1.bf16.xpose.msra.mxu0 0
      %2202 = vmatprep.subr.bf16.mxu0 0
      %2203 = vmatpush1.bf16.xpose.msra.mxu0 0
      %2204 = vmatprep.subr.bf16.mxu0 0
      %2205 = vmatpush1.bf16.xpose.msra.mxu0 0
      %2206 = vmatprep.subr.bf16.mxu0 0
      %2207 = vmatpush1.bf16.xpose.msra.mxu0 0
      %2208 = vmatprep.subr.bf16.mxu0 0
      %2209 = vmatpush1.bf16.xpose.msra.mxu0 0
      %2210 = vmatprep.subr.bf16.mxu0 0
      %2211 = vmatpush1.bf16.xpose.msra.mxu0 0
      %2212 = vmatprep.subr.bf16.mxu0 0
      %2213 = vmatpush1.bf16.xpose.msra.mxu0 0
      %2214 = vmatprep.subr.bf16.mxu0 0
      %2215 = vmatpush1.bf16.xpose.msra.mxu0 0
      %2216 = vmatprep.subr.bf16.mxu0 0
      %2217 = vmatpush1.bf16.xpose.msra.mxu0 0
      %2218 = vmatprep.subr.bf16.mxu0 0
      %2219 = vmatpush1.bf16.xpose.msra.mxu0 0
      %2220 = vmatprep.mubr.bf16.mxu0 0
      %2221 = vmatmul.mubr.bf16.gmra.mrb[0].mxu0 %v2183
      %v2222 = vpop.f32.mrb[0].mxu0
      %v2223 = vadd.f32 0.0, %v2222
      %v2224 = vpop.f32.mrb[0].mxu0
      %v2225 = vpop.f32.mrb[0].mxu0
      %v2226 = vpop.f32.mrb[0].mxu0
      %2227 = vdwg.mxu0
      %v2228 = vmul.f32 %v2223, 0.35355338
      %v2229 = vsel %vm834, %v2228, -inf
      %2230 = vmax.xlane.f32.xlu0 %v2229
      %v2231 = vpop.xlane.xlu0 %2230
      %v2232 = vsub.f32 %v2228, %v2231
      %v2233 = vmul.f32 %v2232, 1.442695
      %v2234 = vpow.pop %v2233
      %v2235 = vsel %vm834, %v2234, 0.0
      %2236 = vadd.xlane.f32.xlu0 %v2235
      %v2237 = vpop.xlane.xlu0 %2236
      %v2238 = vrcp.pop %v2237
      %v2239 = vmul.f32 %v2234, %v2238
      %v2240 = vpack.c.bf16 %v2239, %v2239
      %v2241 = vpack.c.bf16 %v2175, %v2175
      %v2243 = vsel %vm834, %v2240, 0
      %v2246 = vsel %vm898, %v2241, 0
      %2248 = vmatprep.subr.bf16.mxu0 0
      %2249 = vmatpush1.bf16.msra.mxu0 %v2246
      %2250 = vmatprep.subr.bf16.mxu0 0
      %2251 = vmatpush1.bf16.msra.mxu0 0
      %2252 = vmatprep.subr.bf16.mxu0 0
      %2253 = vmatpush1.bf16.msra.mxu0 0
      %2254 = vmatprep.subr.bf16.mxu0 0
      %2255 = vmatpush1.bf16.msra.mxu0 0
      %2256 = vmatprep.subr.bf16.mxu0 0
      %2257 = vmatpush1.bf16.msra.mxu0 0
      %2258 = vmatprep.subr.bf16.mxu0 0
      %2259 = vmatpush1.bf16.msra.mxu0 0
      %2260 = vmatprep.subr.bf16.mxu0 0
      %2261 = vmatpush1.bf16.msra.mxu0 0
      %2262 = vmatprep.subr.bf16.mxu0 0
      %2263 = vmatpush1.bf16.msra.mxu0 0
      %2264 = vmatprep.subr.bf16.mxu0 0
      %2265 = vmatpush1.bf16.msra.mxu0 0
      %2266 = vmatprep.subr.bf16.mxu0 0
      %2267 = vmatpush1.bf16.msra.mxu0 0
      %2268 = vmatprep.subr.bf16.mxu0 0
      %2269 = vmatpush1.bf16.msra.mxu0 0
      %2270 = vmatprep.subr.bf16.mxu0 0
      %2271 = vmatpush1.bf16.msra.mxu0 0
      %2272 = vmatprep.subr.bf16.mxu0 0
      %2273 = vmatpush1.bf16.msra.mxu0 0
      %2274 = vmatprep.subr.bf16.mxu0 0
      %2275 = vmatpush1.bf16.msra.mxu0 0
      %2276 = vmatprep.subr.bf16.mxu0 0
      %2277 = vmatpush1.bf16.msra.mxu0 0
      %2278 = vmatprep.subr.bf16.mxu0 0
      %2279 = vmatpush1.bf16.msra.mxu0 0
      %2280 = vmatprep.mubr.bf16.mxu0 0
      %2281 = vmatmul.mubr.bf16.gmra.mrb[0].mxu0 %v2243
      %v2282 = vpop.f32.mrb[0].mxu0
      %v2283 = vadd.f32 0.0, %v2282
      %v2284 = vpop.f32.mrb[0].mxu0
      %v2285 = vpop.f32.mrb[0].mxu0
      %v2286 = vpop.f32.mrb[0].mxu0
      %2287 = vdwg.mxu0
      %s2288 = scalar_lea.vmem %s3, 416
      %v2289 = vld [vmem:[%s2288] sm:$0xff]
      %v2290 = vld [vmem:[%s2288 + $0x8] sm:$0xff]
      %v2291 = vld [vmem:[%s2288 + $0x10] sm:$0xff]
      %v2292 = vld [vmem:[%s2288 + $0x18] sm:$0xff]
      %v2293 = vpack.c.bf16 %v2290, %v2289
      %v2294 = vpack.c.bf16 %v2292, %v2291
      %s2295 = scalar_lea.vmem %s4, 13
      %v2296 = vld [vmem:[%s2295] sm:$0x1]
      %v2298 = vlaneseq
      %v2299 = vshrl.u32 %v2298, 7
      %v2300 = vsub.s32 0, %v2299
      %v2301 = vrot.slane %v2296, %v2300
      %2303 = vmatprep.subr.bf16.mxu0 0
      %2304 = vmatpush1.bf16.msra.mxu0 %v2293
      %2305 = vmatprep.subr.bf16.mxu0 0
      %2306 = vmatpush1.bf16.msra.mxu0 %v2294
      %2307 = vmatprep.subr.bf16.mxu0 0
      %2308 = vmatpush1.bf16.msra.mxu0 0
      %2309 = vmatprep.subr.bf16.mxu0 0
      %2310 = vmatpush1.bf16.msra.mxu0 0
      %2311 = vmatprep.subr.bf16.mxu0 0
      %2312 = vmatpush1.bf16.msra.mxu0 0
      %2313 = vmatprep.subr.bf16.mxu0 0
      %2314 = vmatpush1.bf16.msra.mxu0 0
      %2315 = vmatprep.subr.bf16.mxu0 0
      %2316 = vmatpush1.bf16.msra.mxu0 0
      %2317 = vmatprep.subr.bf16.mxu0 0
      %2318 = vmatpush1.bf16.msra.mxu0 0
      %2319 = vmatprep.subr.bf16.mxu0 0
      %2320 = vmatpush1.bf16.msra.mxu0 0
      %2321 = vmatprep.subr.bf16.mxu0 0
      %2322 = vmatpush1.bf16.msra.mxu0 0
      %2323 = vmatprep.subr.bf16.mxu0 0
      %2324 = vmatpush1.bf16.msra.mxu0 0
      %2325 = vmatprep.subr.bf16.mxu0 0
      %2326 = vmatpush1.bf16.msra.mxu0 0
      %2327 = vmatprep.subr.bf16.mxu0 0
      %2328 = vmatpush1.bf16.msra.mxu0 0
      %2329 = vmatprep.subr.bf16.mxu0 0
      %2330 = vmatpush1.bf16.msra.mxu0 0
      %2331 = vmatprep.subr.bf16.mxu0 0
      %2332 = vmatpush1.bf16.msra.mxu0 0
      %2333 = vmatprep.subr.bf16.mxu0 0
      %2334 = vmatpush1.bf16.msra.mxu0 0
      %2335 = vmatprep.mubr.bf16.mxu0 0
      %2336 = vmatmul.mubr.bf16.gmra.mrb[0].mxu0 %v2028
      %v2337 = vpop.f32.mrb[0].mxu0
      %v2338 = vadd.f32 %v2301, %v2337
      %v2339 = vpop.f32.mrb[0].mxu0
      %v2340 = vpop.f32.mrb[0].mxu0
      %v2341 = vpop.f32.mrb[0].mxu0
      %2342 = vdwg.mxu0
      %s2343 = scalar_lea.vmem %s3, 544
      %v2344 = vld [vmem:[%s2343] sm:$0xff]
      %v2345 = vld [vmem:[%s2343 + $0x8] sm:$0xff]
      %v2346 = vld [vmem:[%s2343 + $0x10] sm:$0xff]
      %v2347 = vld [vmem:[%s2343 + $0x18] sm:$0xff]
      %v2348 = vpack.c.bf16 %v2345, %v2344
      %v2349 = vpack.c.bf16 %v2347, %v2346
      %s2350 = scalar_lea.vmem %s4, 17
      %v2351 = vld [vmem:[%s2350] sm:$0x1]
      %v2353 = vlaneseq
      %v2354 = vshrl.u32 %v2353, 7
      %v2355 = vsub.s32 0, %v2354
      %v2356 = vrot.slane %v2351, %v2355
      %2358 = vmatprep.subr.bf16.mxu0 0
      %2359 = vmatpush1.bf16.msra.mxu0 %v2348
      %2360 = vmatprep.subr.bf16.mxu0 0
      %2361 = vmatpush1.bf16.msra.mxu0 %v2349
      %2362 = vmatprep.subr.bf16.mxu0 0
      %2363 = vmatpush1.bf16.msra.mxu0 0
      %2364 = vmatprep.subr.bf16.mxu0 0
      %2365 = vmatpush1.bf16.msra.mxu0 0
      %2366 = vmatprep.subr.bf16.mxu0 0
      %2367 = vmatpush1.bf16.msra.mxu0 0
      %2368 = vmatprep.subr.bf16.mxu0 0
      %2369 = vmatpush1.bf16.msra.mxu0 0
      %2370 = vmatprep.subr.bf16.mxu0 0
      %2371 = vmatpush1.bf16.msra.mxu0 0
      %2372 = vmatprep.subr.bf16.mxu0 0
      %2373 = vmatpush1.bf16.msra.mxu0 0
      %2374 = vmatprep.subr.bf16.mxu0 0
      %2375 = vmatpush1.bf16.msra.mxu0 0
      %2376 = vmatprep.subr.bf16.mxu0 0
      %2377 = vmatpush1.bf16.msra.mxu0 0
      %2378 = vmatprep.subr.bf16.mxu0 0
      %2379 = vmatpush1.bf16.msra.mxu0 0
      %2380 = vmatprep.subr.bf16.mxu0 0
      %2381 = vmatpush1.bf16.msra.mxu0 0
      %2382 = vmatprep.subr.bf16.mxu0 0
      %2383 = vmatpush1.bf16.msra.mxu0 0
      %2384 = vmatprep.subr.bf16.mxu0 0
      %2385 = vmatpush1.bf16.msra.mxu0 0
      %2386 = vmatprep.subr.bf16.mxu0 0
      %2387 = vmatpush1.bf16.msra.mxu0 0
      %2388 = vmatprep.subr.bf16.mxu0 0
      %2389 = vmatpush1.bf16.msra.mxu0 0
      %2390 = vmatprep.mubr.bf16.mxu0 0
      %2391 = vmatmul.mubr.bf16.gmra.mrb[0].mxu0 %v2028
      %v2392 = vpop.f32.mrb[0].mxu0
      %v2393 = vadd.f32 %v2356, %v2392
      %v2394 = vpop.f32.mrb[0].mxu0
      %v2395 = vpop.f32.mrb[0].mxu0
      %v2396 = vpop.f32.mrb[0].mxu0
      %2397 = vdwg.mxu0
      %s2398 = scalar_lea.vmem %s3, 672
      %v2399 = vld [vmem:[%s2398] sm:$0xff]
      %v2400 = vld [vmem:[%s2398 + $0x8] sm:$0xff]
      %v2401 = vld [vmem:[%s2398 + $0x10] sm:$0xff]
      %v2402 = vld [vmem:[%s2398 + $0x18] sm:$0xff]
      %v2403 = vpack.c.bf16 %v2400, %v2399
      %v2404 = vpack.c.bf16 %v2402, %v2401
      %s2405 = scalar_lea.vmem %s4, 21
      %v2406 = vld [vmem:[%s2405] sm:$0x1]
      %v2408 = vlaneseq
      %v2409 = vshrl.u32 %v2408, 7
      %v2410 = vsub.s32 0, %v2409
      %v2411 = vrot.slane %v2406, %v2410
      %2413 = vmatprep.subr.bf16.mxu0 0
      %2414 = vmatpush1.bf16.msra.mxu0 %v2403
      %2415 = vmatprep.subr.bf16.mxu0 0
      %2416 = vmatpush1.bf16.msra.mxu0 %v2404
      %2417 = vmatprep.subr.bf16.mxu0 0
      %2418 = vmatpush1.bf16.msra.mxu0 0
      %2419 = vmatprep.subr.bf16.mxu0 0
      %2420 = vmatpush1.bf16.msra.mxu0 0
      %2421 = vmatprep.subr.bf16.mxu0 0
      %2422 = vmatpush1.bf16.msra.mxu0 0
      %2423 = vmatprep.subr.bf16.mxu0 0
      %2424 = vmatpush1.bf16.msra.mxu0 0
      %2425 = vmatprep.subr.bf16.mxu0 0
      %2426 = vmatpush1.bf16.msra.mxu0 0
      %2427 = vmatprep.subr.bf16.mxu0 0
      %2428 = vmatpush1.bf16.msra.mxu0 0
      %2429 = vmatprep.subr.bf16.mxu0 0
      %2430 = vmatpush1.bf16.msra.mxu0 0
      %2431 = vmatprep.subr.bf16.mxu0 0
      %2432 = vmatpush1.bf16.msra.mxu0 0
      %2433 = vmatprep.subr.bf16.mxu0 0
      %2434 = vmatpush1.bf16.msra.mxu0 0
      %2435 = vmatprep.subr.bf16.mxu0 0
      %2436 = vmatpush1.bf16.msra.mxu0 0
      %2437 = vmatprep.subr.bf16.mxu0 0
      %2438 = vmatpush1.bf16.msra.mxu0 0
      %2439 = vmatprep.subr.bf16.mxu0 0
      %2440 = vmatpush1.bf16.msra.mxu0 0
      %2441 = vmatprep.subr.bf16.mxu0 0
      %2442 = vmatpush1.bf16.msra.mxu0 0
      %2443 = vmatprep.subr.bf16.mxu0 0
      %2444 = vmatpush1.bf16.msra.mxu0 0
      %2445 = vmatprep.mubr.bf16.mxu0 0
      %2446 = vmatmul.mubr.bf16.gmra.mrb[0].mxu0 %v2028
      %v2447 = vpop.f32.mrb[0].mxu0
      %v2448 = vadd.f32 %v2411, %v2447
      %v2449 = vpop.f32.mrb[0].mxu0
      %v2450 = vpop.f32.mrb[0].mxu0
      %v2451 = vpop.f32.mrb[0].mxu0
      %2452 = vdwg.mxu0
      %v2453 = vpack.c.bf16 %v2338, %v2338
      %v2454 = vpack.c.bf16 %v2393, %v2393
      %v2456 = vsel %vm834, %v2453, 0
      %v2459 = vsel %vm834, %v2454, 0
      %2461 = vmatprep.subr.bf16.mxu0 0
      %2462 = vmatpush1.bf16.xpose.msra.mxu0 %v2459
      %2463 = vmatprep.subr.bf16.mxu0 0
      %2464 = vmatpush1.bf16.xpose.msra.mxu0 0
      %2465 = vmatprep.subr.bf16.mxu0 0
      %2466 = vmatpush1.bf16.xpose.msra.mxu0 0
      %2467 = vmatprep.subr.bf16.mxu0 0
      %2468 = vmatpush1.bf16.xpose.msra.mxu0 0
      %2469 = vmatprep.subr.bf16.mxu0 0
      %2470 = vmatpush1.bf16.xpose.msra.mxu0 0
      %2471 = vmatprep.subr.bf16.mxu0 0
      %2472 = vmatpush1.bf16.xpose.msra.mxu0 0
      %2473 = vmatprep.subr.bf16.mxu0 0
      %2474 = vmatpush1.bf16.xpose.msra.mxu0 0
      %2475 = vmatprep.subr.bf16.mxu0 0
      %2476 = vmatpush1.bf16.xpose.msra.mxu0 0
      %2477 = vmatprep.subr.bf16.mxu0 0
      %2478 = vmatpush1.bf16.xpose.msra.mxu0 0
      %2479 = vmatprep.subr.bf16.mxu0 0
      %2480 = vmatpush1.bf16.xpose.msra.mxu0 0
      %2481 = vmatprep.subr.bf16.mxu0 0
      %2482 = vmatpush1.bf16.xpose.msra.mxu0 0
      %2483 = vmatprep.subr.bf16.mxu0 0
      %2484 = vmatpush1.bf16.xpose.msra.mxu0 0
      %2485 = vmatprep.subr.bf16.mxu0 0
      %2486 = vmatpush1.bf16.xpose.msra.mxu0 0
      %2487 = vmatprep.subr.bf16.mxu0 0
      %2488 = vmatpush1.bf16.xpose.msra.mxu0 0
      %2489 = vmatprep.subr.bf16.mxu0 0
      %2490 = vmatpush1.bf16.xpose.msra.mxu0 0
      %2491 = vmatprep.subr.bf16.mxu0 0
      %2492 = vmatpush1.bf16.xpose.msra.mxu0 0
      %2493 = vmatprep.mubr.bf16.mxu0 0
      %2494 = vmatmul.mubr.bf16.gmra.mrb[0].mxu0 %v2456
      %v2495 = vpop.f32.mrb[0].mxu0
      %v2496 = vadd.f32 0.0, %v2495
      %v2497 = vpop.f32.mrb[0].mxu0
      %v2498 = vpop.f32.mrb[0].mxu0
      %v2499 = vpop.f32.mrb[0].mxu0
      %2500 = vdwg.mxu0
      %v2501 = vmul.f32 %v2496, 0.35355338
      %v2502 = vsel %vm834, %v2501, -inf
      %2503 = vmax.xlane.f32.xlu0 %v2502
      %v2504 = vpop.xlane.xlu0 %2503
      %v2505 = vsub.f32 %v2501, %v2504
      %v2506 = vmul.f32 %v2505, 1.442695
      %v2507 = vpow.pop %v2506
      %v2508 = vsel %vm834, %v2507, 0.0
      %2509 = vadd.xlane.f32.xlu0 %v2508
      %v2510 = vpop.xlane.xlu0 %2509
      %v2511 = vrcp.pop %v2510
      %v2512 = vmul.f32 %v2507, %v2511
      %v2513 = vpack.c.bf16 %v2512, %v2512
      %v2514 = vpack.c.bf16 %v2448, %v2448
      %v2516 = vsel %vm834, %v2513, 0
      %v2519 = vsel %vm898, %v2514, 0
      %2521 = vmatprep.subr.bf16.mxu0 0
      %2522 = vmatpush1.bf16.msra.mxu0 %v2519
      %2523 = vmatprep.subr.bf16.mxu0 0
      %2524 = vmatpush1.bf16.msra.mxu0 0
      %2525 = vmatprep.subr.bf16.mxu0 0
      %2526 = vmatpush1.bf16.msra.mxu0 0
      %2527 = vmatprep.subr.bf16.mxu0 0
      %2528 = vmatpush1.bf16.msra.mxu0 0
      %2529 = vmatprep.subr.bf16.mxu0 0
      %2530 = vmatpush1.bf16.msra.mxu0 0
      %2531 = vmatprep.subr.bf16.mxu0 0
      %2532 = vmatpush1.bf16.msra.mxu0 0
      %2533 = vmatprep.subr.bf16.mxu0 0
      %2534 = vmatpush1.bf16.msra.mxu0 0
      %2535 = vmatprep.subr.bf16.mxu0 0
      %2536 = vmatpush1.bf16.msra.mxu0 0
      %2537 = vmatprep.subr.bf16.mxu0 0
      %2538 = vmatpush1.bf16.msra.mxu0 0
      %2539 = vmatprep.subr.bf16.mxu0 0
      %2540 = vmatpush1.bf16.msra.mxu0 0
      %2541 = vmatprep.subr.bf16.mxu0 0
      %2542 = vmatpush1.bf16.msra.mxu0 0
      %2543 = vmatprep.subr.bf16.mxu0 0
      %2544 = vmatpush1.bf16.msra.mxu0 0
      %2545 = vmatprep.subr.bf16.mxu0 0
      %2546 = vmatpush1.bf16.msra.mxu0 0
      %2547 = vmatprep.subr.bf16.mxu0 0
      %2548 = vmatpush1.bf16.msra.mxu0 0
      %2549 = vmatprep.subr.bf16.mxu0 0
      %2550 = vmatpush1.bf16.msra.mxu0 0
      %2551 = vmatprep.subr.bf16.mxu0 0
      %2552 = vmatpush1.bf16.msra.mxu0 0
      %2553 = vmatprep.mubr.bf16.mxu0 0
      %2554 = vmatmul.mubr.bf16.gmra.mrb[0].mxu0 %v2516
      %v2555 = vpop.f32.mrb[0].mxu0
      %v2556 = vadd.f32 0.0, %v2555
      %v2557 = vpop.f32.mrb[0].mxu0
      %v2558 = vpop.f32.mrb[0].mxu0
      %v2559 = vpop.f32.mrb[0].mxu0
      %2560 = vdwg.mxu0
      %s2561 = scalar_lea.vmem %s3, 448
      %v2562 = vld [vmem:[%s2561] sm:$0xff]
      %v2563 = vld [vmem:[%s2561 + $0x8] sm:$0xff]
      %v2564 = vld [vmem:[%s2561 + $0x10] sm:$0xff]
      %v2565 = vld [vmem:[%s2561 + $0x18] sm:$0xff]
      %v2566 = vpack.c.bf16 %v2563, %v2562
      %v2567 = vpack.c.bf16 %v2565, %v2564
      %s2568 = scalar_lea.vmem %s4, 14
      %v2569 = vld [vmem:[%s2568] sm:$0x1]
      %v2571 = vlaneseq
      %v2572 = vshrl.u32 %v2571, 7
      %v2573 = vsub.s32 0, %v2572
      %v2574 = vrot.slane %v2569, %v2573
      %2576 = vmatprep.subr.bf16.mxu0 0
      %2577 = vmatpush1.bf16.msra.mxu0 %v2566
      %2578 = vmatprep.subr.bf16.mxu0 0
      %2579 = vmatpush1.bf16.msra.mxu0 %v2567
      %2580 = vmatprep.subr.bf16.mxu0 0
      %2581 = vmatpush1.bf16.msra.mxu0 0
      %2582 = vmatprep.subr.bf16.mxu0 0
      %2583 = vmatpush1.bf16.msra.mxu0 0
      %2584 = vmatprep.subr.bf16.mxu0 0
      %2585 = vmatpush1.bf16.msra.mxu0 0
      %2586 = vmatprep.subr.bf16.mxu0 0
      %2587 = vmatpush1.bf16.msra.mxu0 0
      %2588 = vmatprep.subr.bf16.mxu0 0
      %2589 = vmatpush1.bf16.msra.mxu0 0
      %2590 = vmatprep.subr.bf16.mxu0 0
      %2591 = vmatpush1.bf16.msra.mxu0 0
      %2592 = vmatprep.subr.bf16.mxu0 0
      %2593 = vmatpush1.bf16.msra.mxu0 0
      %2594 = vmatprep.subr.bf16.mxu0 0
      %2595 = vmatpush1.bf16.msra.mxu0 0
      %2596 = vmatprep.subr.bf16.mxu0 0
      %2597 = vmatpush1.bf16.msra.mxu0 0
      %2598 = vmatprep.subr.bf16.mxu0 0
      %2599 = vmatpush1.bf16.msra.mxu0 0
      %2600 = vmatprep.subr.bf16.mxu0 0
      %2601 = vmatpush1.bf16.msra.mxu0 0
      %2602 = vmatprep.subr.bf16.mxu0 0
      %2603 = vmatpush1.bf16.msra.mxu0 0
      %2604 = vmatprep.subr.bf16.mxu0 0
      %2605 = vmatpush1.bf16.msra.mxu0 0
      %2606 = vmatprep.subr.bf16.mxu0 0
      %2607 = vmatpush1.bf16.msra.mxu0 0
      %2608 = vmatprep.mubr.bf16.mxu0 0
      %2609 = vmatmul.mubr.bf16.gmra.mrb[0].mxu0 %v2028
      %v2610 = vpop.f32.mrb[0].mxu0
      %v2611 = vadd.f32 %v2574, %v2610
      %v2612 = vpop.f32.mrb[0].mxu0
      %v2613 = vpop.f32.mrb[0].mxu0
      %v2614 = vpop.f32.mrb[0].mxu0
      %2615 = vdwg.mxu0
      %s2616 = scalar_lea.vmem %s3, 576
      %v2617 = vld [vmem:[%s2616] sm:$0xff]
      %v2618 = vld [vmem:[%s2616 + $0x8] sm:$0xff]
      %v2619 = vld [vmem:[%s2616 + $0x10] sm:$0xff]
      %v2620 = vld [vmem:[%s2616 + $0x18] sm:$0xff]
      %v2621 = vpack.c.bf16 %v2618, %v2617
      %v2622 = vpack.c.bf16 %v2620, %v2619
      %s2623 = scalar_lea.vmem %s4, 18
      %v2624 = vld [vmem:[%s2623] sm:$0x1]
      %v2626 = vlaneseq
      %v2627 = vshrl.u32 %v2626, 7
      %v2628 = vsub.s32 0, %v2627
      %v2629 = vrot.slane %v2624, %v2628
      %2631 = vmatprep.subr.bf16.mxu0 0
      %2632 = vmatpush1.bf16.msra.mxu0 %v2621
      %2633 = vmatprep.subr.bf16.mxu0 0
      %2634 = vmatpush1.bf16.msra.mxu0 %v2622
      %2635 = vmatprep.subr.bf16.mxu0 0
      %2636 = vmatpush1.bf16.msra.mxu0 0
      %2637 = vmatprep.subr.bf16.mxu0 0
      %2638 = vmatpush1.bf16.msra.mxu0 0
      %2639 = vmatprep.subr.bf16.mxu0 0
      %2640 = vmatpush1.bf16.msra.mxu0 0
      %2641 = vmatprep.subr.bf16.mxu0 0
      %2642 = vmatpush1.bf16.msra.mxu0 0
      %2643 = vmatprep.subr.bf16.mxu0 0
      %2644 = vmatpush1.bf16.msra.mxu0 0
      %2645 = vmatprep.subr.bf16.mxu0 0
      %2646 = vmatpush1.bf16.msra.mxu0 0
      %2647 = vmatprep.subr.bf16.mxu0 0
      %2648 = vmatpush1.bf16.msra.mxu0 0
      %2649 = vmatprep.subr.bf16.mxu0 0
      %2650 = vmatpush1.bf16.msra.mxu0 0
      %2651 = vmatprep.subr.bf16.mxu0 0
      %2652 = vmatpush1.bf16.msra.mxu0 0
      %2653 = vmatprep.subr.bf16.mxu0 0
      %2654 = vmatpush1.bf16.msra.mxu0 0
      %2655 = vmatprep.subr.bf16.mxu0 0
      %2656 = vmatpush1.bf16.msra.mxu0 0
      %2657 = vmatprep.subr.bf16.mxu0 0
      %2658 = vmatpush1.bf16.msra.mxu0 0
      %2659 = vmatprep.subr.bf16.mxu0 0
      %2660 = vmatpush1.bf16.msra.mxu0 0
      %2661 = vmatprep.subr.bf16.mxu0 0
      %2662 = vmatpush1.bf16.msra.mxu0 0
      %2663 = vmatprep.mubr.bf16.mxu0 0
      %2664 = vmatmul.mubr.bf16.gmra.mrb[0].mxu0 %v2028
      %v2665 = vpop.f32.mrb[0].mxu0
      %v2666 = vadd.f32 %v2629, %v2665
      %v2667 = vpop.f32.mrb[0].mxu0
      %v2668 = vpop.f32.mrb[0].mxu0
      %v2669 = vpop.f32.mrb[0].mxu0
      %2670 = vdwg.mxu0
      %s2671 = scalar_lea.vmem %s3, 704
      %v2672 = vld [vmem:[%s2671] sm:$0xff]
      %v2673 = vld [vmem:[%s2671 + $0x8] sm:$0xff]
      %v2674 = vld [vmem:[%s2671 + $0x10] sm:$0xff]
      %v2675 = vld [vmem:[%s2671 + $0x18] sm:$0xff]
      %v2676 = vpack.c.bf16 %v2673, %v2672
      %v2677 = vpack.c.bf16 %v2675, %v2674
      %s2678 = scalar_lea.vmem %s4, 22
      %v2679 = vld [vmem:[%s2678] sm:$0x1]
      %v2681 = vlaneseq
      %v2682 = vshrl.u32 %v2681, 7
      %v2683 = vsub.s32 0, %v2682
      %v2684 = vrot.slane %v2679, %v2683
      %2686 = vmatprep.subr.bf16.mxu0 0
      %2687 = vmatpush1.bf16.msra.mxu0 %v2676
      %2688 = vmatprep.subr.bf16.mxu0 0
      %2689 = vmatpush1.bf16.msra.mxu0 %v2677
      %2690 = vmatprep.subr.bf16.mxu0 0
      %2691 = vmatpush1.bf16.msra.mxu0 0
      %2692 = vmatprep.subr.bf16.mxu0 0
      %2693 = vmatpush1.bf16.msra.mxu0 0
      %2694 = vmatprep.subr.bf16.mxu0 0
      %2695 = vmatpush1.bf16.msra.mxu0 0
      %2696 = vmatprep.subr.bf16.mxu0 0
      %2697 = vmatpush1.bf16.msra.mxu0 0
      %2698 = vmatprep.subr.bf16.mxu0 0
      %2699 = vmatpush1.bf16.msra.mxu0 0
      %2700 = vmatprep.subr.bf16.mxu0 0
      %2701 = vmatpush1.bf16.msra.mxu0 0
      %2702 = vmatprep.subr.bf16.mxu0 0
      %2703 = vmatpush1.bf16.msra.mxu0 0
      %2704 = vmatprep.subr.bf16.mxu0 0
      %2705 = vmatpush1.bf16.msra.mxu0 0
      %2706 = vmatprep.subr.bf16.mxu0 0
      %2707 = vmatpush1.bf16.msra.mxu0 0
      %2708 = vmatprep.subr.bf16.mxu0 0
      %2709 = vmatpush1.bf16.msra.mxu0 0
      %2710 = vmatprep.subr.bf16.mxu0 0
      %2711 = vmatpush1.bf16.msra.mxu0 0
      %2712 = vmatprep.subr.bf16.mxu0 0
      %2713 = vmatpush1.bf16.msra.mxu0 0
      %2714 = vmatprep.subr.bf16.mxu0 0
      %2715 = vmatpush1.bf16.msra.mxu0 0
      %2716 = vmatprep.subr.bf16.mxu0 0
      %2717 = vmatpush1.bf16.msra.mxu0 0
      %2718 = vmatprep.mubr.bf16.mxu0 0
      %2719 = vmatmul.mubr.bf16.gmra.mrb[0].mxu0 %v2028
      %v2720 = vpop.f32.mrb[0].mxu0
      %v2721 = vadd.f32 %v2684, %v2720
      %v2722 = vpop.f32.mrb[0].mxu0
      %v2723 = vpop.f32.mrb[0].mxu0
      %v2724 = vpop.f32.mrb[0].mxu0
      %2725 = vdwg.mxu0
      %v2726 = vpack.c.bf16 %v2611, %v2611
      %v2727 = vpack.c.bf16 %v2666, %v2666
      %v2729 = vsel %vm834, %v2726, 0
      %v2732 = vsel %vm834, %v2727, 0
      %2734 = vmatprep.subr.bf16.mxu0 0
      %2735 = vmatpush1.bf16.xpose.msra.mxu0 %v2732
      %2736 = vmatprep.subr.bf16.mxu0 0
      %2737 = vmatpush1.bf16.xpose.msra.mxu0 0
      %2738 = vmatprep.subr.bf16.mxu0 0
      %2739 = vmatpush1.bf16.xpose.msra.mxu0 0
      %2740 = vmatprep.subr.bf16.mxu0 0
      %2741 = vmatpush1.bf16.xpose.msra.mxu0 0
      %2742 = vmatprep.subr.bf16.mxu0 0
      %2743 = vmatpush1.bf16.xpose.msra.mxu0 0
      %2744 = vmatprep.subr.bf16.mxu0 0
      %2745 = vmatpush1.bf16.xpose.msra.mxu0 0
      %2746 = vmatprep.subr.bf16.mxu0 0
      %2747 = vmatpush1.bf16.xpose.msra.mxu0 0
      %2748 = vmatprep.subr.bf16.mxu0 0
      %2749 = vmatpush1.bf16.xpose.msra.mxu0 0
      %2750 = vmatprep.subr.bf16.mxu0 0
      %2751 = vmatpush1.bf16.xpose.msra.mxu0 0
      %2752 = vmatprep.subr.bf16.mxu0 0
      %2753 = vmatpush1.bf16.xpose.msra.mxu0 0
      %2754 = vmatprep.subr.bf16.mxu0 0
      %2755 = vmatpush1.bf16.xpose.msra.mxu0 0
      %2756 = vmatprep.subr.bf16.mxu0 0
      %2757 = vmatpush1.bf16.xpose.msra.mxu0 0
      %2758 = vmatprep.subr.bf16.mxu0 0
      %2759 = vmatpush1.bf16.xpose.msra.mxu0 0
      %2760 = vmatprep.subr.bf16.mxu0 0
      %2761 = vmatpush1.bf16.xpose.msra.mxu0 0
      %2762 = vmatprep.subr.bf16.mxu0 0
      %2763 = vmatpush1.bf16.xpose.msra.mxu0 0
      %2764 = vmatprep.subr.bf16.mxu0 0
      %2765 = vmatpush1.bf16.xpose.msra.mxu0 0
      %2766 = vmatprep.mubr.bf16.mxu0 0
      %2767 = vmatmul.mubr.bf16.gmra.mrb[0].mxu0 %v2729
      %v2768 = vpop.f32.mrb[0].mxu0
      %v2769 = vadd.f32 0.0, %v2768
      %v2770 = vpop.f32.mrb[0].mxu0
      %v2771 = vpop.f32.mrb[0].mxu0
      %v2772 = vpop.f32.mrb[0].mxu0
      %2773 = vdwg.mxu0
      %v2774 = vmul.f32 %v2769, 0.35355338
      %v2775 = vsel %vm834, %v2774, -inf
      %2776 = vmax.xlane.f32.xlu0 %v2775
      %v2777 = vpop.xlane.xlu0 %2776
      %v2778 = vsub.f32 %v2774, %v2777
      %v2779 = vmul.f32 %v2778, 1.442695
      %v2780 = vpow.pop %v2779
      %v2781 = vsel %vm834, %v2780, 0.0
      %2782 = vadd.xlane.f32.xlu0 %v2781
      %v2783 = vpop.xlane.xlu0 %2782
      %v2784 = vrcp.pop %v2783
      %v2785 = vmul.f32 %v2780, %v2784
      %v2786 = vpack.c.bf16 %v2785, %v2785
      %v2787 = vpack.c.bf16 %v2721, %v2721
      %v2789 = vsel %vm834, %v2786, 0
      %v2792 = vsel %vm898, %v2787, 0
      %2794 = vmatprep.subr.bf16.mxu0 0
      %2795 = vmatpush1.bf16.msra.mxu0 %v2792
      %2796 = vmatprep.subr.bf16.mxu0 0
      %2797 = vmatpush1.bf16.msra.mxu0 0
      %2798 = vmatprep.subr.bf16.mxu0 0
      %2799 = vmatpush1.bf16.msra.mxu0 0
      %2800 = vmatprep.subr.bf16.mxu0 0
      %2801 = vmatpush1.bf16.msra.mxu0 0
      %2802 = vmatprep.subr.bf16.mxu0 0
      %2803 = vmatpush1.bf16.msra.mxu0 0
      %2804 = vmatprep.subr.bf16.mxu0 0
      %2805 = vmatpush1.bf16.msra.mxu0 0
      %2806 = vmatprep.subr.bf16.mxu0 0
      %2807 = vmatpush1.bf16.msra.mxu0 0
      %2808 = vmatprep.subr.bf16.mxu0 0
      %2809 = vmatpush1.bf16.msra.mxu0 0
      %2810 = vmatprep.subr.bf16.mxu0 0
      %2811 = vmatpush1.bf16.msra.mxu0 0
      %2812 = vmatprep.subr.bf16.mxu0 0
      %2813 = vmatpush1.bf16.msra.mxu0 0
      %2814 = vmatprep.subr.bf16.mxu0 0
      %2815 = vmatpush1.bf16.msra.mxu0 0
      %2816 = vmatprep.subr.bf16.mxu0 0
      %2817 = vmatpush1.bf16.msra.mxu0 0
      %2818 = vmatprep.subr.bf16.mxu0 0
      %2819 = vmatpush1.bf16.msra.mxu0 0
      %2820 = vmatprep.subr.bf16.mxu0 0
      %2821 = vmatpush1.bf16.msra.mxu0 0
      %2822 = vmatprep.subr.bf16.mxu0 0
      %2823 = vmatpush1.bf16.msra.mxu0 0
      %2824 = vmatprep.subr.bf16.mxu0 0
      %2825 = vmatpush1.bf16.msra.mxu0 0
      %2826 = vmatprep.mubr.bf16.mxu0 0
      %2827 = vmatmul.mubr.bf16.gmra.mrb[0].mxu0 %v2789
      %v2828 = vpop.f32.mrb[0].mxu0
      %v2829 = vadd.f32 0.0, %v2828
      %v2830 = vpop.f32.mrb[0].mxu0
      %v2831 = vpop.f32.mrb[0].mxu0
      %v2832 = vpop.f32.mrb[0].mxu0
      %2833 = vdwg.mxu0
      %s2834 = scalar_lea.vmem %s3, 480
      %v2835 = vld [vmem:[%s2834] sm:$0xff]
      %v2836 = vld [vmem:[%s2834 + $0x8] sm:$0xff]
      %v2837 = vld [vmem:[%s2834 + $0x10] sm:$0xff]
      %v2838 = vld [vmem:[%s2834 + $0x18] sm:$0xff]
      %v2839 = vpack.c.bf16 %v2836, %v2835
      %v2840 = vpack.c.bf16 %v2838, %v2837
      %s2841 = scalar_lea.vmem %s4, 15
      %v2842 = vld [vmem:[%s2841] sm:$0x1]
      %v2844 = vlaneseq
      %v2845 = vshrl.u32 %v2844, 7
      %v2846 = vsub.s32 0, %v2845
      %v2847 = vrot.slane %v2842, %v2846
      %2849 = vmatprep.subr.bf16.mxu0 0
      %2850 = vmatpush1.bf16.msra.mxu0 %v2839
      %2851 = vmatprep.subr.bf16.mxu0 0
      %2852 = vmatpush1.bf16.msra.mxu0 %v2840
      %2853 = vmatprep.subr.bf16.mxu0 0
      %2854 = vmatpush1.bf16.msra.mxu0 0
      %2855 = vmatprep.subr.bf16.mxu0 0
      %2856 = vmatpush1.bf16.msra.mxu0 0
      %2857 = vmatprep.subr.bf16.mxu0 0
      %2858 = vmatpush1.bf16.msra.mxu0 0
      %2859 = vmatprep.subr.bf16.mxu0 0
      %2860 = vmatpush1.bf16.msra.mxu0 0
      %2861 = vmatprep.subr.bf16.mxu0 0
      %2862 = vmatpush1.bf16.msra.mxu0 0
      %2863 = vmatprep.subr.bf16.mxu0 0
      %2864 = vmatpush1.bf16.msra.mxu0 0
      %2865 = vmatprep.subr.bf16.mxu0 0
      %2866 = vmatpush1.bf16.msra.mxu0 0
      %2867 = vmatprep.subr.bf16.mxu0 0
      %2868 = vmatpush1.bf16.msra.mxu0 0
      %2869 = vmatprep.subr.bf16.mxu0 0
      %2870 = vmatpush1.bf16.msra.mxu0 0
      %2871 = vmatprep.subr.bf16.mxu0 0
      %2872 = vmatpush1.bf16.msra.mxu0 0
      %2873 = vmatprep.subr.bf16.mxu0 0
      %2874 = vmatpush1.bf16.msra.mxu0 0
      %2875 = vmatprep.subr.bf16.mxu0 0
      %2876 = vmatpush1.bf16.msra.mxu0 0
      %2877 = vmatprep.subr.bf16.mxu0 0
      %2878 = vmatpush1.bf16.msra.mxu0 0
      %2879 = vmatprep.subr.bf16.mxu0 0
      %2880 = vmatpush1.bf16.msra.mxu0 0
      %2881 = vmatprep.mubr.bf16.mxu0 0
      %2882 = vmatmul.mubr.bf16.gmra.mrb[0].mxu0 %v2028
      %v2883 = vpop.f32.mrb[0].mxu0
      %v2884 = vadd.f32 %v2847, %v2883
      %v2885 = vpop.f32.mrb[0].mxu0
      %v2886 = vpop.f32.mrb[0].mxu0
      %v2887 = vpop.f32.mrb[0].mxu0
      %2888 = vdwg.mxu0
      %s2889 = scalar_lea.vmem %s3, 608
      %v2890 = vld [vmem:[%s2889] sm:$0xff]
      %v2891 = vld [vmem:[%s2889 + $0x8] sm:$0xff]
      %v2892 = vld [vmem:[%s2889 + $0x10] sm:$0xff]
      %v2893 = vld [vmem:[%s2889 + $0x18] sm:$0xff]
      %v2894 = vpack.c.bf16 %v2891, %v2890
      %v2895 = vpack.c.bf16 %v2893, %v2892
      %s2896 = scalar_lea.vmem %s4, 19
      %v2897 = vld [vmem:[%s2896] sm:$0x1]
      %v2899 = vlaneseq
      %v2900 = vshrl.u32 %v2899, 7
      %v2901 = vsub.s32 0, %v2900
      %v2902 = vrot.slane %v2897, %v2901
      %2904 = vmatprep.subr.bf16.mxu0 0
      %2905 = vmatpush1.bf16.msra.mxu0 %v2894
      %2906 = vmatprep.subr.bf16.mxu0 0
      %2907 = vmatpush1.bf16.msra.mxu0 %v2895
      %2908 = vmatprep.subr.bf16.mxu0 0
      %2909 = vmatpush1.bf16.msra.mxu0 0
      %2910 = vmatprep.subr.bf16.mxu0 0
      %2911 = vmatpush1.bf16.msra.mxu0 0
      %2912 = vmatprep.subr.bf16.mxu0 0
      %2913 = vmatpush1.bf16.msra.mxu0 0
      %2914 = vmatprep.subr.bf16.mxu0 0
      %2915 = vmatpush1.bf16.msra.mxu0 0
      %2916 = vmatprep.subr.bf16.mxu0 0
      %2917 = vmatpush1.bf16.msra.mxu0 0
      %2918 = vmatprep.subr.bf16.mxu0 0
      %2919 = vmatpush1.bf16.msra.mxu0 0
      %2920 = vmatprep.subr.bf16.mxu0 0
      %2921 = vmatpush1.bf16.msra.mxu0 0
      %2922 = vmatprep.subr.bf16.mxu0 0
      %2923 = vmatpush1.bf16.msra.mxu0 0
      %2924 = vmatprep.subr.bf16.mxu0 0
      %2925 = vmatpush1.bf16.msra.mxu0 0
      %2926 = vmatprep.subr.bf16.mxu0 0
      %2927 = vmatpush1.bf16.msra.mxu0 0
      %2928 = vmatprep.subr.bf16.mxu0 0
      %2929 = vmatpush1.bf16.msra.mxu0 0
      %2930 = vmatprep.subr.bf16.mxu0 0
      %2931 = vmatpush1.bf16.msra.mxu0 0
      %2932 = vmatprep.subr.bf16.mxu0 0
      %2933 = vmatpush1.bf16.msra.mxu0 0
      %2934 = vmatprep.subr.bf16.mxu0 0
      %2935 = vmatpush1.bf16.msra.mxu0 0
      %2936 = vmatprep.mubr.bf16.mxu0 0
      %2937 = vmatmul.mubr.bf16.gmra.mrb[0].mxu0 %v2028
      %v2938 = vpop.f32.mrb[0].mxu0
      %v2939 = vadd.f32 %v2902, %v2938
      %v2940 = vpop.f32.mrb[0].mxu0
      %v2941 = vpop.f32.mrb[0].mxu0
      %v2942 = vpop.f32.mrb[0].mxu0
      %2943 = vdwg.mxu0
      %s2944 = scalar_lea.vmem %s3, 736
      %v2945 = vld [vmem:[%s2944] sm:$0xff]
      %v2946 = vld [vmem:[%s2944 + $0x8] sm:$0xff]
      %v2947 = vld [vmem:[%s2944 + $0x10] sm:$0xff]
      %v2948 = vld [vmem:[%s2944 + $0x18] sm:$0xff]
      %v2949 = vpack.c.bf16 %v2946, %v2945
      %v2950 = vpack.c.bf16 %v2948, %v2947
      %s2951 = scalar_lea.vmem %s4, 23
      %v2952 = vld [vmem:[%s2951] sm:$0x1]
      %v2954 = vlaneseq
      %v2955 = vshrl.u32 %v2954, 7
      %v2956 = vsub.s32 0, %v2955
      %v2957 = vrot.slane %v2952, %v2956
      %2959 = vmatprep.subr.bf16.mxu0 0
      %2960 = vmatpush1.bf16.msra.mxu0 %v2949
      %2961 = vmatprep.subr.bf16.mxu0 0
      %2962 = vmatpush1.bf16.msra.mxu0 %v2950
      %2963 = vmatprep.subr.bf16.mxu0 0
      %2964 = vmatpush1.bf16.msra.mxu0 0
      %2965 = vmatprep.subr.bf16.mxu0 0
      %2966 = vmatpush1.bf16.msra.mxu0 0
      %2967 = vmatprep.subr.bf16.mxu0 0
      %2968 = vmatpush1.bf16.msra.mxu0 0
      %2969 = vmatprep.subr.bf16.mxu0 0
      %2970 = vmatpush1.bf16.msra.mxu0 0
      %2971 = vmatprep.subr.bf16.mxu0 0
      %2972 = vmatpush1.bf16.msra.mxu0 0
      %2973 = vmatprep.subr.bf16.mxu0 0
      %2974 = vmatpush1.bf16.msra.mxu0 0
      %2975 = vmatprep.subr.bf16.mxu0 0
      %2976 = vmatpush1.bf16.msra.mxu0 0
      %2977 = vmatprep.subr.bf16.mxu0 0
      %2978 = vmatpush1.bf16.msra.mxu0 0
      %2979 = vmatprep.subr.bf16.mxu0 0
      %2980 = vmatpush1.bf16.msra.mxu0 0
      %2981 = vmatprep.subr.bf16.mxu0 0
      %2982 = vmatpush1.bf16.msra.mxu0 0
      %2983 = vmatprep.subr.bf16.mxu0 0
      %2984 = vmatpush1.bf16.msra.mxu0 0
      %2985 = vmatprep.subr.bf16.mxu0 0
      %2986 = vmatpush1.bf16.msra.mxu0 0
      %2987 = vmatprep.subr.bf16.mxu0 0
      %2988 = vmatpush1.bf16.msra.mxu0 0
      %2989 = vmatprep.subr.bf16.mxu0 0
      %2990 = vmatpush1.bf16.msra.mxu0 0
      %2991 = vmatprep.mubr.bf16.mxu0 0
      %2992 = vmatmul.mubr.bf16.gmra.mrb[0].mxu0 %v2028
      %v2993 = vpop.f32.mrb[0].mxu0
      %v2994 = vadd.f32 %v2957, %v2993
      %v2995 = vpop.f32.mrb[0].mxu0
      %v2996 = vpop.f32.mrb[0].mxu0
      %v2997 = vpop.f32.mrb[0].mxu0
      %2998 = vdwg.mxu0
      %v2999 = vpack.c.bf16 %v2884, %v2884
      %v3000 = vpack.c.bf16 %v2939, %v2939
      %v3002 = vsel %vm834, %v2999, 0
      %v3005 = vsel %vm834, %v3000, 0
      %3007 = vmatprep.subr.bf16.mxu0 0
      %3008 = vmatpush1.bf16.xpose.msra.mxu0 %v3005
      %3009 = vmatprep.subr.bf16.mxu0 0
      %3010 = vmatpush1.bf16.xpose.msra.mxu0 0
      %3011 = vmatprep.subr.bf16.mxu0 0
      %3012 = vmatpush1.bf16.xpose.msra.mxu0 0
      %3013 = vmatprep.subr.bf16.mxu0 0
      %3014 = vmatpush1.bf16.xpose.msra.mxu0 0
      %3015 = vmatprep.subr.bf16.mxu0 0
      %3016 = vmatpush1.bf16.xpose.msra.mxu0 0
      %3017 = vmatprep.subr.bf16.mxu0 0
      %3018 = vmatpush1.bf16.xpose.msra.mxu0 0
      %3019 = vmatprep.subr.bf16.mxu0 0
      %3020 = vmatpush1.bf16.xpose.msra.mxu0 0
      %3021 = vmatprep.subr.bf16.mxu0 0
      %3022 = vmatpush1.bf16.xpose.msra.mxu0 0
      %3023 = vmatprep.subr.bf16.mxu0 0
      %3024 = vmatpush1.bf16.xpose.msra.mxu0 0
      %3025 = vmatprep.subr.bf16.mxu0 0
      %3026 = vmatpush1.bf16.xpose.msra.mxu0 0
      %3027 = vmatprep.subr.bf16.mxu0 0
      %3028 = vmatpush1.bf16.xpose.msra.mxu0 0
      %3029 = vmatprep.subr.bf16.mxu0 0
      %3030 = vmatpush1.bf16.xpose.msra.mxu0 0
      %3031 = vmatprep.subr.bf16.mxu0 0
      %3032 = vmatpush1.bf16.xpose.msra.mxu0 0
      %3033 = vmatprep.subr.bf16.mxu0 0
      %3034 = vmatpush1.bf16.xpose.msra.mxu0 0
      %3035 = vmatprep.subr.bf16.mxu0 0
      %3036 = vmatpush1.bf16.xpose.msra.mxu0 0
      %3037 = vmatprep.subr.bf16.mxu0 0
      %3038 = vmatpush1.bf16.xpose.msra.mxu0 0
      %3039 = vmatprep.mubr.bf16.mxu0 0
      %3040 = vmatmul.mubr.bf16.gmra.mrb[0].mxu0 %v3002
      %v3041 = vpop.f32.mrb[0].mxu0
      %v3042 = vadd.f32 0.0, %v3041
      %v3043 = vpop.f32.mrb[0].mxu0
      %v3044 = vpop.f32.mrb[0].mxu0
      %v3045 = vpop.f32.mrb[0].mxu0
      %3046 = vdwg.mxu0
      %v3047 = vmul.f32 %v3042, 0.35355338
      %v3048 = vsel %vm834, %v3047, -inf
      %3049 = vmax.xlane.f32.xlu0 %v3048
      %v3050 = vpop.xlane.xlu0 %3049
      %v3051 = vsub.f32 %v3047, %v3050
      %v3052 = vmul.f32 %v3051, 1.442695
      %v3053 = vpow.pop %v3052
      %v3054 = vsel %vm834, %v3053, 0.0
      %3055 = vadd.xlane.f32.xlu0 %v3054
      %v3056 = vpop.xlane.xlu0 %3055
      %v3057 = vrcp.pop %v3056
      %v3058 = vmul.f32 %v3053, %v3057
      %v3059 = vpack.c.bf16 %v3058, %v3058
      %v3060 = vpack.c.bf16 %v2994, %v2994
      %v3062 = vsel %vm834, %v3059, 0
      %v3065 = vsel %vm898, %v3060, 0
      %3067 = vmatprep.subr.bf16.mxu0 0
      %3068 = vmatpush1.bf16.msra.mxu0 %v3065
      %3069 = vmatprep.subr.bf16.mxu0 0
      %3070 = vmatpush1.bf16.msra.mxu0 0
      %3071 = vmatprep.subr.bf16.mxu0 0
      %3072 = vmatpush1.bf16.msra.mxu0 0
      %3073 = vmatprep.subr.bf16.mxu0 0
      %3074 = vmatpush1.bf16.msra.mxu0 0
      %3075 = vmatprep.subr.bf16.mxu0 0
      %3076 = vmatpush1.bf16.msra.mxu0 0
      %3077 = vmatprep.subr.bf16.mxu0 0
      %3078 = vmatpush1.bf16.msra.mxu0 0
      %3079 = vmatprep.subr.bf16.mxu0 0
      %3080 = vmatpush1.bf16.msra.mxu0 0
      %3081 = vmatprep.subr.bf16.mxu0 0
      %3082 = vmatpush1.bf16.msra.mxu0 0
      %3083 = vmatprep.subr.bf16.mxu0 0
      %3084 = vmatpush1.bf16.msra.mxu0 0
      %3085 = vmatprep.subr.bf16.mxu0 0
      %3086 = vmatpush1.bf16.msra.mxu0 0
      %3087 = vmatprep.subr.bf16.mxu0 0
      %3088 = vmatpush1.bf16.msra.mxu0 0
      %3089 = vmatprep.subr.bf16.mxu0 0
      %3090 = vmatpush1.bf16.msra.mxu0 0
      %3091 = vmatprep.subr.bf16.mxu0 0
      %3092 = vmatpush1.bf16.msra.mxu0 0
      %3093 = vmatprep.subr.bf16.mxu0 0
      %3094 = vmatpush1.bf16.msra.mxu0 0
      %3095 = vmatprep.subr.bf16.mxu0 0
      %3096 = vmatpush1.bf16.msra.mxu0 0
      %3097 = vmatprep.subr.bf16.mxu0 0
      %3098 = vmatpush1.bf16.msra.mxu0 0
      %3099 = vmatprep.mubr.bf16.mxu0 0
      %3100 = vmatmul.mubr.bf16.gmra.mrb[0].mxu0 %v3062
      %v3101 = vpop.f32.mrb[0].mxu0
      %v3102 = vadd.f32 0.0, %v3101
      %v3103 = vpop.f32.mrb[0].mxu0
      %v3104 = vpop.f32.mrb[0].mxu0
      %v3105 = vpop.f32.mrb[0].mxu0
      %3106 = vdwg.mxu0
      %3108 = vrot.lane.b32.xlu0 %v2556, 8
      %v3109 = vpop.permute.xlu0 %3108
      %3112 = vrot.lane.b32.xlu0 %v2829, 16
      %v3113 = vpop.permute.xlu0 %3112
      %3116 = vrot.lane.b32.xlu0 %v3102, 24
      %v3117 = vpop.permute.xlu0 %3116
      %v3119 = vsel %vm834, %v2283, %v3109
      %v3120 = vsel %vm1774, %v3119, %v3113
      %v3121 = vsel %vm1776, %v3120, %v3117
      %s3122 = scalar_lea.vmem %s5, 32
      %v3123 = vld [vmem:[%s3122] sm:$0xff]
      %v3124 = vld [vmem:[%s3122 + $0x8] sm:$0xff]
      %v3125 = vld [vmem:[%s3122 + $0x10] sm:$0xff]
      %v3126 = vld [vmem:[%s3122 + $0x18] sm:$0xff]
      %v3127 = vpack.c.bf16 %v3121, %v3121
      %v3128 = vpack.c.bf16 %v3124, %v3123
      %v3129 = vpack.c.bf16 %v3126, %v3125
      %s3130 = scalar_lea.vmem %s6, 1
      %v3131 = vld [vmem:[%s3130] sm:$0x1]
      %v3133 = vlaneseq
      %v3134 = vshrl.u32 %v3133, 7
      %v3135 = vsub.s32 0, %v3134
      %v3136 = vrot.slane %v3131, %v3135
      %v3139 = vsel %vm678, %v3127, 0
      %3141 = vmatprep.subr.bf16.mxu0 0
      %3142 = vmatpush1.bf16.msra.mxu0 %v3128
      %3143 = vmatprep.subr.bf16.mxu0 0
      %3144 = vmatpush1.bf16.msra.mxu0 %v3129
      %3145 = vmatprep.subr.bf16.mxu0 0
      %3146 = vmatpush1.bf16.msra.mxu0 0
      %3147 = vmatprep.subr.bf16.mxu0 0
      %3148 = vmatpush1.bf16.msra.mxu0 0
      %3149 = vmatprep.subr.bf16.mxu0 0
      %3150 = vmatpush1.bf16.msra.mxu0 0
      %3151 = vmatprep.subr.bf16.mxu0 0
      %3152 = vmatpush1.bf16.msra.mxu0 0
      %3153 = vmatprep.subr.bf16.mxu0 0
      %3154 = vmatpush1.bf16.msra.mxu0 0
      %3155 = vmatprep.subr.bf16.mxu0 0
      %3156 = vmatpush1.bf16.msra.mxu0 0
      %3157 = vmatprep.subr.bf16.mxu0 0
      %3158 = vmatpush1.bf16.msra.mxu0 0
      %3159 = vmatprep.subr.bf16.mxu0 0
      %3160 = vmatpush1.bf16.msra.mxu0 0
      %3161 = vmatprep.subr.bf16.mxu0 0
      %3162 = vmatpush1.bf16.msra.mxu0 0
      %3163 = vmatprep.subr.bf16.mxu0 0
      %3164 = vmatpush1.bf16.msra.mxu0 0
      %3165 = vmatprep.subr.bf16.mxu0 0
      %3166 = vmatpush1.bf16.msra.mxu0 0
      %3167 = vmatprep.subr.bf16.mxu0 0
      %3168 = vmatpush1.bf16.msra.mxu0 0
      %3169 = vmatprep.subr.bf16.mxu0 0
      %3170 = vmatpush1.bf16.msra.mxu0 0
      %3171 = vmatprep.subr.bf16.mxu0 0
      %3172 = vmatpush1.bf16.msra.mxu0 0
      %3173 = vmatprep.mubr.bf16.mxu0 0
      %3174 = vmatmul.mubr.bf16.gmra.mrb[0].mxu0 %v3139
      %v3175 = vpop.f32.mrb[0].mxu0
      %v3176 = vadd.f32 %v3136, %v3175
      %v3177 = vpop.f32.mrb[0].mxu0
      %v3178 = vpop.f32.mrb[0].mxu0
      %v3179 = vpop.f32.mrb[0].mxu0
      %3180 = vdwg.mxu0
      %v3181 = vadd.f32 %v2010, %v3176
      %s3182 = scalar_lea.vmem %s7, 1
      %v3183 = vld [vmem:[%s3182] sm:$0x1]
      %s3184 = scalar_lea.vmem %s8, 1
      %v3185 = vld [vmem:[%s3184] sm:$0x1]
      %v3186 = vsel %vm678, %v3181, 0.0
      %3187 = vadd.xlane.f32.xlu0 %v3186
      %v3188 = vpop.xlane.xlu0 %3187
      %v3189 = vmul.f32 %v3188, %v1841
      %v3190 = vsub.f32 %v3181, %v3189
      %v3191 = vmul.f32 %v3190, %v3190
      %v3192 = vsel %vm678, %v3191, 0.0
      %3193 = vadd.xlane.f32.xlu0 %v3192
      %v3194 = vpop.xlane.xlu0 %3193
      %v3195 = vmul.f32 %v3194, %v1841
      %v3196 = vadd.f32 %v3195, 1e-05
      %v3197 = vrsqrt.pop %v3196
      %v3198 = vmul.f32 %v3190, %v3197
      %v3200 = vlaneseq
      %v3201 = vshrl.u32 %v3200, 7
      %v3202 = vsub.s32 0, %v3201
      %v3203 = vrot.slane %v3183, %v3202
      %v3205 = vmul.f32 %v3198, %v3203
      %v3207 = vlaneseq
      %v3208 = vshrl.u32 %v3207, 7
      %v3209 = vsub.s32 0, %v3208
      %v3210 = vrot.slane %v3185, %v3209
      %v3212 = vadd.f32 %v3205, %v3210
      %s3213 = scalar_lea.vmem %s9, 32
      %v3214 = vld [vmem:[%s3213] sm:$0xff]
      %v3215 = vld [vmem:[%s3213 + $0x8] sm:$0xff]
      %v3216 = vld [vmem:[%s3213 + $0x10] sm:$0xff]
      %v3217 = vld [vmem:[%s3213 + $0x18] sm:$0xff]
      %v3218 = vpack.c.bf16 %v3212, %v3212
      %v3219 = vpack.c.bf16 %v3215, %v3214
      %v3220 = vpack.c.bf16 %v3217, %v3216
      %s3221 = scalar_lea.vmem %s10, 1
      %v3222 = vld [vmem:[%s3221] sm:$0x1]
      %v3224 = vlaneseq
      %v3225 = vshrl.u32 %v3224, 7
      %v3226 = vsub.s32 0, %v3225
      %v3227 = vrot.slane %v3222, %v3226
      %v3230 = vsel %vm678, %v3218, 0
      %3232 = vmatprep.subr.bf16.mxu0 0
      %3233 = vmatpush1.bf16.msra.mxu0 %v3219
      %3234 = vmatprep.subr.bf16.mxu0 0
      %3235 = vmatpush1.bf16.msra.mxu0 %v3220
      %3236 = vmatprep.subr.bf16.mxu0 0
      %3237 = vmatpush1.bf16.msra.mxu0 0
      %3238 = vmatprep.subr.bf16.mxu0 0
      %3239 = vmatpush1.bf16.msra.mxu0 0
      %3240 = vmatprep.subr.bf16.mxu0 0
      %3241 = vmatpush1.bf16.msra.mxu0 0
      %3242 = vmatprep.subr.bf16.mxu0 0
      %3243 = vmatpush1.bf16.msra.mxu0 0
      %3244 = vmatprep.subr.bf16.mxu0 0
      %3245 = vmatpush1.bf16.msra.mxu0 0
      %3246 = vmatprep.subr.bf16.mxu0 0
      %3247 = vmatpush1.bf16.msra.mxu0 0
      %3248 = vmatprep.subr.bf16.mxu0 0
      %3249 = vmatpush1.bf16.msra.mxu0 0
      %3250 = vmatprep.subr.bf16.mxu0 0
      %3251 = vmatpush1.bf16.msra.mxu0 0
      %3252 = vmatprep.subr.bf16.mxu0 0
      %3253 = vmatpush1.bf16.msra.mxu0 0
      %3254 = vmatprep.subr.bf16.mxu0 0
      %3255 = vmatpush1.bf16.msra.mxu0 0
      %3256 = vmatprep.subr.bf16.mxu0 0
      %3257 = vmatpush1.bf16.msra.mxu0 0
      %3258 = vmatprep.subr.bf16.mxu0 0
      %3259 = vmatpush1.bf16.msra.mxu0 0
      %3260 = vmatprep.subr.bf16.mxu0 0
      %3261 = vmatpush1.bf16.msra.mxu0 0
      %3262 = vmatprep.subr.bf16.mxu0 0
      %3263 = vmatpush1.bf16.msra.mxu0 0
      %3264 = vmatprep.mubr.bf16.mxu0 0
      %3265 = vmatmul.mubr.bf16.gmra.mrb[0].mxu0 %v3230
      %v3266 = vpop.f32.mrb[0].mxu0
      %v3267 = vadd.f32 %v3227, %v3266
      %v3268 = vpop.f32.mrb[0].mxu0
      %v3269 = vpop.f32.mrb[0].mxu0
      %v3270 = vpop.f32.mrb[0].mxu0
      %3271 = vdwg.mxu0
      %v3272 = vmax.f32 %v3267, 0.0
      %s3273 = scalar_lea.vmem %s11, 32
      %v3274 = vld [vmem:[%s3273] sm:$0xff]
      %v3275 = vld [vmem:[%s3273 + $0x8] sm:$0xff]
      %v3276 = vld [vmem:[%s3273 + $0x10] sm:$0xff]
      %v3277 = vld [vmem:[%s3273 + $0x18] sm:$0xff]
      %v3278 = vpack.c.bf16 %v3272, %v3272
      %v3279 = vpack.c.bf16 %v3275, %v3274
      %v3280 = vpack.c.bf16 %v3277, %v3276
      %s3281 = scalar_lea.vmem %s12, 1
      %v3282 = vld [vmem:[%s3281] sm:$0x1]
      %v3284 = vlaneseq
      %v3285 = vshrl.u32 %v3284, 7
      %v3286 = vsub.s32 0, %v3285
      %v3287 = vrot.slane %v3282, %v3286
      %v3290 = vsel %vm678, %v3278, 0
      %3292 = vmatprep.subr.bf16.mxu0 0
      %3293 = vmatpush1.bf16.msra.mxu0 %v3279
      %3294 = vmatprep.subr.bf16.mxu0 0
      %3295 = vmatpush1.bf16.msra.mxu0 %v3280
      %3296 = vmatprep.subr.bf16.mxu0 0
      %3297 = vmatpush1.bf16.msra.mxu0 0
      %3298 = vmatprep.subr.bf16.mxu0 0
      %3299 = vmatpush1.bf16.msra.mxu0 0
      %3300 = vmatprep.subr.bf16.mxu0 0
      %3301 = vmatpush1.bf16.msra.mxu0 0
      %3302 = vmatprep.subr.bf16.mxu0 0
      %3303 = vmatpush1.bf16.msra.mxu0 0
      %3304 = vmatprep.subr.bf16.mxu0 0
      %3305 = vmatpush1.bf16.msra.mxu0 0
      %3306 = vmatprep.subr.bf16.mxu0 0
      %3307 = vmatpush1.bf16.msra.mxu0 0
      %3308 = vmatprep.subr.bf16.mxu0 0
      %3309 = vmatpush1.bf16.msra.mxu0 0
      %3310 = vmatprep.subr.bf16.mxu0 0
      %3311 = vmatpush1.bf16.msra.mxu0 0
      %3312 = vmatprep.subr.bf16.mxu0 0
      %3313 = vmatpush1.bf16.msra.mxu0 0
      %3314 = vmatprep.subr.bf16.mxu0 0
      %3315 = vmatpush1.bf16.msra.mxu0 0
      %3316 = vmatprep.subr.bf16.mxu0 0
      %3317 = vmatpush1.bf16.msra.mxu0 0
      %3318 = vmatprep.subr.bf16.mxu0 0
      %3319 = vmatpush1.bf16.msra.mxu0 0
      %3320 = vmatprep.subr.bf16.mxu0 0
      %3321 = vmatpush1.bf16.msra.mxu0 0
      %3322 = vmatprep.subr.bf16.mxu0 0
      %3323 = vmatpush1.bf16.msra.mxu0 0
      %3324 = vmatprep.mubr.bf16.mxu0 0
      %3325 = vmatmul.mubr.bf16.gmra.mrb[0].mxu0 %v3290
      %v3326 = vpop.f32.mrb[0].mxu0
      %v3327 = vadd.f32 %v3287, %v3326
      %v3328 = vpop.f32.mrb[0].mxu0
      %v3329 = vpop.f32.mrb[0].mxu0
      %v3330 = vpop.f32.mrb[0].mxu0
      %3331 = vdwg.mxu0
      %v3332 = vadd.f32 %v3212, %v3327
      %s3333 = scalar_lea.vmem %s13, 1
      %v3334 = vld [vmem:[%s3333] sm:$0x1]
      %s3335 = scalar_lea.vmem %s14, 1
      %v3336 = vld [vmem:[%s3335] sm:$0x1]
      %v3337 = vsel %vm678, %v3332, 0.0
      %3338 = vadd.xlane.f32.xlu0 %v3337
      %v3339 = vpop.xlane.xlu0 %3338
      %v3340 = vmul.f32 %v3339, %v1841
      %v3341 = vsub.f32 %v3332, %v3340
      %v3342 = vmul.f32 %v3341, %v3341
      %v3343 = vsel %vm678, %v3342, 0.0
      %3344 = vadd.xlane.f32.xlu0 %v3343
      %v3345 = vpop.xlane.xlu0 %3344
      %v3346 = vmul.f32 %v3345, %v1841
      %v3347 = vadd.f32 %v3346, 1e-05
      %v3348 = vrsqrt.pop %v3347
      %v3349 = vmul.f32 %v3341, %v3348
      %v3351 = vlaneseq
      %v3352 = vshrl.u32 %v3351, 7
      %v3353 = vsub.s32 0, %v3352
      %v3354 = vrot.slane %v3334, %v3353
      %v3356 = vmul.f32 %v3349, %v3354
      %v3358 = vlaneseq
      %v3359 = vshrl.u32 %v3358, 7
      %v3360 = vsub.s32 0, %v3359
      %v3361 = vrot.slane %v3336, %v3360
      %v3363 = vadd.f32 %v3356, %v3361
      %v3364 = vld [vmem:[%s15] sm:$0x1]
      %v3365 = vld [vmem:[%s16] sm:$0x1]
      %vm3366 = vcmask 253952
      %v3367 = vsel %vm3366, %v3363, 0.0
      %3368 = vadd.xlane.f32.xlu0 %v3367
      %v3369 = vpop.xlane.xlu0 %3368
      %v3370 = vmul.f32 %v3369, %v1841
      %v3371 = vsub.f32 %v3363, %v3370
      %v3372 = vmul.f32 %v3371, %v3371
      %v3373 = vsel %vm3366, %v3372, 0.0
      %3374 = vadd.xlane.f32.xlu0 %v3373
      %v3375 = vpop.xlane.xlu0 %3374
      %v3376 = vmul.f32 %v3375, %v1841
      %v3377 = vadd.f32 %v3376, 1e-05
      %v3378 = vrsqrt.pop %v3377
      %v3379 = vmul.f32 %v3371, %v3378
      %v3380 = vmul.f32 %v3379, %v3364
      %v3381 = vadd.f32 %v3380, %v3365
      %v3382 = vld [vmem:[%s17] sm:$0x1]
      %v3383 = vmul.f32 %v3381, %v3382
      %v3384 = vsel %vm3366, %v3383, 0.0
      %3385 = vadd.xlane.f32.xlu0 %v3384
      %v3386 = vpop.xlane.xlu0 %3385
      %v3387 = vld [vmem:[#allocation2] sm:$0x1]
      %v3388 = vadd.f32 %v3386, %v3387
      %vm3389 = vcmask 0
      %3390 = vst.msk [vmem:[%s597] sm:$0x1] %vm3389, %v3388
      %p3391 = scmp.lt.s32.totalorder %s32, 1
      %s3392 = scalar_select %p3391, %s32, 1
      %s3393 = scalar_lea.vmem %s19, %s3392
      // Predicated region
      $region97: #{text_classifier_forward.1} parent=95 // pred_check
        %p3394 = pneg %p454
      $region98: #{text_classifier_forward.1} parent=95 // pred_check_branch
        %3396 = sbr.rel (%p3394) target = $region100
      $region99: #{text_classifier_forward.1} parent=95 // pred_region
        _
      $region100: #{text_classifier_forward.1} parent=95 // pred_fallthru
        _
    $region96: #{text_classifier_forward.1} parent=5 // pred_fallthru
      _
    %p3397 = scmp.le.s32.totalorder 2, %s27
    // Predicated region
    $region101: #{text_classifier_forward.1} parent=5 // pred_check
      %p3398 = pneg %p3397
    $region102: #{text_classifier_forward.1} parent=5 // pred_check_branch
      %3400 = sbr.rel (%p3398) target = $region104
    $region103: #{text_classifier_forward.1} parent=5 // pred_region
      %s3401 = ssub.s32 %s27, 2
      // Predicated region
      $region105: #{text_classifier_forward.1} parent=103 // pred_check
        %p3402 = pneg %p460
      $region106: #{text_classifier_forward.1} parent=103 // pred_check_branch
        %3404 = sbr.rel (%p3402) target = $region108
      $region107: #{text_classifier_forward.1} parent=103 // pred_region
        %p3405 = scmp.lt.s32.totalorder %s33, 1
        %s3406 = scalar_select %p3405, %s33, 1
        %s3407 = scalar_lea.vmem %s19, %s3406
      $region108: #{text_classifier_forward.1} parent=103 // pred_fallthru
        _
    $region104: #{text_classifier_forward.1} parent=5 // pred_fallthru
      _
  $region6: #{text_classifier_forward.1} parent=0 // loop_footer
    %s31 = sadd.s32 1, %s27
  $region7: #{text_classifier_forward.1} parent=0 // loop_footer_branch
    %26 = sbr.rel target = $region3
  $region8: #{text_classifier_forward.1} parent=0 // loop_exit
    _

</llo_original>
